<compile_context>
chip_gen: v7x
topology: tpu7x:2x2x1
jax: 0.10.0
libtpu: 0.0.40
codegen_flags: <defaults>
</compile_context>

<pallas_src>
import jax
import jax.numpy as jnp
from jax import lax
from jax.experimental import pallas as pl
from jax.experimental.pallas import tpu as pltpu

KH = KW = 3
PAD = 1
EPS = 1e-5


def _round_up(x, m):
    return (x + m - 1) // m * m


def residual_block_kernel(x_ref, w1_ref, t1_ref, w2_ref, t2_ref, o_ref,
                          pad_ref, col_ref):
    # x_ref : (1, H, W, Cp)            o_ref : (1, H, W, Cp)
    # w*_ref: (KH*KW*Cp, Cp)  folded conv+BN weights, im2col row layout
    # t*_ref: (1, Cp)         folded conv-bias + BN shift (f32)
    # pad_ref: (H+2, W_pad, Cp) zero-halo scratch; col_ref: (H*W, KH*KW*Cp)
    H, W, Cp = x_ref.shape[1], x_ref.shape[2], x_ref.shape[3]
    HW = H * W
    Wp = pad_ref.shape[1]

    # Zero only the 1-pixel halo strips that the 3x3 taps actually read
    # (rows 0 / H+1, cols 0 / W+1); the interior is overwritten below and the
    # rounded-up extra columns (>= W+2) are never read.
    z_row = jnp.zeros((PAD, Wp, Cp), pad_ref.dtype)
    z_col = jnp.zeros((H, PAD, Cp), pad_ref.dtype)
    pad_ref[0:PAD, :, :] = z_row
    pad_ref[PAD + H:2 * PAD + H, :, :] = z_row
    pad_ref[PAD:PAD + H, 0:PAD, :] = z_col
    pad_ref[PAD:PAD + H, PAD + W:2 * PAD + W, :] = z_col

    def conv_block(inp, w_ref, t_ref):
        # inp: (H, W, Cp) in the storage dtype (bf16-friendly for the MXU).
        pad_ref[PAD:PAD + H, PAD:PAD + W, :] = inp
        # im2col: the 9 shifted HxW windows laid side by side on the lane
        # axis (writes are lane-aligned at multiples of 128).  dx = 1, 2
        # reads are sublane-misaligned; accepted — each feeds one copy
        # instead of its own tiny matmul.
        for dy in range(KH):
            for dx in range(KW):
                k = (dy * KW + dx) * Cp
                col_ref[:, k:k + Cp] = (
                    pad_ref[dy:dy + H, dx:dx + W, :].reshape(HW, Cp))
        # Single MXU matmul per conv: (HW, 9*Cp) @ (9*Cp, Cp), f32 accumulate.
        acc = jnp.dot(col_ref[...], w_ref[...],
                      preferred_element_type=jnp.float32)
        y = acc + t_ref[...]            # folded conv bias + BatchNorm (eval)
        return jnp.maximum(y, 0.0)      # ReLU; Dropout(p=0.01) = identity

    x = x_ref[0]                                             # (H, W, Cp)
    y1 = conv_block(x, w1_ref, t1_ref)                       # (HW, Cp) f32
    y2 = conv_block(y1.reshape(H, W, Cp).astype(pad_ref.dtype),
                    w2_ref, t2_ref)                          # (HW, Cp) f32
    out = y2 + x.reshape(HW, Cp).astype(jnp.float32)         # residual add
    o_ref[0] = out.reshape(H, W, Cp).astype(o_ref.dtype)


def _fold_conv_bn(w_hwio, b, gamma, beta, mean, var, cin_p, cout_p, dtype):
    """Fold conv bias + eval-mode BatchNorm into (im2col weight, shift)."""
    s = gamma / jnp.sqrt(var + EPS)                          # (Cout,)
    shift = beta - mean * s + b * s                          # (Cout,)
    w = w_hwio * s                                           # scale out-chans
    kh, kw, cin, cout = w.shape
    w = jnp.pad(w, ((0, 0), (0, 0), (0, cin_p - cin), (0, cout_p - cout)))
    w = w.reshape(kh * kw * cin_p, cout_p).astype(dtype)     # (9*Cp, Cp)
    shift = jnp.pad(shift, (0, cout_p - cout)).reshape(1, cout_p)
    return w, shift.astype(jnp.float32)


@jax.jit
def residual_block(x_nchw, params):
    (w1, b1, g1, be1, m1, v1,
     w2, b2, g2, be2, m2, v2) = params
    N, C, H, W = x_nchw.shape
    Cout = w1.shape[-1]
    assert C == Cout, "residual add requires in_channels == out_channels"

    Cp = _round_up(C, 128)             # lane-dense channel axis
    Wp = _round_up(W + 2 * PAD, 8)     # sublane-aligned padded-scratch width

    x = jnp.transpose(x_nchw, (0, 2, 3, 1))                  # NCHW -> NHWC
    x = jnp.pad(x, ((0, 0), (0, 0), (0, 0), (0, Cp - C)))

    w1f, t1 = _fold_conv_bn(w1, b1, g1, be1, m1, v1, Cp, Cp, x.dtype)
    w2f, t2 = _fold_conv_bn(w2, b2, g2, be2, m2, v2, Cp, Cp, x.dtype)

    img_spec = pl.BlockSpec((1, H, W, Cp), lambda n: (n, 0, 0, 0))
    w_spec = pl.BlockSpec((KH * KW * Cp, Cp), lambda n: (0, 0))
    t_spec = pl.BlockSpec((1, Cp), lambda n: (0, 0))

    out = pl.pallas_call(
        residual_block_kernel,
        out_shape=jax.ShapeDtypeStruct((N, H, W, Cp), x.dtype),
        grid_spec=pltpu.PrefetchScalarGridSpec(
            num_scalar_prefetch=0,
            grid=(N,),                      # one image per step
            in_specs=[img_spec, w_spec, t_spec, w_spec, t_spec],
            out_specs=img_spec,
            scratch_shapes=[
                pltpu.VMEM((H + 2 * PAD, Wp, Cp), x.dtype),   # padded act
                pltpu.VMEM((H * W, KH * KW * Cp), x.dtype),   # im2col matrix
            ],
        ),
        compiler_params=pltpu.CompilerParams(
            dimension_semantics=("parallel",)),   # batch axis on both v7x TCs
    )(x, w1f, t1, w2f, t2)

    out = out[..., :C]                                       # drop chan pad
    return jnp.transpose(out, (0, 3, 1, 2))                  # NHWC -> NCHW


def residual_block_ref(x_nchw, params):
    """Pure-JAX reference (eval-mode) for correctness checking."""
    (w1, b1, g1, be1, m1, v1,
     w2, b2, g2, be2, m2, v2) = params
    x = jnp.transpose(x_nchw, (0, 2, 3, 1))

    def convblock(h, w, b, g, be, m, v):
        y = lax.conv_general_dilated(
            h, w, window_strides=(1, 1), padding=((PAD, PAD), (PAD, PAD)),
            dimension_numbers=('NHWC', 'HWIO', 'NHWC')) + b
        s = g / jnp.sqrt(v + EPS)
        y = (y - m) * s + be
        return jnp.maximum(y, 0.0)

    y = convblock(x, w1, b1, g1, be1, m1, v1)
    y = convblock(y, w2, b2, g2, be2, m2, v2)
    return jnp.transpose(y + x, (0, 3, 1, 2))


def make_params(key, cin, cout):
    ks = jax.random.split(key, 12)

    def conv_bn(k0, k1, k2, k3, k4, k5, ci, co):
        w = jax.random.normal(k0, (KH, KW, ci, co), jnp.float32) * 0.1  # HWIO
        b = jax.random.normal(k1, (co,), jnp.float32) * 0.1
        gamma = 1.0 + 0.1 * jax.random.normal(k2, (co,), jnp.float32)
        beta = 0.1 * jax.random.normal(k3, (co,), jnp.float32)
        mean = 0.1 * jax.random.normal(k4, (co,), jnp.float32)
        var = jnp.abs(jax.random.normal(k5, (co,), jnp.float32)) + 0.5
        return w, b, gamma, beta, mean, var

    p1 = conv_bn(*ks[0:6], cin, cout)
    p2 = conv_bn(*ks[6:12], cout, cout)
    return p1 + p2


if __name__ == "__main__":
    key = jax.random.PRNGKey(0)
    kx, kp = jax.random.split(key)

    N, C, H, W = 2, 4, 16, 16
    x = jax.random.normal(kx, (N, C, H, W), jnp.float32)     # PyTorch NCHW
    params = make_params(kp, C, C)

    out = jax.block_until_ready(residual_block(x, params))
    ref = residual_block_ref(x, params)

    assert out.shape == (N, C, H, W)
    assert jnp.allclose(out, ref, atol=1e-4, rtol=1e-4), \
        f"max abs err {jnp.max(jnp.abs(out - ref))}"

    print("KERNEL_OK")
</pallas_src>

<mosaic_0001>
module attributes {stable_mosaic.version = 11 : i64} {
  func.func @residual_block_kernel(%arg0: i32, %arg1: memref<1x16x16x128xf32, #tpu.memory_space<vmem>>, %arg2: memref<1152x128xf32, #tpu.memory_space<vmem>>, %arg3: memref<1x128xf32, #tpu.memory_space<vmem>>, %arg4: memref<1152x128xf32, #tpu.memory_space<vmem>>, %arg5: memref<1x128xf32, #tpu.memory_space<vmem>>, %arg6: memref<1x16x16x128xf32, #tpu.memory_space<vmem>>, %arg7: memref<18x24x128xf32, #tpu.memory_space<vmem>>, %arg8: memref<256x1152xf32, #tpu.memory_space<vmem>>) attributes {dimension_semantics = [#tpu.dimension_semantics<parallel>], iteration_bounds = array<i64: 2>, scalar_prefetch = 0 : i64, scratch_operands = 2 : i64, tpu.core_type = #tpu.core_type<tc>, window_params = [{transform_indices = @transform_0, window_bounds = array<i64: 1, 16, 16, 128>}, {pipeline_mode = #tpu.pipeline_mode<synchronous>, transform_indices = @transform_1, window_bounds = array<i64: 1152, 128>}, {pipeline_mode = #tpu.pipeline_mode<synchronous>, transform_indices = @transform_2, window_bounds = array<i64: 1, 128>}, {pipeline_mode = #tpu.pipeline_mode<synchronous>, transform_indices = @transform_3, window_bounds = array<i64: 1152, 128>}, {pipeline_mode = #tpu.pipeline_mode<synchronous>, transform_indices = @transform_4, window_bounds = array<i64: 1, 128>}, {transform_indices = @transform_5, window_bounds = array<i64: 1, 16, 16, 128>}]} {
    %cst = arith.constant 0.000000e+00 : f32
    %0 = vector.broadcast %cst : f32 to vector<1x24x128xf32>
    %cst_0 = arith.constant 0.000000e+00 : f32
    %1 = vector.broadcast %cst_0 : f32 to vector<16x1x128xf32>
    %c0 = arith.constant 0 : index
    %c0_1 = arith.constant 0 : index
    %c0_2 = arith.constant 0 : index
    %2 = vector.load %arg7[%c0, %c0_1, %c0_2] : memref<18x24x128xf32, #tpu.memory_space<vmem>>, vector<1x24x128xf32>
    tpu.vector_store %arg7[%c0, %c0_1, %c0_2], %0 {strides = array<i32>} : memref<18x24x128xf32, #tpu.memory_space<vmem>>, vector<1x24x128xf32>,
    %c17 = arith.constant 17 : index
    %c0_3 = arith.constant 0 : index
    %c0_4 = arith.constant 0 : index
    %3 = vector.load %arg7[%c17, %c0_3, %c0_4] : memref<18x24x128xf32, #tpu.memory_space<vmem>>, vector<1x24x128xf32>
    tpu.vector_store %arg7[%c17, %c0_3, %c0_4], %0 {strides = array<i32>} : memref<18x24x128xf32, #tpu.memory_space<vmem>>, vector<1x24x128xf32>,
    %c1 = arith.constant 1 : index
    %c0_5 = arith.constant 0 : index
    %c0_6 = arith.constant 0 : index
    %4 = vector.load %arg7[%c1, %c0_5, %c0_6] : memref<18x24x128xf32, #tpu.memory_space<vmem>>, vector<16x1x128xf32>
    tpu.vector_store %arg7[%c1, %c0_5, %c0_6], %1 {strides = array<i32>} : memref<18x24x128xf32, #tpu.memory_space<vmem>>, vector<16x1x128xf32>,
    %c1_7 = arith.constant 1 : index
    %c17_8 = arith.constant 17 : index
    %c0_9 = arith.constant 0 : index
    %5 = vector.load %arg7[%c1_7, %c17_8, %c0_9] : memref<18x24x128xf32, #tpu.memory_space<vmem>>, vector<16x1x128xf32>
    tpu.vector_store %arg7[%c1_7, %c17_8, %c0_9], %1 {strides = array<i32>} : memref<18x24x128xf32, #tpu.memory_space<vmem>>, vector<16x1x128xf32>,
    %c0_10 = arith.constant 0 : index
    %c0_11 = arith.constant 0 : index
    %c0_12 = arith.constant 0 : index
    %c0_13 = arith.constant 0 : index
    %6 = vector.load %arg1[%c0_10, %c0_11, %c0_12, %c0_13] : memref<1x16x16x128xf32, #tpu.memory_space<vmem>>, vector<1x16x16x128xf32>
    %7 = vector.shape_cast %6 : vector<1x16x16x128xf32> to vector<16x16x128xf32>
    %c1_14 = arith.constant 1 : index
    %c1_15 = arith.constant 1 : index
    %c0_16 = arith.constant 0 : index
    %8 = vector.load %arg7[%c1_14, %c1_15, %c0_16] : memref<18x24x128xf32, #tpu.memory_space<vmem>>, vector<16x16x128xf32>
    tpu.vector_store %arg7[%c1_14, %c1_15, %c0_16], %7 {strides = array<i32>} : memref<18x24x128xf32, #tpu.memory_space<vmem>>, vector<16x16x128xf32>,
    %c0_17 = arith.constant 0 : index
    %c0_18 = arith.constant 0 : index
    %c0_19 = arith.constant 0 : index
    %9 = vector.load %arg7[%c0_17, %c0_18, %c0_19] : memref<18x24x128xf32, #tpu.memory_space<vmem>>, vector<16x16x128xf32>
    %10 = vector.shape_cast %9 : vector<16x16x128xf32> to vector<256x128xf32>
    %c0_20 = arith.constant 0 : index
    %c0_21 = arith.constant 0 : index
    %11 = vector.load %arg8[%c0_20, %c0_21] : memref<256x1152xf32, #tpu.memory_space<vmem>>, vector<256x128xf32>
    tpu.vector_store %arg8[%c0_20, %c0_21], %10 {strides = array<i32>} : memref<256x1152xf32, #tpu.memory_space<vmem>>, vector<256x128xf32>,
    %c0_22 = arith.constant 0 : index
    %c1_23 = arith.constant 1 : index
    %c0_24 = arith.constant 0 : index
    %12 = vector.load %arg7[%c0_22, %c1_23, %c0_24] : memref<18x24x128xf32, #tpu.memory_space<vmem>>, vector<16x16x128xf32>
    %13 = vector.shape_cast %12 : vector<16x16x128xf32> to vector<256x128xf32>
    %c0_25 = arith.constant 0 : index
    %c128 = arith.constant 128 : index
    %14 = vector.load %arg8[%c0_25, %c128] : memref<256x1152xf32, #tpu.memory_space<vmem>>, vector<256x128xf32>
    tpu.vector_store %arg8[%c0_25, %c128], %13 {strides = array<i32>} : memref<256x1152xf32, #tpu.memory_space<vmem>>, vector<256x128xf32>,
    %c0_26 = arith.constant 0 : index
    %c2 = arith.constant 2 : index
    %c0_27 = arith.constant 0 : index
    %15 = vector.load %arg7[%c0_26, %c2, %c0_27] : memref<18x24x128xf32, #tpu.memory_space<vmem>>, vector<16x16x128xf32>
    %16 = vector.shape_cast %15 : vector<16x16x128xf32> to vector<256x128xf32>
    %c0_28 = arith.constant 0 : index
    %c256 = arith.constant 256 : index
    %17 = vector.load %arg8[%c0_28, %c256] : memref<256x1152xf32, #tpu.memory_space<vmem>>, vector<256x128xf32>
    tpu.vector_store %arg8[%c0_28, %c256], %16 {strides = array<i32>} : memref<256x1152xf32, #tpu.memory_space<vmem>>, vector<256x128xf32>,
    %c1_29 = arith.constant 1 : index
    %c0_30 = arith.constant 0 : index
    %c0_31 = arith.constant 0 : index
    %18 = vector.load %arg7[%c1_29, %c0_30, %c0_31] : memref<18x24x128xf32, #tpu.memory_space<vmem>>, vector<16x16x128xf32>
    %19 = vector.shape_cast %18 : vector<16x16x128xf32> to vector<256x128xf32>
    %c0_32 = arith.constant 0 : index
    %c384 = arith.constant 384 : index
    %20 = vector.load %arg8[%c0_32, %c384] : memref<256x1152xf32, #tpu.memory_space<vmem>>, vector<256x128xf32>
    tpu.vector_store %arg8[%c0_32, %c384], %19 {strides = array<i32>} : memref<256x1152xf32, #tpu.memory_space<vmem>>, vector<256x128xf32>,
    %c1_33 = arith.constant 1 : index
    %c1_34 = arith.constant 1 : index
    %c0_35 = arith.constant 0 : index
    %21 = vector.load %arg7[%c1_33, %c1_34, %c0_35] : memref<18x24x128xf32, #tpu.memory_space<vmem>>, vector<16x16x128xf32>
    %22 = vector.shape_cast %21 : vector<16x16x128xf32> to vector<256x128xf32>
    %c0_36 = arith.constant 0 : index
    %c512 = arith.constant 512 : index
    %23 = vector.load %arg8[%c0_36, %c512] : memref<256x1152xf32, #tpu.memory_space<vmem>>, vector<256x128xf32>
    tpu.vector_store %arg8[%c0_36, %c512], %22 {strides = array<i32>} : memref<256x1152xf32, #tpu.memory_space<vmem>>, vector<256x128xf32>,
    %c1_37 = arith.constant 1 : index
    %c2_38 = arith.constant 2 : index
    %c0_39 = arith.constant 0 : index
    %24 = vector.load %arg7[%c1_37, %c2_38, %c0_39] : memref<18x24x128xf32, #tpu.memory_space<vmem>>, vector<16x16x128xf32>
    %25 = vector.shape_cast %24 : vector<16x16x128xf32> to vector<256x128xf32>
    %c0_40 = arith.constant 0 : index
    %c640 = arith.constant 640 : index
    %26 = vector.load %arg8[%c0_40, %c640] : memref<256x1152xf32, #tpu.memory_space<vmem>>, vector<256x128xf32>
    tpu.vector_store %arg8[%c0_40, %c640], %25 {strides = array<i32>} : memref<256x1152xf32, #tpu.memory_space<vmem>>, vector<256x128xf32>,
    %c2_41 = arith.constant 2 : index
    %c0_42 = arith.constant 0 : index
    %c0_43 = arith.constant 0 : index
    %27 = vector.load %arg7[%c2_41, %c0_42, %c0_43] : memref<18x24x128xf32, #tpu.memory_space<vmem>>, vector<16x16x128xf32>
    %28 = vector.shape_cast %27 : vector<16x16x128xf32> to vector<256x128xf32>
    %c0_44 = arith.constant 0 : index
    %c768 = arith.constant 768 : index
    %29 = vector.load %arg8[%c0_44, %c768] : memref<256x1152xf32, #tpu.memory_space<vmem>>, vector<256x128xf32>
    tpu.vector_store %arg8[%c0_44, %c768], %28 {strides = array<i32>} : memref<256x1152xf32, #tpu.memory_space<vmem>>, vector<256x128xf32>,
    %c2_45 = arith.constant 2 : index
    %c1_46 = arith.constant 1 : index
    %c0_47 = arith.constant 0 : index
    %30 = vector.load %arg7[%c2_45, %c1_46, %c0_47] : memref<18x24x128xf32, #tpu.memory_space<vmem>>, vector<16x16x128xf32>
    %31 = vector.shape_cast %30 : vector<16x16x128xf32> to vector<256x128xf32>
    %c0_48 = arith.constant 0 : index
    %c896 = arith.constant 896 : index
    %32 = vector.load %arg8[%c0_48, %c896] : memref<256x1152xf32, #tpu.memory_space<vmem>>, vector<256x128xf32>
    tpu.vector_store %arg8[%c0_48, %c896], %31 {strides = array<i32>} : memref<256x1152xf32, #tpu.memory_space<vmem>>, vector<256x128xf32>,
    %c2_49 = arith.constant 2 : index
    %c2_50 = arith.constant 2 : index
    %c0_51 = arith.constant 0 : index
    %33 = vector.load %arg7[%c2_49, %c2_50, %c0_51] : memref<18x24x128xf32, #tpu.memory_space<vmem>>, vector<16x16x128xf32>
    %34 = vector.shape_cast %33 : vector<16x16x128xf32> to vector<256x128xf32>
    %c0_52 = arith.constant 0 : index
    %c1024 = arith.constant 1024 : index
    %35 = vector.load %arg8[%c0_52, %c1024] : memref<256x1152xf32, #tpu.memory_space<vmem>>, vector<256x128xf32>
    tpu.vector_store %arg8[%c0_52, %c1024], %34 {strides = array<i32>} : memref<256x1152xf32, #tpu.memory_space<vmem>>, vector<256x128xf32>,
    %c0_53 = arith.constant 0 : index
    %c0_54 = arith.constant 0 : index
    %36 = vector.load %arg8[%c0_53, %c0_54] : memref<256x1152xf32, #tpu.memory_space<vmem>>, vector<256x1152xf32>
    %c0_55 = arith.constant 0 : index
    %c0_56 = arith.constant 0 : index
    %37 = vector.load %arg2[%c0_55, %c0_56] : memref<1152x128xf32, #tpu.memory_space<vmem>>, vector<1152x128xf32>
    %cst_57 = arith.constant dense<0.000000e+00> : vector<256x128xf32>
    %38 = tpu.matmul %36, %37, %cst_57 {dimension_numbers = #tpu.dot_dimension_numbers<[1], [0], [0], [1], [0, 0, 1, 1], [], []>} : vector<256x1152xf32>, vector<1152x128xf32>, vector<256x128xf32> -> vector<256x128xf32>
    %c0_58 = arith.constant 0 : index
    %c0_59 = arith.constant 0 : index
    %39 = vector.load %arg3[%c0_58, %c0_59] : memref<1x128xf32, #tpu.memory_space<vmem>>, vector<1x128xf32>
    %40 = vector.broadcast %39 : vector<1x128xf32> to vector<256x128xf32>
    %41 = arith.addf %38, %40 : vector<256x128xf32>
    %cst_60 = arith.constant 0.000000e+00 : f32
    %42 = vector.broadcast %cst_60 : f32 to vector<256x128xf32>
    %43 = arith.maximumf %41, %42 : vector<256x128xf32>
    %44 = vector.shape_cast %43 : vector<256x128xf32> to vector<16x16x128xf32>
    %c1_61 = arith.constant 1 : index
    %c1_62 = arith.constant 1 : index
    %c0_63 = arith.constant 0 : index
    %45 = vector.load %arg7[%c1_61, %c1_62, %c0_63] : memref<18x24x128xf32, #tpu.memory_space<vmem>>, vector<16x16x128xf32>
    tpu.vector_store %arg7[%c1_61, %c1_62, %c0_63], %44 {strides = array<i32>} : memref<18x24x128xf32, #tpu.memory_space<vmem>>, vector<16x16x128xf32>,
    %c0_64 = arith.constant 0 : index
    %c0_65 = arith.constant 0 : index
    %c0_66 = arith.constant 0 : index
    %46 = vector.load %arg7[%c0_64, %c0_65, %c0_66] : memref<18x24x128xf32, #tpu.memory_space<vmem>>, vector<16x16x128xf32>
    %47 = vector.shape_cast %46 : vector<16x16x128xf32> to vector<256x128xf32>
    %c0_67 = arith.constant 0 : index
    %c0_68 = arith.constant 0 : index
    %48 = vector.load %arg8[%c0_67, %c0_68] : memref<256x1152xf32, #tpu.memory_space<vmem>>, vector<256x128xf32>
    tpu.vector_store %arg8[%c0_67, %c0_68], %47 {strides = array<i32>} : memref<256x1152xf32, #tpu.memory_space<vmem>>, vector<256x128xf32>,
    %c0_69 = arith.constant 0 : index
    %c1_70 = arith.constant 1 : index
    %c0_71 = arith.constant 0 : index
    %49 = vector.load %arg7[%c0_69, %c1_70, %c0_71] : memref<18x24x128xf32, #tpu.memory_space<vmem>>, vector<16x16x128xf32>
    %50 = vector.shape_cast %49 : vector<16x16x128xf32> to vector<256x128xf32>
    %c0_72 = arith.constant 0 : index
    %c128_73 = arith.constant 128 : index
    %51 = vector.load %arg8[%c0_72, %c128_73] : memref<256x1152xf32, #tpu.memory_space<vmem>>, vector<256x128xf32>
    tpu.vector_store %arg8[%c0_72, %c128_73], %50 {strides = array<i32>} : memref<256x1152xf32, #tpu.memory_space<vmem>>, vector<256x128xf32>,
    %c0_74 = arith.constant 0 : index
    %c2_75 = arith.constant 2 : index
    %c0_76 = arith.constant 0 : index
    %52 = vector.load %arg7[%c0_74, %c2_75, %c0_76] : memref<18x24x128xf32, #tpu.memory_space<vmem>>, vector<16x16x128xf32>
    %53 = vector.shape_cast %52 : vector<16x16x128xf32> to vector<256x128xf32>
    %c0_77 = arith.constant 0 : index
    %c256_78 = arith.constant 256 : index
    %54 = vector.load %arg8[%c0_77, %c256_78] : memref<256x1152xf32, #tpu.memory_space<vmem>>, vector<256x128xf32>
    tpu.vector_store %arg8[%c0_77, %c256_78], %53 {strides = array<i32>} : memref<256x1152xf32, #tpu.memory_space<vmem>>, vector<256x128xf32>,
    %c1_79 = arith.constant 1 : index
    %c0_80 = arith.constant 0 : index
    %c0_81 = arith.constant 0 : index
    %55 = vector.load %arg7[%c1_79, %c0_80, %c0_81] : memref<18x24x128xf32, #tpu.memory_space<vmem>>, vector<16x16x128xf32>
    %56 = vector.shape_cast %55 : vector<16x16x128xf32> to vector<256x128xf32>
    %c0_82 = arith.constant 0 : index
    %c384_83 = arith.constant 384 : index
    %57 = vector.load %arg8[%c0_82, %c384_83] : memref<256x1152xf32, #tpu.memory_space<vmem>>, vector<256x128xf32>
    tpu.vector_store %arg8[%c0_82, %c384_83], %56 {strides = array<i32>} : memref<256x1152xf32, #tpu.memory_space<vmem>>, vector<256x128xf32>,
    %c1_84 = arith.constant 1 : index
    %c1_85 = arith.constant 1 : index
    %c0_86 = arith.constant 0 : index
    %58 = vector.load %arg7[%c1_84, %c1_85, %c0_86] : memref<18x24x128xf32, #tpu.memory_space<vmem>>, vector<16x16x128xf32>
    %59 = vector.shape_cast %58 : vector<16x16x128xf32> to vector<256x128xf32>
    %c0_87 = arith.constant 0 : index
    %c512_88 = arith.constant 512 : index
    %60 = vector.load %arg8[%c0_87, %c512_88] : memref<256x1152xf32, #tpu.memory_space<vmem>>, vector<256x128xf32>
    tpu.vector_store %arg8[%c0_87, %c512_88], %59 {strides = array<i32>} : memref<256x1152xf32, #tpu.memory_space<vmem>>, vector<256x128xf32>,
    %c1_89 = arith.constant 1 : index
    %c2_90 = arith.constant 2 : index
    %c0_91 = arith.constant 0 : index
    %61 = vector.load %arg7[%c1_89, %c2_90, %c0_91] : memref<18x24x128xf32, #tpu.memory_space<vmem>>, vector<16x16x128xf32>
    %62 = vector.shape_cast %61 : vector<16x16x128xf32> to vector<256x128xf32>
    %c0_92 = arith.constant 0 : index
    %c640_93 = arith.constant 640 : index
    %63 = vector.load %arg8[%c0_92, %c640_93] : memref<256x1152xf32, #tpu.memory_space<vmem>>, vector<256x128xf32>
    tpu.vector_store %arg8[%c0_92, %c640_93], %62 {strides = array<i32>} : memref<256x1152xf32, #tpu.memory_space<vmem>>, vector<256x128xf32>,
    %c2_94 = arith.constant 2 : index
    %c0_95 = arith.constant 0 : index
    %c0_96 = arith.constant 0 : index
    %64 = vector.load %arg7[%c2_94, %c0_95, %c0_96] : memref<18x24x128xf32, #tpu.memory_space<vmem>>, vector<16x16x128xf32>
    %65 = vector.shape_cast %64 : vector<16x16x128xf32> to vector<256x128xf32>
    %c0_97 = arith.constant 0 : index
    %c768_98 = arith.constant 768 : index
    %66 = vector.load %arg8[%c0_97, %c768_98] : memref<256x1152xf32, #tpu.memory_space<vmem>>, vector<256x128xf32>
    tpu.vector_store %arg8[%c0_97, %c768_98], %65 {strides = array<i32>} : memref<256x1152xf32, #tpu.memory_space<vmem>>, vector<256x128xf32>,
    %c2_99 = arith.constant 2 : index
    %c1_100 = arith.constant 1 : index
    %c0_101 = arith.constant 0 : index
    %67 = vector.load %arg7[%c2_99, %c1_100, %c0_101] : memref<18x24x128xf32, #tpu.memory_space<vmem>>, vector<16x16x128xf32>
    %68 = vector.shape_cast %67 : vector<16x16x128xf32> to vector<256x128xf32>
    %c0_102 = arith.constant 0 : index
    %c896_103 = arith.constant 896 : index
    %69 = vector.load %arg8[%c0_102, %c896_103] : memref<256x1152xf32, #tpu.memory_space<vmem>>, vector<256x128xf32>
    tpu.vector_store %arg8[%c0_102, %c896_103], %68 {strides = array<i32>} : memref<256x1152xf32, #tpu.memory_space<vmem>>, vector<256x128xf32>,
    %c2_104 = arith.constant 2 : index
    %c2_105 = arith.constant 2 : index
    %c0_106 = arith.constant 0 : index
    %70 = vector.load %arg7[%c2_104, %c2_105, %c0_106] : memref<18x24x128xf32, #tpu.memory_space<vmem>>, vector<16x16x128xf32>
    %71 = vector.shape_cast %70 : vector<16x16x128xf32> to vector<256x128xf32>
    %c0_107 = arith.constant 0 : index
    %c1024_108 = arith.constant 1024 : index
    %72 = vector.load %arg8[%c0_107, %c1024_108] : memref<256x1152xf32, #tpu.memory_space<vmem>>, vector<256x128xf32>
    tpu.vector_store %arg8[%c0_107, %c1024_108], %71 {strides = array<i32>} : memref<256x1152xf32, #tpu.memory_space<vmem>>, vector<256x128xf32>,
    %c0_109 = arith.constant 0 : index
    %c0_110 = arith.constant 0 : index
    %73 = vector.load %arg8[%c0_109, %c0_110] : memref<256x1152xf32, #tpu.memory_space<vmem>>, vector<256x1152xf32>
    %c0_111 = arith.constant 0 : index
    %c0_112 = arith.constant 0 : index
    %74 = vector.load %arg4[%c0_111, %c0_112] : memref<1152x128xf32, #tpu.memory_space<vmem>>, vector<1152x128xf32>
    %cst_113 = arith.constant dense<0.000000e+00> : vector<256x128xf32>
    %75 = tpu.matmul %73, %74, %cst_113 {dimension_numbers = #tpu.dot_dimension_numbers<[1], [0], [0], [1], [0, 0, 1, 1], [], []>} : vector<256x1152xf32>, vector<1152x128xf32>, vector<256x128xf32> -> vector<256x128xf32>
    %c0_114 = arith.constant 0 : index
    %c0_115 = arith.constant 0 : index
    %76 = vector.load %arg5[%c0_114, %c0_115] : memref<1x128xf32, #tpu.memory_space<vmem>>, vector<1x128xf32>
    %77 = vector.broadcast %76 : vector<1x128xf32> to vector<256x128xf32>
    %78 = arith.addf %75, %77 : vector<256x128xf32>
    %cst_116 = arith.constant 0.000000e+00 : f32
    %79 = vector.broadcast %cst_116 : f32 to vector<256x128xf32>
    %80 = arith.maximumf %78, %79 : vector<256x128xf32>
    %81 = vector.shape_cast %7 : vector<16x16x128xf32> to vector<256x128xf32>
    %82 = arith.addf %80, %81 : vector<256x128xf32>
    %83 = vector.shape_cast %82 : vector<256x128xf32> to vector<16x16x128xf32>
    %c0_117 = arith.constant 0 : index
    %c0_118 = arith.constant 0 : index
    %c0_119 = arith.constant 0 : index
    %c0_120 = arith.constant 0 : index
    %84 = vector.load %arg6[%c0_117, %c0_118, %c0_119, %c0_120] : memref<1x16x16x128xf32, #tpu.memory_space<vmem>>, vector<1x16x16x128xf32>
    %85 = vector.shape_cast %84 : vector<1x16x16x128xf32> to vector<16x16x128xf32>
    %86 = vector.shape_cast %83 : vector<16x16x128xf32> to vector<1x16x16x128xf32>
    tpu.vector_store %arg6[%c0_117, %c0_118, %c0_119, %c0_120], %86 {strides = array<i32>} : memref<1x16x16x128xf32, #tpu.memory_space<vmem>>, vector<1x16x16x128xf32>,
    return
  }
  func.func @transform_0(%arg0: i32) -> (i32, i32, i32, i32) {
    %c0_i32 = arith.constant 0 : i32
    %c0_i32_0 = arith.constant 0 : i32
    %c0_i32_1 = arith.constant 0 : i32
    %c0_i32_2 = arith.constant 0 : i32
    return %arg0, %c0_i32, %c0_i32_0, %c0_i32_1 : i32, i32, i32, i32
  }
  func.func @transform_1(%arg0: i32) -> (i32, i32) {
    %c0_i32 = arith.constant 0 : i32
    %c0_i32_0 = arith.constant 0 : i32
    %c0_i32_1 = arith.constant 0 : i32
    return %c0_i32, %c0_i32_0 : i32, i32
  }
  func.func @transform_2(%arg0: i32) -> (i32, i32) {
    %c0_i32 = arith.constant 0 : i32
    %c0_i32_0 = arith.constant 0 : i32
    %c0_i32_1 = arith.constant 0 : i32
    return %c0_i32, %c0_i32_0 : i32, i32
  }
  func.func @transform_3(%arg0: i32) -> (i32, i32) {
    %c0_i32 = arith.constant 0 : i32
    %c0_i32_0 = arith.constant 0 : i32
    %c0_i32_1 = arith.constant 0 : i32
    return %c0_i32, %c0_i32_0 : i32, i32
  }
  func.func @transform_4(%arg0: i32) -> (i32, i32) {
    %c0_i32 = arith.constant 0 : i32
    %c0_i32_0 = arith.constant 0 : i32
    %c0_i32_1 = arith.constant 0 : i32
    return %c0_i32, %c0_i32_0 : i32, i32
  }
  func.func @transform_5(%arg0: i32) -> (i32, i32, i32, i32) {
    %c0_i32 = arith.constant 0 : i32
    %c0_i32_0 = arith.constant 0 : i32
    %c0_i32_1 = arith.constant 0 : i32
    %c0_i32_2 = arith.constant 0 : i32
    return %arg0, %c0_i32, %c0_i32_0, %c0_i32_1 : i32, i32, i32, i32
  }
}

</mosaic_0001>

<llo_original>
// kernel: residual_block.1
$region0: #{residual_block.1}
  #allocation0 [shape = 'u32[]', space=smem, size = 0x4, offset = 0x4, fixed_abs, tag = 'smem constant byte address 0x4 - core index']
  #allocation1 [shape = 'u32[144,128]{1,0:T(1,128)}', space=vmem, size = 0x12000, scoped, tag = 'internal scratch']
  #allocation2 [shape = 'f32[18,24,128]{2,1,0:T(8,128)}', space=vmem, size = 0x36000, scoped, tag = 'scratch operand']
  #allocation3 [shape = 'f32[256,1152]{1,0:T(8,128)}', space=vmem, size = 0x120000, scoped, tag = 'scratch operand']
  %s0 = inlined_call_operand.vmem [shape: f32[2,16,16,128], index: 0, kind: input, shape index: {}]
  %s1 = inlined_call_operand.vmem [shape: f32[1152,128], index: 1, kind: input, shape index: {}]
  %s2 = inlined_call_operand.vmem [shape: f32[1,128], index: 2, kind: input, shape index: {}]
  %s3 = inlined_call_operand.vmem [shape: f32[1152,128], index: 3, kind: input, shape index: {}]
  %s4 = inlined_call_operand.vmem [shape: f32[1,128], index: 4, kind: input, shape index: {}]
  %s5 = inlined_call_operand.vmem [shape: f32[2,16,16,128], index: 5, kind: output, shape index: {}]
  %s6 = sld [smem:[#allocation0]]
  $region53: #{residual_block.1} parent=0
    _
  %s8 = ssub.s32 1, %s6
  %s9 = scalar_select 0, %s8, %s6
  loop: start=0, step=1, limit=4
  $region2: #{residual_block.1} parent=0 // loop_pre_header
    _
  $region3: #{residual_block.1} parent=0 // loop_header
    %s11 = sphi 0, %s15
    %p12 = scmp.ge.s32.totalorder %s11, 4
    %s21 = sphi 0, %s23
    %s24 = sphi 0, %s21
    %s25 = sphi 0, %s24
    %s41 = sphi 0, %s25
    %s45 = sphi 0, %s45
    %s47 = sphi 0, %s45
    %s48 = sphi 0, %s47
    %s62 = sphi 0, %s48
    %s66 = sphi 0, %s66
    %s68 = sphi 0, %s66
    %s69 = sphi 0, %s68
    %s83 = sphi 0, %s69
    %s87 = sphi 0, %s87
    %s89 = sphi 0, %s87
    %s90 = sphi 0, %s89
    %s104 = sphi 0, %s90
    %s108 = sphi 0, %s108
    %s110 = sphi 0, %s108
    %s111 = sphi 0, %s110
    %s125 = sphi 0, %s111
    %s131 = sphi 0, %s133
    %s134 = sphi 0, %s131
    %s135 = sphi 0, %s134
    %s151 = sphi 0, %s135
  $region4: #{residual_block.1} parent=0 // loop_header_branch
    %14 = sbr.rel (%p12) target = $region8
  $region5: #{residual_block.1} parent=0 // loop_body
    %s16 = ssub.s32 %s11, 1
    %s17 = ssub.s32 %s11, 2
    %s18 = sadd.s32 %s11, 1
    %s19 = ssub.s32 %s11, %s18
    %p20 = scmp.eq.s32.totalorder %s19, 0
    %s22 = sadd.s32 %s21, 1
    %s23 = scalar_select %p20, %s21, %s22
    %p26 = pneg %p20
    %p27 = scmp.eq.s32.totalorder %s11, 1
    %p28 = por %p26, %p27
    %p29 = scmp.ne.s32.totalorder %s21, %s24
    %p30 = scmp.eq.s32.totalorder %s11, 0
    %p31 = por %p29, %p30
    %p32 = scmp.ne.s32.totalorder %s21, %s24
    %p33 = scmp.eq.s32.totalorder %s16, 1
    %p34 = por %p32, %p33
    %p35 = scmp.ne.s32.totalorder %s24, %s25
    %p36 = scmp.eq.s32.totalorder %s16, 0
    %p37 = por %p35, %p36
    %p38 = scmp.ne.s32.totalorder %s24, %s25
    %p39 = scmp.eq.s32.totalorder %s17, 1
    %p40 = por %p38, %p39
    %p42 = scmp.ne.s32.totalorder %s25, %s41
    %p43 = scmp.eq.s32.totalorder %s17, 0
    %p44 = por %p42, %p43
    %s46 = sadd.s32 %s45, 1
    %p49 = scmp.eq.s32.totalorder %s11, 1
    %p50 = scmp.ne.s32.totalorder %s45, %s47
    %p51 = scmp.eq.s32.totalorder %s11, 0
    %p52 = por %p50, %p51
    %p53 = scmp.ne.s32.totalorder %s45, %s47
    %p54 = scmp.eq.s32.totalorder %s16, 1
    %p55 = por %p53, %p54
    %p56 = scmp.ne.s32.totalorder %s47, %s48
    %p57 = scmp.eq.s32.totalorder %s16, 0
    %p58 = por %p56, %p57
    %p59 = scmp.ne.s32.totalorder %s47, %s48
    %p60 = scmp.eq.s32.totalorder %s17, 1
    %p61 = por %p59, %p60
    %p63 = scmp.ne.s32.totalorder %s48, %s62
    %p64 = scmp.eq.s32.totalorder %s17, 0
    %p65 = por %p63, %p64
    %s67 = sadd.s32 %s66, 1
    %p70 = scmp.eq.s32.totalorder %s11, 1
    %p71 = scmp.ne.s32.totalorder %s66, %s68
    %p72 = scmp.eq.s32.totalorder %s11, 0
    %p73 = por %p71, %p72
    %p74 = scmp.ne.s32.totalorder %s66, %s68
    %p75 = scmp.eq.s32.totalorder %s16, 1
    %p76 = por %p74, %p75
    %p77 = scmp.ne.s32.totalorder %s68, %s69
    %p78 = scmp.eq.s32.totalorder %s16, 0
    %p79 = por %p77, %p78
    %p80 = scmp.ne.s32.totalorder %s68, %s69
    %p81 = scmp.eq.s32.totalorder %s17, 1
    %p82 = por %p80, %p81
    %p84 = scmp.ne.s32.totalorder %s69, %s83
    %p85 = scmp.eq.s32.totalorder %s17, 0
    %p86 = por %p84, %p85
    %s88 = sadd.s32 %s87, 1
    %p91 = scmp.eq.s32.totalorder %s11, 1
    %p92 = scmp.ne.s32.totalorder %s87, %s89
    %p93 = scmp.eq.s32.totalorder %s11, 0
    %p94 = por %p92, %p93
    %p95 = scmp.ne.s32.totalorder %s87, %s89
    %p96 = scmp.eq.s32.totalorder %s16, 1
    %p97 = por %p95, %p96
    %p98 = scmp.ne.s32.totalorder %s89, %s90
    %p99 = scmp.eq.s32.totalorder %s16, 0
    %p100 = por %p98, %p99
    %p101 = scmp.ne.s32.totalorder %s89, %s90
    %p102 = scmp.eq.s32.totalorder %s17, 1
    %p103 = por %p101, %p102
    %p105 = scmp.ne.s32.totalorder %s90, %s104
    %p106 = scmp.eq.s32.totalorder %s17, 0
    %p107 = por %p105, %p106
    %s109 = sadd.s32 %s108, 1
    %p112 = scmp.eq.s32.totalorder %s11, 1
    %p113 = scmp.ne.s32.totalorder %s108, %s110
    %p114 = scmp.eq.s32.totalorder %s11, 0
    %p115 = por %p113, %p114
    %p116 = scmp.ne.s32.totalorder %s108, %s110
    %p117 = scmp.eq.s32.totalorder %s16, 1
    %p118 = por %p116, %p117
    %p119 = scmp.ne.s32.totalorder %s110, %s111
    %p120 = scmp.eq.s32.totalorder %s16, 0
    %p121 = por %p119, %p120
    %p122 = scmp.ne.s32.totalorder %s110, %s111
    %p123 = scmp.eq.s32.totalorder %s17, 1
    %p124 = por %p122, %p123
    %p126 = scmp.ne.s32.totalorder %s111, %s125
    %p127 = scmp.eq.s32.totalorder %s17, 0
    %p128 = por %p126, %p127
    %s129 = ssub.s32 %s11, %s18
    %p130 = scmp.eq.s32.totalorder %s129, 0
    %s132 = sadd.s32 %s131, 1
    %s133 = scalar_select %p130, %s131, %s132
    %p136 = pneg %p130
    %p137 = scmp.eq.s32.totalorder %s11, 1
    %p138 = por %p136, %p137
    %p139 = scmp.ne.s32.totalorder %s131, %s134
    %p140 = scmp.eq.s32.totalorder %s11, 0
    %p141 = por %p139, %p140
    %p142 = scmp.ne.s32.totalorder %s131, %s134
    %p143 = scmp.eq.s32.totalorder %s16, 1
    %p144 = por %p142, %p143
    %p145 = scmp.ne.s32.totalorder %s134, %s135
    %p146 = scmp.eq.s32.totalorder %s16, 0
    %p147 = por %p145, %p146
    %p148 = scmp.ne.s32.totalorder %s134, %s135
    %p149 = scmp.eq.s32.totalorder %s17, 1
    %p150 = por %p148, %p149
    %p152 = scmp.ne.s32.totalorder %s135, %s151
    %p153 = scmp.eq.s32.totalorder %s17, 0
    %p154 = por %p152, %p153
    %p155 = scmp.le.s32.totalorder 1, %s11
    %p156 = scmp.lt.s32.totalorder %s11, 3
    %p157 = pnand %p155, %p156
    %p158 = pneg %p157
    // Predicated region
    $region9: #{residual_block.1} parent=5 // pred_check
      _
    $region10: #{residual_block.1} parent=5 // pred_check_branch
      %160 = sbr.rel (%p157) target = $region12
    $region11: #{residual_block.1} parent=5 // pred_region
      %s161 = ssub.s32 %s11, 1
      // Predicated region
      $region13: #{residual_block.1} parent=11 // pred_check
        %p162 = pneg %p58
      $region14: #{residual_block.1} parent=11 // pred_check_branch
        %164 = sbr.rel (%p162) target = $region16
      $region15: #{residual_block.1} parent=11 // pred_region
        _
      $region16: #{residual_block.1} parent=11 // pred_fallthru
        _
      // Predicated region
      $region17: #{residual_block.1} parent=11 // pred_check
        %p165 = pneg %p79
      $region18: #{residual_block.1} parent=11 // pred_check_branch
        %167 = sbr.rel (%p165) target = $region20
      $region19: #{residual_block.1} parent=11 // pred_region
        _
      $region20: #{residual_block.1} parent=11 // pred_fallthru
        _
      // Predicated region
      $region21: #{residual_block.1} parent=11 // pred_check
        %p168 = pneg %p100
      $region22: #{residual_block.1} parent=11 // pred_check_branch
        %170 = sbr.rel (%p168) target = $region24
      $region23: #{residual_block.1} parent=11 // pred_region
        _
      $region24: #{residual_block.1} parent=11 // pred_fallthru
        _
      // Predicated region
      $region25: #{residual_block.1} parent=11 // pred_check
        %p171 = pneg %p121
      $region26: #{residual_block.1} parent=11 // pred_check_branch
        %173 = sbr.rel (%p171) target = $region28
      $region27: #{residual_block.1} parent=11 // pred_region
        _
      $region28: #{residual_block.1} parent=11 // pred_fallthru
        _
    $region12: #{residual_block.1} parent=5 // pred_fallthru
      _
    %p174 = scmp.lt.s32.totalorder %s11, 2
    // Predicated region
    $region29: #{residual_block.1} parent=5 // pred_check
      %p175 = pneg %p174
    $region30: #{residual_block.1} parent=5 // pred_check_branch
      %177 = sbr.rel (%p175) target = $region32
    $region31: #{residual_block.1} parent=5 // pred_region
      // Predicated region
      $region33: #{residual_block.1} parent=31 // pred_check
        %p178 = pneg %p31
      $region34: #{residual_block.1} parent=31 // pred_check_branch
        %180 = sbr.rel (%p178) target = $region36
      $region35: #{residual_block.1} parent=31 // pred_region
        %p181 = scmp.lt.s32.totalorder %s11, 1
        %s182 = scalar_select %p181, %s11, 1
        %s183 = smul.addr %s182, 32
        %s184 = smul.addr %s183, 8
        %s185 = scalar_lea.vmem %s0, %s184
      $region36: #{residual_block.1} parent=31 // pred_fallthru
        _
    $region32: #{residual_block.1} parent=5 // pred_fallthru
      _
    %p186 = scmp.le.s32.totalorder 1, %s11
    %p187 = scmp.lt.s32.totalorder %s11, 3
    %p188 = pnand %p186, %p187
    %p189 = pneg %p188
    // Predicated region
    $region37: #{residual_block.1} parent=5 // pred_check
      _
    $region38: #{residual_block.1} parent=5 // pred_check_branch
      %191 = sbr.rel (%p188) target = $region40
    $region39: #{residual_block.1} parent=5 // pred_region
      %s192 = ssub.s32 %s11, 1
      %p193 = scmp.lt.s32.totalorder %s16, 1
      %s194 = scalar_select %p193, %s16, 1
      %s195 = smul.addr %s194, 32
      %s196 = smul.addr %s195, 8
      %s197 = scalar_lea.vmem %s0, %s196
      %p198 = pneg %p37
      %p199 = pneg %p34
      %p200 = pneg %p58
      %p201 = pneg %p55
      %p202 = pneg %p79
      %p203 = pneg %p76
      %p204 = pneg %p100
      %p205 = pneg %p97
      %p206 = pneg %p121
      %p207 = pneg %p118
      %p208 = pneg %p147
      %p209 = pneg %p144
      %p210 = scmp.lt.s32.totalorder %s16, 1
      %s211 = scalar_select %p210, %s16, 1
      %s212 = smul.addr %s211, 32
      %s213 = smul.addr %s212, 8
      %s214 = scalar_lea.vmem %s5, %s213
      %p215 = scmp.lt.s32.totalorder %s16, 1
      %s216 = scalar_select %p215, %s16, 1
      %s217 = smul.addr %s216, 32
      %s218 = smul.addr %s217, 8
      %s219 = scalar_lea.vmem %s0, %s218
      %p220 = scmp.lt.s32.totalorder %s16, 1
      %s221 = scalar_select %p220, %s16, 1
      %s222 = smul.addr %s221, 32
      %s223 = smul.addr %s222, 8
      %s224 = scalar_lea.vmem %s5, %s223
      %225 = vst [vmem:[#allocation2] sm:$0xff] 0.0
      %226 = vst [vmem:[#allocation2 + $0x8] sm:$0xff] 0.0
      %227 = vst [vmem:[#allocation2 + $0x10] sm:$0xff] 0.0
      %s228 = scalar_lea.vmem [#allocation2], 408
      %229 = vst [vmem:[%s228] sm:$0xff] 0.0
      %230 = vst [vmem:[%s228 + $0x8] sm:$0xff] 0.0
      %231 = vst [vmem:[%s228 + $0x10] sm:$0xff] 0.0
      %s232 = scalar_lea.vmem [#allocation2], 24
      %233 = vst [vmem:[%s232] sm:$0x1] 0.0
      %234 = vst [vmem:[%s232 + $0x18] sm:$0x1] 0.0
      %235 = vst [vmem:[%s232 + $0x30] sm:$0x1] 0.0
      %236 = vst [vmem:[%s232 + $0x48] sm:$0x1] 0.0
      %237 = vst [vmem:[%s232 + $0x60] sm:$0x1] 0.0
      %238 = vst [vmem:[%s232 + $0x78] sm:$0x1] 0.0
      %239 = vst [vmem:[%s232 + $0x90] sm:$0x1] 0.0
      %240 = vst [vmem:[%s232 + $0xa8] sm:$0x1] 0.0
      %241 = vst [vmem:[%s232 + $0xc0] sm:$0x1] 0.0
      %242 = vst [vmem:[%s232 + $0xd8] sm:$0x1] 0.0
      %243 = vst [vmem:[%s232 + $0xf0] sm:$0x1] 0.0
      %244 = vst [vmem:[%s232 + $0x108] sm:$0x1] 0.0
      %245 = vst [vmem:[%s232 + $0x120] sm:$0x1] 0.0
      %246 = vst [vmem:[%s232 + $0x138] sm:$0x1] 0.0
      %247 = vst [vmem:[%s232 + $0x150] sm:$0x1] 0.0
      %248 = vst [vmem:[%s232 + $0x168] sm:$0x1] 0.0
      %249 = vst [vmem:[%s232 + $0x11] sm:$0x1] 0.0
      %250 = vst [vmem:[%s232 + $0x29] sm:$0x1] 0.0
      %251 = vst [vmem:[%s232 + $0x41] sm:$0x1] 0.0
      %252 = vst [vmem:[%s232 + $0x59] sm:$0x1] 0.0
      %253 = vst [vmem:[%s232 + $0x71] sm:$0x1] 0.0
      %254 = vst [vmem:[%s232 + $0x89] sm:$0x1] 0.0
      %255 = vst [vmem:[%s232 + $0xa1] sm:$0x1] 0.0
      %256 = vst [vmem:[%s232 + $0xb9] sm:$0x1] 0.0
      %257 = vst [vmem:[%s232 + $0xd1] sm:$0x1] 0.0
      %258 = vst [vmem:[%s232 + $0xe9] sm:$0x1] 0.0
      %259 = vst [vmem:[%s232 + $0x101] sm:$0x1] 0.0
      %260 = vst [vmem:[%s232 + $0x119] sm:$0x1] 0.0
      %261 = vst [vmem:[%s232 + $0x131] sm:$0x1] 0.0
      %262 = vst [vmem:[%s232 + $0x149] sm:$0x1] 0.0
      %263 = vst [vmem:[%s232 + $0x161] sm:$0x1] 0.0
      %264 = vst [vmem:[%s232 + $0x179] sm:$0x1] 0.0
      %v265 = vld [vmem:[%s219] sm:$0xff]
      %v266 = vld [vmem:[%s219 + $0x8] sm:$0xff]
      %v267 = vld [vmem:[%s219 + $0x10] sm:$0xff]
      %v268 = vld [vmem:[%s219 + $0x18] sm:$0xff]
      %v269 = vld [vmem:[%s219 + $0x20] sm:$0xff]
      %v270 = vld [vmem:[%s219 + $0x28] sm:$0xff]
      %v271 = vld [vmem:[%s219 + $0x30] sm:$0xff]
      %v272 = vld [vmem:[%s219 + $0x38] sm:$0xff]
      %v273 = vld [vmem:[%s219 + $0x40] sm:$0xff]
      %v274 = vld [vmem:[%s219 + $0x48] sm:$0xff]
      %v275 = vld [vmem:[%s219 + $0x50] sm:$0xff]
      %v276 = vld [vmem:[%s219 + $0x58] sm:$0xff]
      %v277 = vld [vmem:[%s219 + $0x60] sm:$0xff]
      %v278 = vld [vmem:[%s219 + $0x68] sm:$0xff]
      %v279 = vld [vmem:[%s219 + $0x70] sm:$0xff]
      %v280 = vld [vmem:[%s219 + $0x78] sm:$0xff]
      %v281 = vld [vmem:[%s219 + $0x80] sm:$0xff]
      %v282 = vld [vmem:[%s219 + $0x88] sm:$0xff]
      %v283 = vld [vmem:[%s219 + $0x90] sm:$0xff]
      %v284 = vld [vmem:[%s219 + $0x98] sm:$0xff]
      %v285 = vld [vmem:[%s219 + $0xa0] sm:$0xff]
      %v286 = vld [vmem:[%s219 + $0xa8] sm:$0xff]
      %v287 = vld [vmem:[%s219 + $0xb0] sm:$0xff]
      %v288 = vld [vmem:[%s219 + $0xb8] sm:$0xff]
      %v289 = vld [vmem:[%s219 + $0xc0] sm:$0xff]
      %v290 = vld [vmem:[%s219 + $0xc8] sm:$0xff]
      %v291 = vld [vmem:[%s219 + $0xd0] sm:$0xff]
      %v292 = vld [vmem:[%s219 + $0xd8] sm:$0xff]
      %v293 = vld [vmem:[%s219 + $0xe0] sm:$0xff]
      %v294 = vld [vmem:[%s219 + $0xe8] sm:$0xff]
      %v295 = vld [vmem:[%s219 + $0xf0] sm:$0xff]
      %v296 = vld [vmem:[%s219 + $0xf8] sm:$0xff]
      %297 = vst [vmem:[%s232 + $0x1] sm:$0xff] %v265
      %298 = vst [vmem:[%s232 + $0x9] sm:$0xff] %v266
      %299 = vst [vmem:[%s232 + $0x19] sm:$0xff] %v267
      %300 = vst [vmem:[%s232 + $0x21] sm:$0xff] %v268
      %301 = vst [vmem:[%s232 + $0x31] sm:$0xff] %v269
      %302 = vst [vmem:[%s232 + $0x39] sm:$0xff] %v270
      %303 = vst [vmem:[%s232 + $0x49] sm:$0xff] %v271
      %304 = vst [vmem:[%s232 + $0x51] sm:$0xff] %v272
      %305 = vst [vmem:[%s232 + $0x61] sm:$0xff] %v273
      %306 = vst [vmem:[%s232 + $0x69] sm:$0xff] %v274
      %307 = vst [vmem:[%s232 + $0x79] sm:$0xff] %v275
      %308 = vst [vmem:[%s232 + $0x81] sm:$0xff] %v276
      %309 = vst [vmem:[%s232 + $0x91] sm:$0xff] %v277
      %310 = vst [vmem:[%s232 + $0x99] sm:$0xff] %v278
      %311 = vst [vmem:[%s232 + $0xa9] sm:$0xff] %v279
      %312 = vst [vmem:[%s232 + $0xb1] sm:$0xff] %v280
      %313 = vst [vmem:[%s232 + $0xc1] sm:$0xff] %v281
      %314 = vst [vmem:[%s232 + $0xc9] sm:$0xff] %v282
      %315 = vst [vmem:[%s232 + $0xd9] sm:$0xff] %v283
      %316 = vst [vmem:[%s232 + $0xe1] sm:$0xff] %v284
      %317 = vst [vmem:[%s232 + $0xf1] sm:$0xff] %v285
      %318 = vst [vmem:[%s232 + $0xf9] sm:$0xff] %v286
      %319 = vst [vmem:[%s232 + $0x109] sm:$0xff] %v287
      %320 = vst [vmem:[%s232 + $0x111] sm:$0xff] %v288
      %321 = vst [vmem:[%s232 + $0x121] sm:$0xff] %v289
      %322 = vst [vmem:[%s232 + $0x129] sm:$0xff] %v290
      %323 = vst [vmem:[%s232 + $0x139] sm:$0xff] %v291
      %324 = vst [vmem:[%s232 + $0x141] sm:$0xff] %v292
      %325 = vst [vmem:[%s232 + $0x151] sm:$0xff] %v293
      %326 = vst [vmem:[%s232 + $0x159] sm:$0xff] %v294
      %327 = vst [vmem:[%s232 + $0x169] sm:$0xff] %v295
      %328 = vst [vmem:[%s232 + $0x171] sm:$0xff] %v296
      %v329 = vld [vmem:[#allocation2] sm:$0xff]
      %v330 = vld [vmem:[#allocation2 + $0x8] sm:$0xff]
      %v331 = vld [vmem:[#allocation2 + $0x18] sm:$0xff]
      %v332 = vld [vmem:[#allocation2 + $0x20] sm:$0xff]
      %v333 = vld [vmem:[#allocation2 + $0x30] sm:$0xff]
      %v334 = vld [vmem:[#allocation2 + $0x38] sm:$0xff]
      %v335 = vld [vmem:[#allocation2 + $0x48] sm:$0xff]
      %v336 = vld [vmem:[#allocation2 + $0x50] sm:$0xff]
      %v337 = vld [vmem:[#allocation2 + $0x60] sm:$0xff]
      %v338 = vld [vmem:[#allocation2 + $0x68] sm:$0xff]
      %v339 = vld [vmem:[#allocation2 + $0x78] sm:$0xff]
      %v340 = vld [vmem:[#allocation2 + $0x80] sm:$0xff]
      %v341 = vld [vmem:[#allocation2 + $0x90] sm:$0xff]
      %v342 = vld [vmem:[#allocation2 + $0x98] sm:$0xff]
      %v343 = vld [vmem:[#allocation2 + $0xa8] sm:$0xff]
      %v344 = vld [vmem:[#allocation2 + $0xb0] sm:$0xff]
      %v345 = vld [vmem:[#allocation2 + $0xc0] sm:$0xff]
      %v346 = vld [vmem:[#allocation2 + $0xc8] sm:$0xff]
      %v347 = vld [vmem:[#allocation2 + $0xd8] sm:$0xff]
      %v348 = vld [vmem:[#allocation2 + $0xe0] sm:$0xff]
      %v349 = vld [vmem:[#allocation2 + $0xf0] sm:$0xff]
      %v350 = vld [vmem:[#allocation2 + $0xf8] sm:$0xff]
      %v351 = vld [vmem:[#allocation2 + $0x108] sm:$0xff]
      %v352 = vld [vmem:[#allocation2 + $0x110] sm:$0xff]
      %v353 = vld [vmem:[#allocation2 + $0x120] sm:$0xff]
      %v354 = vld [vmem:[#allocation2 + $0x128] sm:$0xff]
      %v355 = vld [vmem:[#allocation2 + $0x138] sm:$0xff]
      %v356 = vld [vmem:[#allocation2 + $0x140] sm:$0xff]
      %v357 = vld [vmem:[#allocation2 + $0x150] sm:$0xff]
      %v358 = vld [vmem:[#allocation2 + $0x158] sm:$0xff]
      %v359 = vld [vmem:[#allocation2 + $0x168] sm:$0xff]
      %v360 = vld [vmem:[#allocation2 + $0x170] sm:$0xff]
      %361 = vst [vmem:[#allocation3] sm:$0xff] %v329
      %362 = vst [vmem:[#allocation3 + $0x48] sm:$0xff] %v330
      %363 = vst [vmem:[#allocation3 + $0x90] sm:$0xff] %v331
      %364 = vst [vmem:[#allocation3 + $0xd8] sm:$0xff] %v332
      %365 = vst [vmem:[#allocation3 + $0x120] sm:$0xff] %v333
      %366 = vst [vmem:[#allocation3 + $0x168] sm:$0xff] %v334
      %367 = vst [vmem:[#allocation3 + $0x1b0] sm:$0xff] %v335
      %368 = vst [vmem:[#allocation3 + $0x1f8] sm:$0xff] %v336
      %369 = vst [vmem:[#allocation3 + $0x240] sm:$0xff] %v337
      %370 = vst [vmem:[#allocation3 + $0x288] sm:$0xff] %v338
      %371 = vst [vmem:[#allocation3 + $0x2d0] sm:$0xff] %v339
      %372 = vst [vmem:[#allocation3 + $0x318] sm:$0xff] %v340
      %373 = vst [vmem:[#allocation3 + $0x360] sm:$0xff] %v341
      %374 = vst [vmem:[#allocation3 + $0x3a8] sm:$0xff] %v342
      %375 = vst [vmem:[#allocation3 + $0x3f0] sm:$0xff] %v343
      %376 = vst [vmem:[#allocation3 + $0x438] sm:$0xff] %v344
      %377 = vst [vmem:[#allocation3 + $0x480] sm:$0xff] %v345
      %378 = vst [vmem:[#allocation3 + $0x4c8] sm:$0xff] %v346
      %379 = vst [vmem:[#allocation3 + $0x510] sm:$0xff] %v347
      %380 = vst [vmem:[#allocation3 + $0x558] sm:$0xff] %v348
      %381 = vst [vmem:[#allocation3 + $0x5a0] sm:$0xff] %v349
      %382 = vst [vmem:[#allocation3 + $0x5e8] sm:$0xff] %v350
      %383 = vst [vmem:[#allocation3 + $0x630] sm:$0xff] %v351
      %384 = vst [vmem:[#allocation3 + $0x678] sm:$0xff] %v352
      %385 = vst [vmem:[#allocation3 + $0x6c0] sm:$0xff] %v353
      %386 = vst [vmem:[#allocation3 + $0x708] sm:$0xff] %v354
      %387 = vst [vmem:[#allocation3 + $0x750] sm:$0xff] %v355
      %388 = vst [vmem:[#allocation3 + $0x798] sm:$0xff] %v356
      %389 = vst [vmem:[#allocation3 + $0x7e0] sm:$0xff] %v357
      %390 = vst [vmem:[#allocation3 + $0x828] sm:$0xff] %v358
      %391 = vst [vmem:[#allocation3 + $0x870] sm:$0xff] %v359
      %392 = vst [vmem:[#allocation3 + $0x8b8] sm:$0xff] %v360
      %v393 = vld [vmem:[#allocation2 + $0x1] sm:$0xff]
      %v394 = vld [vmem:[#allocation2 + $0x9] sm:$0xff]
      %v395 = vld [vmem:[#allocation2 + $0x19] sm:$0xff]
      %v396 = vld [vmem:[#allocation2 + $0x21] sm:$0xff]
      %v397 = vld [vmem:[#allocation2 + $0x31] sm:$0xff]
      %v398 = vld [vmem:[#allocation2 + $0x39] sm:$0xff]
      %v399 = vld [vmem:[#allocation2 + $0x49] sm:$0xff]
      %v400 = vld [vmem:[#allocation2 + $0x51] sm:$0xff]
      %v401 = vld [vmem:[#allocation2 + $0x61] sm:$0xff]
      %v402 = vld [vmem:[#allocation2 + $0x69] sm:$0xff]
      %v403 = vld [vmem:[#allocation2 + $0x79] sm:$0xff]
      %v404 = vld [vmem:[#allocation2 + $0x81] sm:$0xff]
      %v405 = vld [vmem:[#allocation2 + $0x91] sm:$0xff]
      %v406 = vld [vmem:[#allocation2 + $0x99] sm:$0xff]
      %v407 = vld [vmem:[#allocation2 + $0xa9] sm:$0xff]
      %v408 = vld [vmem:[#allocation2 + $0xb1] sm:$0xff]
      %v409 = vld [vmem:[#allocation2 + $0xc1] sm:$0xff]
      %v410 = vld [vmem:[#allocation2 + $0xc9] sm:$0xff]
      %v411 = vld [vmem:[#allocation2 + $0xd9] sm:$0xff]
      %v412 = vld [vmem:[#allocation2 + $0xe1] sm:$0xff]
      %v413 = vld [vmem:[#allocation2 + $0xf1] sm:$0xff]
      %v414 = vld [vmem:[#allocation2 + $0xf9] sm:$0xff]
      %v415 = vld [vmem:[#allocation2 + $0x109] sm:$0xff]
      %v416 = vld [vmem:[#allocation2 + $0x111] sm:$0xff]
      %v417 = vld [vmem:[#allocation2 + $0x121] sm:$0xff]
      %v418 = vld [vmem:[#allocation2 + $0x129] sm:$0xff]
      %v419 = vld [vmem:[#allocation2 + $0x139] sm:$0xff]
      %v420 = vld [vmem:[#allocation2 + $0x141] sm:$0xff]
      %v421 = vld [vmem:[#allocation2 + $0x151] sm:$0xff]
      %v422 = vld [vmem:[#allocation2 + $0x159] sm:$0xff]
      %v423 = vld [vmem:[#allocation2 + $0x169] sm:$0xff]
      %v424 = vld [vmem:[#allocation2 + $0x171] sm:$0xff]
      %425 = vst [vmem:[#allocation3 + $0x8] sm:$0xff] %v393
      %426 = vst [vmem:[#allocation3 + $0x50] sm:$0xff] %v394
      %427 = vst [vmem:[#allocation3 + $0x98] sm:$0xff] %v395
      %428 = vst [vmem:[#allocation3 + $0xe0] sm:$0xff] %v396
      %429 = vst [vmem:[#allocation3 + $0x128] sm:$0xff] %v397
      %430 = vst [vmem:[#allocation3 + $0x170] sm:$0xff] %v398
      %431 = vst [vmem:[#allocation3 + $0x1b8] sm:$0xff] %v399
      %432 = vst [vmem:[#allocation3 + $0x200] sm:$0xff] %v400
      %433 = vst [vmem:[#allocation3 + $0x248] sm:$0xff] %v401
      %434 = vst [vmem:[#allocation3 + $0x290] sm:$0xff] %v402
      %435 = vst [vmem:[#allocation3 + $0x2d8] sm:$0xff] %v403
      %436 = vst [vmem:[#allocation3 + $0x320] sm:$0xff] %v404
      %437 = vst [vmem:[#allocation3 + $0x368] sm:$0xff] %v405
      %438 = vst [vmem:[#allocation3 + $0x3b0] sm:$0xff] %v406
      %439 = vst [vmem:[#allocation3 + $0x3f8] sm:$0xff] %v407
      %440 = vst [vmem:[#allocation3 + $0x440] sm:$0xff] %v408
      %441 = vst [vmem:[#allocation3 + $0x488] sm:$0xff] %v409
      %442 = vst [vmem:[#allocation3 + $0x4d0] sm:$0xff] %v410
      %443 = vst [vmem:[#allocation3 + $0x518] sm:$0xff] %v411
      %444 = vst [vmem:[#allocation3 + $0x560] sm:$0xff] %v412
      %445 = vst [vmem:[#allocation3 + $0x5a8] sm:$0xff] %v413
      %446 = vst [vmem:[#allocation3 + $0x5f0] sm:$0xff] %v414
      %447 = vst [vmem:[#allocation3 + $0x638] sm:$0xff] %v415
      %448 = vst [vmem:[#allocation3 + $0x680] sm:$0xff] %v416
      %449 = vst [vmem:[#allocation3 + $0x6c8] sm:$0xff] %v417
      %450 = vst [vmem:[#allocation3 + $0x710] sm:$0xff] %v418
      %451 = vst [vmem:[#allocation3 + $0x758] sm:$0xff] %v419
      %452 = vst [vmem:[#allocation3 + $0x7a0] sm:$0xff] %v420
      %453 = vst [vmem:[#allocation3 + $0x7e8] sm:$0xff] %v421
      %454 = vst [vmem:[#allocation3 + $0x830] sm:$0xff] %v422
      %455 = vst [vmem:[#allocation3 + $0x878] sm:$0xff] %v423
      %456 = vst [vmem:[#allocation3 + $0x8c0] sm:$0xff] %v424
      %v457 = vld [vmem:[#allocation2 + $0x2] sm:$0xff]
      %v458 = vld [vmem:[#allocation2 + $0xa] sm:$0xff]
      %v459 = vld [vmem:[#allocation2 + $0x1a] sm:$0xff]
      %v460 = vld [vmem:[#allocation2 + $0x22] sm:$0xff]
      %v461 = vld [vmem:[#allocation2 + $0x32] sm:$0xff]
      %v462 = vld [vmem:[#allocation2 + $0x3a] sm:$0xff]
      %v463 = vld [vmem:[#allocation2 + $0x4a] sm:$0xff]
      %v464 = vld [vmem:[#allocation2 + $0x52] sm:$0xff]
      %v465 = vld [vmem:[#allocation2 + $0x62] sm:$0xff]
      %v466 = vld [vmem:[#allocation2 + $0x6a] sm:$0xff]
      %v467 = vld [vmem:[#allocation2 + $0x7a] sm:$0xff]
      %v468 = vld [vmem:[#allocation2 + $0x82] sm:$0xff]
      %v469 = vld [vmem:[#allocation2 + $0x92] sm:$0xff]
      %v470 = vld [vmem:[#allocation2 + $0x9a] sm:$0xff]
      %v471 = vld [vmem:[#allocation2 + $0xaa] sm:$0xff]
      %v472 = vld [vmem:[#allocation2 + $0xb2] sm:$0xff]
      %v473 = vld [vmem:[#allocation2 + $0xc2] sm:$0xff]
      %v474 = vld [vmem:[#allocation2 + $0xca] sm:$0xff]
      %v475 = vld [vmem:[#allocation2 + $0xda] sm:$0xff]
      %v476 = vld [vmem:[#allocation2 + $0xe2] sm:$0xff]
      %v477 = vld [vmem:[#allocation2 + $0xf2] sm:$0xff]
      %v478 = vld [vmem:[#allocation2 + $0xfa] sm:$0xff]
      %v479 = vld [vmem:[#allocation2 + $0x10a] sm:$0xff]
      %v480 = vld [vmem:[#allocation2 + $0x112] sm:$0xff]
      %v481 = vld [vmem:[#allocation2 + $0x122] sm:$0xff]
      %v482 = vld [vmem:[#allocation2 + $0x12a] sm:$0xff]
      %v483 = vld [vmem:[#allocation2 + $0x13a] sm:$0xff]
      %v484 = vld [vmem:[#allocation2 + $0x142] sm:$0xff]
      %v485 = vld [vmem:[#allocation2 + $0x152] sm:$0xff]
      %v486 = vld [vmem:[#allocation2 + $0x15a] sm:$0xff]
      %v487 = vld [vmem:[#allocation2 + $0x16a] sm:$0xff]
      %v488 = vld [vmem:[#allocation2 + $0x172] sm:$0xff]
      %489 = vst [vmem:[#allocation3 + $0x10] sm:$0xff] %v457
      %490 = vst [vmem:[#allocation3 + $0x58] sm:$0xff] %v458
      %491 = vst [vmem:[#allocation3 + $0xa0] sm:$0xff] %v459
      %492 = vst [vmem:[#allocation3 + $0xe8] sm:$0xff] %v460
      %493 = vst [vmem:[#allocation3 + $0x130] sm:$0xff] %v461
      %494 = vst [vmem:[#allocation3 + $0x178] sm:$0xff] %v462
      %495 = vst [vmem:[#allocation3 + $0x1c0] sm:$0xff] %v463
      %496 = vst [vmem:[#allocation3 + $0x208] sm:$0xff] %v464
      %497 = vst [vmem:[#allocation3 + $0x250] sm:$0xff] %v465
      %498 = vst [vmem:[#allocation3 + $0x298] sm:$0xff] %v466
      %499 = vst [vmem:[#allocation3 + $0x2e0] sm:$0xff] %v467
      %500 = vst [vmem:[#allocation3 + $0x328] sm:$0xff] %v468
      %501 = vst [vmem:[#allocation3 + $0x370] sm:$0xff] %v469
      %502 = vst [vmem:[#allocation3 + $0x3b8] sm:$0xff] %v470
      %503 = vst [vmem:[#allocation3 + $0x400] sm:$0xff] %v471
      %504 = vst [vmem:[#allocation3 + $0x448] sm:$0xff] %v472
      %505 = vst [vmem:[#allocation3 + $0x490] sm:$0xff] %v473
      %506 = vst [vmem:[#allocation3 + $0x4d8] sm:$0xff] %v474
      %507 = vst [vmem:[#allocation3 + $0x520] sm:$0xff] %v475
      %508 = vst [vmem:[#allocation3 + $0x568] sm:$0xff] %v476
      %509 = vst [vmem:[#allocation3 + $0x5b0] sm:$0xff] %v477
      %510 = vst [vmem:[#allocation3 + $0x5f8] sm:$0xff] %v478
      %511 = vst [vmem:[#allocation3 + $0x640] sm:$0xff] %v479
      %512 = vst [vmem:[#allocation3 + $0x688] sm:$0xff] %v480
      %513 = vst [vmem:[#allocation3 + $0x6d0] sm:$0xff] %v481
      %514 = vst [vmem:[#allocation3 + $0x718] sm:$0xff] %v482
      %515 = vst [vmem:[#allocation3 + $0x760] sm:$0xff] %v483
      %516 = vst [vmem:[#allocation3 + $0x7a8] sm:$0xff] %v484
      %517 = vst [vmem:[#allocation3 + $0x7f0] sm:$0xff] %v485
      %518 = vst [vmem:[#allocation3 + $0x838] sm:$0xff] %v486
      %519 = vst [vmem:[#allocation3 + $0x880] sm:$0xff] %v487
      %520 = vst [vmem:[#allocation3 + $0x8c8] sm:$0xff] %v488
      %v521 = vld [vmem:[%s232] sm:$0xff]
      %v522 = vld [vmem:[%s232 + $0x8] sm:$0xff]
      %v523 = vld [vmem:[%s232 + $0x18] sm:$0xff]
      %v524 = vld [vmem:[%s232 + $0x20] sm:$0xff]
      %v525 = vld [vmem:[%s232 + $0x30] sm:$0xff]
      %v526 = vld [vmem:[%s232 + $0x38] sm:$0xff]
      %v527 = vld [vmem:[%s232 + $0x48] sm:$0xff]
      %v528 = vld [vmem:[%s232 + $0x50] sm:$0xff]
      %v529 = vld [vmem:[%s232 + $0x60] sm:$0xff]
      %v530 = vld [vmem:[%s232 + $0x68] sm:$0xff]
      %v531 = vld [vmem:[%s232 + $0x78] sm:$0xff]
      %v532 = vld [vmem:[%s232 + $0x80] sm:$0xff]
      %v533 = vld [vmem:[%s232 + $0x90] sm:$0xff]
      %v534 = vld [vmem:[%s232 + $0x98] sm:$0xff]
      %v535 = vld [vmem:[%s232 + $0xa8] sm:$0xff]
      %v536 = vld [vmem:[%s232 + $0xb0] sm:$0xff]
      %v537 = vld [vmem:[%s232 + $0xc0] sm:$0xff]
      %v538 = vld [vmem:[%s232 + $0xc8] sm:$0xff]
      %v539 = vld [vmem:[%s232 + $0xd8] sm:$0xff]
      %v540 = vld [vmem:[%s232 + $0xe0] sm:$0xff]
      %v541 = vld [vmem:[%s232 + $0xf0] sm:$0xff]
      %v542 = vld [vmem:[%s232 + $0xf8] sm:$0xff]
      %v543 = vld [vmem:[%s232 + $0x108] sm:$0xff]
      %v544 = vld [vmem:[%s232 + $0x110] sm:$0xff]
      %v545 = vld [vmem:[%s232 + $0x120] sm:$0xff]
      %v546 = vld [vmem:[%s232 + $0x128] sm:$0xff]
      %v547 = vld [vmem:[%s232 + $0x138] sm:$0xff]
      %v548 = vld [vmem:[%s232 + $0x140] sm:$0xff]
      %v549 = vld [vmem:[%s232 + $0x150] sm:$0xff]
      %v550 = vld [vmem:[%s232 + $0x158] sm:$0xff]
      %v551 = vld [vmem:[%s232 + $0x168] sm:$0xff]
      %v552 = vld [vmem:[%s232 + $0x170] sm:$0xff]
      %553 = vst [vmem:[#allocation3 + $0x18] sm:$0xff] %v521
      %554 = vst [vmem:[#allocation3 + $0x60] sm:$0xff] %v522
      %555 = vst [vmem:[#allocation3 + $0xa8] sm:$0xff] %v523
      %556 = vst [vmem:[#allocation3 + $0xf0] sm:$0xff] %v524
      %557 = vst [vmem:[#allocation3 + $0x138] sm:$0xff] %v525
      %558 = vst [vmem:[#allocation3 + $0x180] sm:$0xff] %v526
      %559 = vst [vmem:[#allocation3 + $0x1c8] sm:$0xff] %v527
      %560 = vst [vmem:[#allocation3 + $0x210] sm:$0xff] %v528
      %561 = vst [vmem:[#allocation3 + $0x258] sm:$0xff] %v529
      %562 = vst [vmem:[#allocation3 + $0x2a0] sm:$0xff] %v530
      %563 = vst [vmem:[#allocation3 + $0x2e8] sm:$0xff] %v531
      %564 = vst [vmem:[#allocation3 + $0x330] sm:$0xff] %v532
      %565 = vst [vmem:[#allocation3 + $0x378] sm:$0xff] %v533
      %566 = vst [vmem:[#allocation3 + $0x3c0] sm:$0xff] %v534
      %567 = vst [vmem:[#allocation3 + $0x408] sm:$0xff] %v535
      %568 = vst [vmem:[#allocation3 + $0x450] sm:$0xff] %v536
      %569 = vst [vmem:[#allocation3 + $0x498] sm:$0xff] %v537
      %570 = vst [vmem:[#allocation3 + $0x4e0] sm:$0xff] %v538
      %571 = vst [vmem:[#allocation3 + $0x528] sm:$0xff] %v539
      %572 = vst [vmem:[#allocation3 + $0x570] sm:$0xff] %v540
      %573 = vst [vmem:[#allocation3 + $0x5b8] sm:$0xff] %v541
      %574 = vst [vmem:[#allocation3 + $0x600] sm:$0xff] %v542
      %575 = vst [vmem:[#allocation3 + $0x648] sm:$0xff] %v543
      %576 = vst [vmem:[#allocation3 + $0x690] sm:$0xff] %v544
      %577 = vst [vmem:[#allocation3 + $0x6d8] sm:$0xff] %v545
      %578 = vst [vmem:[#allocation3 + $0x720] sm:$0xff] %v546
      %579 = vst [vmem:[#allocation3 + $0x768] sm:$0xff] %v547
      %580 = vst [vmem:[#allocation3 + $0x7b0] sm:$0xff] %v548
      %581 = vst [vmem:[#allocation3 + $0x7f8] sm:$0xff] %v549
      %582 = vst [vmem:[#allocation3 + $0x840] sm:$0xff] %v550
      %583 = vst [vmem:[#allocation3 + $0x888] sm:$0xff] %v551
      %584 = vst [vmem:[#allocation3 + $0x8d0] sm:$0xff] %v552
      %v585 = vld [vmem:[%s232 + $0x1] sm:$0xff]
      %v586 = vld [vmem:[%s232 + $0x9] sm:$0xff]
      %v587 = vld [vmem:[%s232 + $0x19] sm:$0xff]
      %v588 = vld [vmem:[%s232 + $0x21] sm:$0xff]
      %v589 = vld [vmem:[%s232 + $0x31] sm:$0xff]
      %v590 = vld [vmem:[%s232 + $0x39] sm:$0xff]
      %v591 = vld [vmem:[%s232 + $0x49] sm:$0xff]
      %v592 = vld [vmem:[%s232 + $0x51] sm:$0xff]
      %v593 = vld [vmem:[%s232 + $0x61] sm:$0xff]
      %v594 = vld [vmem:[%s232 + $0x69] sm:$0xff]
      %v595 = vld [vmem:[%s232 + $0x79] sm:$0xff]
      %v596 = vld [vmem:[%s232 + $0x81] sm:$0xff]
      %v597 = vld [vmem:[%s232 + $0x91] sm:$0xff]
      %v598 = vld [vmem:[%s232 + $0x99] sm:$0xff]
      %v599 = vld [vmem:[%s232 + $0xa9] sm:$0xff]
      %v600 = vld [vmem:[%s232 + $0xb1] sm:$0xff]
      %v601 = vld [vmem:[%s232 + $0xc1] sm:$0xff]
      %v602 = vld [vmem:[%s232 + $0xc9] sm:$0xff]
      %v603 = vld [vmem:[%s232 + $0xd9] sm:$0xff]
      %v604 = vld [vmem:[%s232 + $0xe1] sm:$0xff]
      %v605 = vld [vmem:[%s232 + $0xf1] sm:$0xff]
      %v606 = vld [vmem:[%s232 + $0xf9] sm:$0xff]
      %v607 = vld [vmem:[%s232 + $0x109] sm:$0xff]
      %v608 = vld [vmem:[%s232 + $0x111] sm:$0xff]
      %v609 = vld [vmem:[%s232 + $0x121] sm:$0xff]
      %v610 = vld [vmem:[%s232 + $0x129] sm:$0xff]
      %v611 = vld [vmem:[%s232 + $0x139] sm:$0xff]
      %v612 = vld [vmem:[%s232 + $0x141] sm:$0xff]
      %v613 = vld [vmem:[%s232 + $0x151] sm:$0xff]
      %v614 = vld [vmem:[%s232 + $0x159] sm:$0xff]
      %v615 = vld [vmem:[%s232 + $0x169] sm:$0xff]
      %v616 = vld [vmem:[%s232 + $0x171] sm:$0xff]
      %617 = vst [vmem:[#allocation3 + $0x20] sm:$0xff] %v585
      %618 = vst [vmem:[#allocation3 + $0x68] sm:$0xff] %v586
      %619 = vst [vmem:[#allocation3 + $0xb0] sm:$0xff] %v587
      %620 = vst [vmem:[#allocation3 + $0xf8] sm:$0xff] %v588
      %621 = vst [vmem:[#allocation3 + $0x140] sm:$0xff] %v589
      %622 = vst [vmem:[#allocation3 + $0x188] sm:$0xff] %v590
      %623 = vst [vmem:[#allocation3 + $0x1d0] sm:$0xff] %v591
      %624 = vst [vmem:[#allocation3 + $0x218] sm:$0xff] %v592
      %625 = vst [vmem:[#allocation3 + $0x260] sm:$0xff] %v593
      %626 = vst [vmem:[#allocation3 + $0x2a8] sm:$0xff] %v594
      %627 = vst [vmem:[#allocation3 + $0x2f0] sm:$0xff] %v595
      %628 = vst [vmem:[#allocation3 + $0x338] sm:$0xff] %v596
      %629 = vst [vmem:[#allocation3 + $0x380] sm:$0xff] %v597
      %630 = vst [vmem:[#allocation3 + $0x3c8] sm:$0xff] %v598
      %631 = vst [vmem:[#allocation3 + $0x410] sm:$0xff] %v599
      %632 = vst [vmem:[#allocation3 + $0x458] sm:$0xff] %v600
      %633 = vst [vmem:[#allocation3 + $0x4a0] sm:$0xff] %v601
      %634 = vst [vmem:[#allocation3 + $0x4e8] sm:$0xff] %v602
      %635 = vst [vmem:[#allocation3 + $0x530] sm:$0xff] %v603
      %636 = vst [vmem:[#allocation3 + $0x578] sm:$0xff] %v604
      %637 = vst [vmem:[#allocation3 + $0x5c0] sm:$0xff] %v605
      %638 = vst [vmem:[#allocation3 + $0x608] sm:$0xff] %v606
      %639 = vst [vmem:[#allocation3 + $0x650] sm:$0xff] %v607
      %640 = vst [vmem:[#allocation3 + $0x698] sm:$0xff] %v608
      %641 = vst [vmem:[#allocation3 + $0x6e0] sm:$0xff] %v609
      %642 = vst [vmem:[#allocation3 + $0x728] sm:$0xff] %v610
      %643 = vst [vmem:[#allocation3 + $0x770] sm:$0xff] %v611
      %644 = vst [vmem:[#allocation3 + $0x7b8] sm:$0xff] %v612
      %645 = vst [vmem:[#allocation3 + $0x800] sm:$0xff] %v613
      %646 = vst [vmem:[#allocation3 + $0x848] sm:$0xff] %v614
      %647 = vst [vmem:[#allocation3 + $0x890] sm:$0xff] %v615
      %648 = vst [vmem:[#allocation3 + $0x8d8] sm:$0xff] %v616
      %v649 = vld [vmem:[%s232 + $0x2] sm:$0xff]
      %v650 = vld [vmem:[%s232 + $0xa] sm:$0xff]
      %v651 = vld [vmem:[%s232 + $0x1a] sm:$0xff]
      %v652 = vld [vmem:[%s232 + $0x22] sm:$0xff]
      %v653 = vld [vmem:[%s232 + $0x32] sm:$0xff]
      %v654 = vld [vmem:[%s232 + $0x3a] sm:$0xff]
      %v655 = vld [vmem:[%s232 + $0x4a] sm:$0xff]
      %v656 = vld [vmem:[%s232 + $0x52] sm:$0xff]
      %v657 = vld [vmem:[%s232 + $0x62] sm:$0xff]
      %v658 = vld [vmem:[%s232 + $0x6a] sm:$0xff]
      %v659 = vld [vmem:[%s232 + $0x7a] sm:$0xff]
      %v660 = vld [vmem:[%s232 + $0x82] sm:$0xff]
      %v661 = vld [vmem:[%s232 + $0x92] sm:$0xff]
      %v662 = vld [vmem:[%s232 + $0x9a] sm:$0xff]
      %v663 = vld [vmem:[%s232 + $0xaa] sm:$0xff]
      %v664 = vld [vmem:[%s232 + $0xb2] sm:$0xff]
      %v665 = vld [vmem:[%s232 + $0xc2] sm:$0xff]
      %v666 = vld [vmem:[%s232 + $0xca] sm:$0xff]
      %v667 = vld [vmem:[%s232 + $0xda] sm:$0xff]
      %v668 = vld [vmem:[%s232 + $0xe2] sm:$0xff]
      %v669 = vld [vmem:[%s232 + $0xf2] sm:$0xff]
      %v670 = vld [vmem:[%s232 + $0xfa] sm:$0xff]
      %v671 = vld [vmem:[%s232 + $0x10a] sm:$0xff]
      %v672 = vld [vmem:[%s232 + $0x112] sm:$0xff]
      %v673 = vld [vmem:[%s232 + $0x122] sm:$0xff]
      %v674 = vld [vmem:[%s232 + $0x12a] sm:$0xff]
      %v675 = vld [vmem:[%s232 + $0x13a] sm:$0xff]
      %v676 = vld [vmem:[%s232 + $0x142] sm:$0xff]
      %v677 = vld [vmem:[%s232 + $0x152] sm:$0xff]
      %v678 = vld [vmem:[%s232 + $0x15a] sm:$0xff]
      %v679 = vld [vmem:[%s232 + $0x16a] sm:$0xff]
      %v680 = vld [vmem:[%s232 + $0x172] sm:$0xff]
      %681 = vst [vmem:[#allocation3 + $0x28] sm:$0xff] %v649
      %682 = vst [vmem:[#allocation3 + $0x70] sm:$0xff] %v650
      %683 = vst [vmem:[#allocation3 + $0xb8] sm:$0xff] %v651
      %684 = vst [vmem:[#allocation3 + $0x100] sm:$0xff] %v652
      %685 = vst [vmem:[#allocation3 + $0x148] sm:$0xff] %v653
      %686 = vst [vmem:[#allocation3 + $0x190] sm:$0xff] %v654
      %687 = vst [vmem:[#allocation3 + $0x1d8] sm:$0xff] %v655
      %688 = vst [vmem:[#allocation3 + $0x220] sm:$0xff] %v656
      %689 = vst [vmem:[#allocation3 + $0x268] sm:$0xff] %v657
      %690 = vst [vmem:[#allocation3 + $0x2b0] sm:$0xff] %v658
      %691 = vst [vmem:[#allocation3 + $0x2f8] sm:$0xff] %v659
      %692 = vst [vmem:[#allocation3 + $0x340] sm:$0xff] %v660
      %693 = vst [vmem:[#allocation3 + $0x388] sm:$0xff] %v661
      %694 = vst [vmem:[#allocation3 + $0x3d0] sm:$0xff] %v662
      %695 = vst [vmem:[#allocation3 + $0x418] sm:$0xff] %v663
      %696 = vst [vmem:[#allocation3 + $0x460] sm:$0xff] %v664
      %697 = vst [vmem:[#allocation3 + $0x4a8] sm:$0xff] %v665
      %698 = vst [vmem:[#allocation3 + $0x4f0] sm:$0xff] %v666
      %699 = vst [vmem:[#allocation3 + $0x538] sm:$0xff] %v667
      %700 = vst [vmem:[#allocation3 + $0x580] sm:$0xff] %v668
      %701 = vst [vmem:[#allocation3 + $0x5c8] sm:$0xff] %v669
      %702 = vst [vmem:[#allocation3 + $0x610] sm:$0xff] %v670
      %703 = vst [vmem:[#allocation3 + $0x658] sm:$0xff] %v671
      %704 = vst [vmem:[#allocation3 + $0x6a0] sm:$0xff] %v672
      %705 = vst [vmem:[#allocation3 + $0x6e8] sm:$0xff] %v673
      %706 = vst [vmem:[#allocation3 + $0x730] sm:$0xff] %v674
      %707 = vst [vmem:[#allocation3 + $0x778] sm:$0xff] %v675
      %708 = vst [vmem:[#allocation3 + $0x7c0] sm:$0xff] %v676
      %709 = vst [vmem:[#allocation3 + $0x808] sm:$0xff] %v677
      %710 = vst [vmem:[#allocation3 + $0x850] sm:$0xff] %v678
      %711 = vst [vmem:[#allocation3 + $0x898] sm:$0xff] %v679
      %712 = vst [vmem:[#allocation3 + $0x8e0] sm:$0xff] %v680
      %s713 = scalar_lea.vmem [#allocation2], 48
      %v714 = vld [vmem:[%s713] sm:$0xff]
      %v715 = vld [vmem:[%s713 + $0x8] sm:$0xff]
      %v716 = vld [vmem:[%s713 + $0x18] sm:$0xff]
      %v717 = vld [vmem:[%s713 + $0x20] sm:$0xff]
      %v718 = vld [vmem:[%s713 + $0x30] sm:$0xff]
      %v719 = vld [vmem:[%s713 + $0x38] sm:$0xff]
      %v720 = vld [vmem:[%s713 + $0x48] sm:$0xff]
      %v721 = vld [vmem:[%s713 + $0x50] sm:$0xff]
      %v722 = vld [vmem:[%s713 + $0x60] sm:$0xff]
      %v723 = vld [vmem:[%s713 + $0x68] sm:$0xff]
      %v724 = vld [vmem:[%s713 + $0x78] sm:$0xff]
      %v725 = vld [vmem:[%s713 + $0x80] sm:$0xff]
      %v726 = vld [vmem:[%s713 + $0x90] sm:$0xff]
      %v727 = vld [vmem:[%s713 + $0x98] sm:$0xff]
      %v728 = vld [vmem:[%s713 + $0xa8] sm:$0xff]
      %v729 = vld [vmem:[%s713 + $0xb0] sm:$0xff]
      %v730 = vld [vmem:[%s713 + $0xc0] sm:$0xff]
      %v731 = vld [vmem:[%s713 + $0xc8] sm:$0xff]
      %v732 = vld [vmem:[%s713 + $0xd8] sm:$0xff]
      %v733 = vld [vmem:[%s713 + $0xe0] sm:$0xff]
      %v734 = vld [vmem:[%s713 + $0xf0] sm:$0xff]
      %v735 = vld [vmem:[%s713 + $0xf8] sm:$0xff]
      %v736 = vld [vmem:[%s713 + $0x108] sm:$0xff]
      %v737 = vld [vmem:[%s713 + $0x110] sm:$0xff]
      %v738 = vld [vmem:[%s713 + $0x120] sm:$0xff]
      %v739 = vld [vmem:[%s713 + $0x128] sm:$0xff]
      %v740 = vld [vmem:[%s713 + $0x138] sm:$0xff]
      %v741 = vld [vmem:[%s713 + $0x140] sm:$0xff]
      %v742 = vld [vmem:[%s713 + $0x150] sm:$0xff]
      %v743 = vld [vmem:[%s713 + $0x158] sm:$0xff]
      %v744 = vld [vmem:[%s713 + $0x168] sm:$0xff]
      %v745 = vld [vmem:[%s713 + $0x170] sm:$0xff]
      %746 = vst [vmem:[#allocation3 + $0x30] sm:$0xff] %v714
      %747 = vst [vmem:[#allocation3 + $0x78] sm:$0xff] %v715
      %748 = vst [vmem:[#allocation3 + $0xc0] sm:$0xff] %v716
      %749 = vst [vmem:[#allocation3 + $0x108] sm:$0xff] %v717
      %750 = vst [vmem:[#allocation3 + $0x150] sm:$0xff] %v718
      %751 = vst [vmem:[#allocation3 + $0x198] sm:$0xff] %v719
      %752 = vst [vmem:[#allocation3 + $0x1e0] sm:$0xff] %v720
      %753 = vst [vmem:[#allocation3 + $0x228] sm:$0xff] %v721
      %754 = vst [vmem:[#allocation3 + $0x270] sm:$0xff] %v722
      %755 = vst [vmem:[#allocation3 + $0x2b8] sm:$0xff] %v723
      %756 = vst [vmem:[#allocation3 + $0x300] sm:$0xff] %v724
      %757 = vst [vmem:[#allocation3 + $0x348] sm:$0xff] %v725
      %758 = vst [vmem:[#allocation3 + $0x390] sm:$0xff] %v726
      %759 = vst [vmem:[#allocation3 + $0x3d8] sm:$0xff] %v727
      %760 = vst [vmem:[#allocation3 + $0x420] sm:$0xff] %v728
      %761 = vst [vmem:[#allocation3 + $0x468] sm:$0xff] %v729
      %762 = vst [vmem:[#allocation3 + $0x4b0] sm:$0xff] %v730
      %763 = vst [vmem:[#allocation3 + $0x4f8] sm:$0xff] %v731
      %764 = vst [vmem:[#allocation3 + $0x540] sm:$0xff] %v732
      %765 = vst [vmem:[#allocation3 + $0x588] sm:$0xff] %v733
      %766 = vst [vmem:[#allocation3 + $0x5d0] sm:$0xff] %v734
      %767 = vst [vmem:[#allocation3 + $0x618] sm:$0xff] %v735
      %768 = vst [vmem:[#allocation3 + $0x660] sm:$0xff] %v736
      %769 = vst [vmem:[#allocation3 + $0x6a8] sm:$0xff] %v737
      %770 = vst [vmem:[#allocation3 + $0x6f0] sm:$0xff] %v738
      %771 = vst [vmem:[#allocation3 + $0x738] sm:$0xff] %v739
      %772 = vst [vmem:[#allocation3 + $0x780] sm:$0xff] %v740
      %773 = vst [vmem:[#allocation3 + $0x7c8] sm:$0xff] %v741
      %774 = vst [vmem:[#allocation3 + $0x810] sm:$0xff] %v742
      %775 = vst [vmem:[#allocation3 + $0x858] sm:$0xff] %v743
      %776 = vst [vmem:[#allocation3 + $0x8a0] sm:$0xff] %v744
      %777 = vst [vmem:[#allocation3 + $0x8e8] sm:$0xff] %v745
      %v778 = vld [vmem:[%s713 + $0x1] sm:$0xff]
      %v779 = vld [vmem:[%s713 + $0x9] sm:$0xff]
      %v780 = vld [vmem:[%s713 + $0x19] sm:$0xff]
      %v781 = vld [vmem:[%s713 + $0x21] sm:$0xff]
      %v782 = vld [vmem:[%s713 + $0x31] sm:$0xff]
      %v783 = vld [vmem:[%s713 + $0x39] sm:$0xff]
      %v784 = vld [vmem:[%s713 + $0x49] sm:$0xff]
      %v785 = vld [vmem:[%s713 + $0x51] sm:$0xff]
      %v786 = vld [vmem:[%s713 + $0x61] sm:$0xff]
      %v787 = vld [vmem:[%s713 + $0x69] sm:$0xff]
      %v788 = vld [vmem:[%s713 + $0x79] sm:$0xff]
      %v789 = vld [vmem:[%s713 + $0x81] sm:$0xff]
      %v790 = vld [vmem:[%s713 + $0x91] sm:$0xff]
      %v791 = vld [vmem:[%s713 + $0x99] sm:$0xff]
      %v792 = vld [vmem:[%s713 + $0xa9] sm:$0xff]
      %v793 = vld [vmem:[%s713 + $0xb1] sm:$0xff]
      %v794 = vld [vmem:[%s713 + $0xc1] sm:$0xff]
      %v795 = vld [vmem:[%s713 + $0xc9] sm:$0xff]
      %v796 = vld [vmem:[%s713 + $0xd9] sm:$0xff]
      %v797 = vld [vmem:[%s713 + $0xe1] sm:$0xff]
      %v798 = vld [vmem:[%s713 + $0xf1] sm:$0xff]
      %v799 = vld [vmem:[%s713 + $0xf9] sm:$0xff]
      %v800 = vld [vmem:[%s713 + $0x109] sm:$0xff]
      %v801 = vld [vmem:[%s713 + $0x111] sm:$0xff]
      %v802 = vld [vmem:[%s713 + $0x121] sm:$0xff]
      %v803 = vld [vmem:[%s713 + $0x129] sm:$0xff]
      %v804 = vld [vmem:[%s713 + $0x139] sm:$0xff]
      %v805 = vld [vmem:[%s713 + $0x141] sm:$0xff]
      %v806 = vld [vmem:[%s713 + $0x151] sm:$0xff]
      %v807 = vld [vmem:[%s713 + $0x159] sm:$0xff]
      %v808 = vld [vmem:[%s713 + $0x169] sm:$0xff]
      %v809 = vld [vmem:[%s713 + $0x171] sm:$0xff]
      %810 = vst [vmem:[#allocation3 + $0x38] sm:$0xff] %v778
      %811 = vst [vmem:[#allocation3 + $0x80] sm:$0xff] %v779
      %812 = vst [vmem:[#allocation3 + $0xc8] sm:$0xff] %v780
      %813 = vst [vmem:[#allocation3 + $0x110] sm:$0xff] %v781
      %814 = vst [vmem:[#allocation3 + $0x158] sm:$0xff] %v782
      %815 = vst [vmem:[#allocation3 + $0x1a0] sm:$0xff] %v783
      %816 = vst [vmem:[#allocation3 + $0x1e8] sm:$0xff] %v784
      %817 = vst [vmem:[#allocation3 + $0x230] sm:$0xff] %v785
      %818 = vst [vmem:[#allocation3 + $0x278] sm:$0xff] %v786
      %819 = vst [vmem:[#allocation3 + $0x2c0] sm:$0xff] %v787
      %820 = vst [vmem:[#allocation3 + $0x308] sm:$0xff] %v788
      %821 = vst [vmem:[#allocation3 + $0x350] sm:$0xff] %v789
      %822 = vst [vmem:[#allocation3 + $0x398] sm:$0xff] %v790
      %823 = vst [vmem:[#allocation3 + $0x3e0] sm:$0xff] %v791
      %824 = vst [vmem:[#allocation3 + $0x428] sm:$0xff] %v792
      %825 = vst [vmem:[#allocation3 + $0x470] sm:$0xff] %v793
      %826 = vst [vmem:[#allocation3 + $0x4b8] sm:$0xff] %v794
      %827 = vst [vmem:[#allocation3 + $0x500] sm:$0xff] %v795
      %828 = vst [vmem:[#allocation3 + $0x548] sm:$0xff] %v796
      %829 = vst [vmem:[#allocation3 + $0x590] sm:$0xff] %v797
      %830 = vst [vmem:[#allocation3 + $0x5d8] sm:$0xff] %v798
      %831 = vst [vmem:[#allocation3 + $0x620] sm:$0xff] %v799
      %832 = vst [vmem:[#allocation3 + $0x668] sm:$0xff] %v800
      %833 = vst [vmem:[#allocation3 + $0x6b0] sm:$0xff] %v801
      %834 = vst [vmem:[#allocation3 + $0x6f8] sm:$0xff] %v802
      %835 = vst [vmem:[#allocation3 + $0x740] sm:$0xff] %v803
      %836 = vst [vmem:[#allocation3 + $0x788] sm:$0xff] %v804
      %837 = vst [vmem:[#allocation3 + $0x7d0] sm:$0xff] %v805
      %838 = vst [vmem:[#allocation3 + $0x818] sm:$0xff] %v806
      %839 = vst [vmem:[#allocation3 + $0x860] sm:$0xff] %v807
      %840 = vst [vmem:[#allocation3 + $0x8a8] sm:$0xff] %v808
      %841 = vst [vmem:[#allocation3 + $0x8f0] sm:$0xff] %v809
      %v842 = vld [vmem:[%s713 + $0x2] sm:$0xff]
      %v843 = vld [vmem:[%s713 + $0xa] sm:$0xff]
      %v844 = vld [vmem:[%s713 + $0x1a] sm:$0xff]
      %v845 = vld [vmem:[%s713 + $0x22] sm:$0xff]
      %v846 = vld [vmem:[%s713 + $0x32] sm:$0xff]
      %v847 = vld [vmem:[%s713 + $0x3a] sm:$0xff]
      %v848 = vld [vmem:[%s713 + $0x4a] sm:$0xff]
      %v849 = vld [vmem:[%s713 + $0x52] sm:$0xff]
      %v850 = vld [vmem:[%s713 + $0x62] sm:$0xff]
      %v851 = vld [vmem:[%s713 + $0x6a] sm:$0xff]
      %v852 = vld [vmem:[%s713 + $0x7a] sm:$0xff]
      %v853 = vld [vmem:[%s713 + $0x82] sm:$0xff]
      %v854 = vld [vmem:[%s713 + $0x92] sm:$0xff]
      %v855 = vld [vmem:[%s713 + $0x9a] sm:$0xff]
      %v856 = vld [vmem:[%s713 + $0xaa] sm:$0xff]
      %v857 = vld [vmem:[%s713 + $0xb2] sm:$0xff]
      %v858 = vld [vmem:[%s713 + $0xc2] sm:$0xff]
      %v859 = vld [vmem:[%s713 + $0xca] sm:$0xff]
      %v860 = vld [vmem:[%s713 + $0xda] sm:$0xff]
      %v861 = vld [vmem:[%s713 + $0xe2] sm:$0xff]
      %v862 = vld [vmem:[%s713 + $0xf2] sm:$0xff]
      %v863 = vld [vmem:[%s713 + $0xfa] sm:$0xff]
      %v864 = vld [vmem:[%s713 + $0x10a] sm:$0xff]
      %v865 = vld [vmem:[%s713 + $0x112] sm:$0xff]
      %v866 = vld [vmem:[%s713 + $0x122] sm:$0xff]
      %v867 = vld [vmem:[%s713 + $0x12a] sm:$0xff]
      %v868 = vld [vmem:[%s713 + $0x13a] sm:$0xff]
      %v869 = vld [vmem:[%s713 + $0x142] sm:$0xff]
      %v870 = vld [vmem:[%s713 + $0x152] sm:$0xff]
      %v871 = vld [vmem:[%s713 + $0x15a] sm:$0xff]
      %v872 = vld [vmem:[%s713 + $0x16a] sm:$0xff]
      %v873 = vld [vmem:[%s713 + $0x172] sm:$0xff]
      %874 = vst [vmem:[#allocation3 + $0x40] sm:$0xff] %v842
      %875 = vst [vmem:[#allocation3 + $0x88] sm:$0xff] %v843
      %876 = vst [vmem:[#allocation3 + $0xd0] sm:$0xff] %v844
      %877 = vst [vmem:[#allocation3 + $0x118] sm:$0xff] %v845
      %878 = vst [vmem:[#allocation3 + $0x160] sm:$0xff] %v846
      %879 = vst [vmem:[#allocation3 + $0x1a8] sm:$0xff] %v847
      %880 = vst [vmem:[#allocation3 + $0x1f0] sm:$0xff] %v848
      %881 = vst [vmem:[#allocation3 + $0x238] sm:$0xff] %v849
      %882 = vst [vmem:[#allocation3 + $0x280] sm:$0xff] %v850
      %883 = vst [vmem:[#allocation3 + $0x2c8] sm:$0xff] %v851
      %884 = vst [vmem:[#allocation3 + $0x310] sm:$0xff] %v852
      %885 = vst [vmem:[#allocation3 + $0x358] sm:$0xff] %v853
      %886 = vst [vmem:[#allocation3 + $0x3a0] sm:$0xff] %v854
      %887 = vst [vmem:[#allocation3 + $0x3e8] sm:$0xff] %v855
      %888 = vst [vmem:[#allocation3 + $0x430] sm:$0xff] %v856
      %889 = vst [vmem:[#allocation3 + $0x478] sm:$0xff] %v857
      %890 = vst [vmem:[#allocation3 + $0x4c0] sm:$0xff] %v858
      %891 = vst [vmem:[#allocation3 + $0x508] sm:$0xff] %v859
      %892 = vst [vmem:[#allocation3 + $0x550] sm:$0xff] %v860
      %893 = vst [vmem:[#allocation3 + $0x598] sm:$0xff] %v861
      %894 = vst [vmem:[#allocation3 + $0x5e0] sm:$0xff] %v862
      %895 = vst [vmem:[#allocation3 + $0x628] sm:$0xff] %v863
      %896 = vst [vmem:[#allocation3 + $0x670] sm:$0xff] %v864
      %897 = vst [vmem:[#allocation3 + $0x6b8] sm:$0xff] %v865
      %898 = vst [vmem:[#allocation3 + $0x700] sm:$0xff] %v866
      %899 = vst [vmem:[#allocation3 + $0x748] sm:$0xff] %v867
      %900 = vst [vmem:[#allocation3 + $0x790] sm:$0xff] %v868
      %901 = vst [vmem:[#allocation3 + $0x7d8] sm:$0xff] %v869
      %902 = vst [vmem:[#allocation3 + $0x820] sm:$0xff] %v870
      %903 = vst [vmem:[#allocation3 + $0x868] sm:$0xff] %v871
      %904 = vst [vmem:[#allocation3 + $0x8b0] sm:$0xff] %v872
      %905 = vst [vmem:[#allocation3 + $0x8f8] sm:$0xff] %v873
      %v906 = vld [vmem:[#allocation3] sm:$0xff]
      %v907 = vld [vmem:[#allocation3 + $0x8] sm:$0xff]
      %v908 = vld [vmem:[#allocation3 + $0x10] sm:$0xff]
      %v909 = vld [vmem:[#allocation3 + $0x18] sm:$0xff]
      %v910 = vld [vmem:[#allocation3 + $0x20] sm:$0xff]
      %v911 = vld [vmem:[#allocation3 + $0x28] sm:$0xff]
      %v912 = vld [vmem:[#allocation3 + $0x30] sm:$0xff]
      %v913 = vld [vmem:[#allocation3 + $0x38] sm:$0xff]
      %v914 = vld [vmem:[#allocation3 + $0x40] sm:$0xff]
      %v915 = vld [vmem:[#allocation3 + $0x48] sm:$0xff]
      %v916 = vld [vmem:[#allocation3 + $0x50] sm:$0xff]
      %v917 = vld [vmem:[#allocation3 + $0x58] sm:$0xff]
      %v918 = vld [vmem:[#allocation3 + $0x60] sm:$0xff]
      %v919 = vld [vmem:[#allocation3 + $0x68] sm:$0xff]
      %v920 = vld [vmem:[#allocation3 + $0x70] sm:$0xff]
      %v921 = vld [vmem:[#allocation3 + $0x78] sm:$0xff]
      %v922 = vld [vmem:[#allocation3 + $0x80] sm:$0xff]
      %v923 = vld [vmem:[#allocation3 + $0x88] sm:$0xff]
      %v924 = vld [vmem:[#allocation3 + $0x90] sm:$0xff]
      %v925 = vld [vmem:[#allocation3 + $0x98] sm:$0xff]
      %v926 = vld [vmem:[#allocation3 + $0xa0] sm:$0xff]
      %v927 = vld [vmem:[#allocation3 + $0xa8] sm:$0xff]
      %v928 = vld [vmem:[#allocation3 + $0xb0] sm:$0xff]
      %v929 = vld [vmem:[#allocation3 + $0xb8] sm:$0xff]
      %v930 = vld [vmem:[#allocation3 + $0xc0] sm:$0xff]
      %v931 = vld [vmem:[#allocation3 + $0xc8] sm:$0xff]
      %v932 = vld [vmem:[#allocation3 + $0xd0] sm:$0xff]
      %v933 = vld [vmem:[#allocation3 + $0xd8] sm:$0xff]
      %v934 = vld [vmem:[#allocation3 + $0xe0] sm:$0xff]
      %v935 = vld [vmem:[#allocation3 + $0xe8] sm:$0xff]
      %v936 = vld [vmem:[#allocation3 + $0xf0] sm:$0xff]
      %v937 = vld [vmem:[#allocation3 + $0xf8] sm:$0xff]
      %v938 = vld [vmem:[#allocation3 + $0x100] sm:$0xff]
      %v939 = vld [vmem:[#allocation3 + $0x108] sm:$0xff]
      %v940 = vld [vmem:[#allocation3 + $0x110] sm:$0xff]
      %v941 = vld [vmem:[#allocation3 + $0x118] sm:$0xff]
      %v942 = vld [vmem:[#allocation3 + $0x120] sm:$0xff]
      %v943 = vld [vmem:[#allocation3 + $0x128] sm:$0xff]
      %v944 = vld [vmem:[#allocation3 + $0x130] sm:$0xff]
      %v945 = vld [vmem:[#allocation3 + $0x138] sm:$0xff]
      %v946 = vld [vmem:[#allocation3 + $0x140] sm:$0xff]
      %v947 = vld [vmem:[#allocation3 + $0x148] sm:$0xff]
      %v948 = vld [vmem:[#allocation3 + $0x150] sm:$0xff]
      %v949 = vld [vmem:[#allocation3 + $0x158] sm:$0xff]
      %v950 = vld [vmem:[#allocation3 + $0x160] sm:$0xff]
      %v951 = vld [vmem:[#allocation3 + $0x168] sm:$0xff]
      %v952 = vld [vmem:[#allocation3 + $0x170] sm:$0xff]
      %v953 = vld [vmem:[#allocation3 + $0x178] sm:$0xff]
      %v954 = vld [vmem:[#allocation3 + $0x180] sm:$0xff]
      %v955 = vld [vmem:[#allocation3 + $0x188] sm:$0xff]
      %v956 = vld [vmem:[#allocation3 + $0x190] sm:$0xff]
      %v957 = vld [vmem:[#allocation3 + $0x198] sm:$0xff]
      %v958 = vld [vmem:[#allocation3 + $0x1a0] sm:$0xff]
      %v959 = vld [vmem:[#allocation3 + $0x1a8] sm:$0xff]
      %v960 = vld [vmem:[#allocation3 + $0x1b0] sm:$0xff]
      %v961 = vld [vmem:[#allocation3 + $0x1b8] sm:$0xff]
      %v962 = vld [vmem:[#allocation3 + $0x1c0] sm:$0xff]
      %v963 = vld [vmem:[#allocation3 + $0x1c8] sm:$0xff]
      %v964 = vld [vmem:[#allocation3 + $0x1d0] sm:$0xff]
      %v965 = vld [vmem:[#allocation3 + $0x1d8] sm:$0xff]
      %v966 = vld [vmem:[#allocation3 + $0x1e0] sm:$0xff]
      %v967 = vld [vmem:[#allocation3 + $0x1e8] sm:$0xff]
      %v968 = vld [vmem:[#allocation3 + $0x1f0] sm:$0xff]
      %v969 = vld [vmem:[#allocation3 + $0x1f8] sm:$0xff]
      %v970 = vld [vmem:[#allocation3 + $0x200] sm:$0xff]
      %v971 = vld [vmem:[#allocation3 + $0x208] sm:$0xff]
      %v972 = vld [vmem:[#allocation3 + $0x210] sm:$0xff]
      %v973 = vld [vmem:[#allocation3 + $0x218] sm:$0xff]
      %v974 = vld [vmem:[#allocation3 + $0x220] sm:$0xff]
      %v975 = vld [vmem:[#allocation3 + $0x228] sm:$0xff]
      %v976 = vld [vmem:[#allocation3 + $0x230] sm:$0xff]
      %v977 = vld [vmem:[#allocation3 + $0x238] sm:$0xff]
      %v978 = vld [vmem:[#allocation3 + $0x240] sm:$0xff]
      %v979 = vld [vmem:[#allocation3 + $0x248] sm:$0xff]
      %v980 = vld [vmem:[#allocation3 + $0x250] sm:$0xff]
      %v981 = vld [vmem:[#allocation3 + $0x258] sm:$0xff]
      %v982 = vld [vmem:[#allocation3 + $0x260] sm:$0xff]
      %v983 = vld [vmem:[#allocation3 + $0x268] sm:$0xff]
      %v984 = vld [vmem:[#allocation3 + $0x270] sm:$0xff]
      %v985 = vld [vmem:[#allocation3 + $0x278] sm:$0xff]
      %v986 = vld [vmem:[#allocation3 + $0x280] sm:$0xff]
      %v987 = vld [vmem:[#allocation3 + $0x288] sm:$0xff]
      %v988 = vld [vmem:[#allocation3 + $0x290] sm:$0xff]
      %v989 = vld [vmem:[#allocation3 + $0x298] sm:$0xff]
      %v990 = vld [vmem:[#allocation3 + $0x2a0] sm:$0xff]
      %v991 = vld [vmem:[#allocation3 + $0x2a8] sm:$0xff]
      %v992 = vld [vmem:[#allocation3 + $0x2b0] sm:$0xff]
      %v993 = vld [vmem:[#allocation3 + $0x2b8] sm:$0xff]
      %v994 = vld [vmem:[#allocation3 + $0x2c0] sm:$0xff]
      %v995 = vld [vmem:[#allocation3 + $0x2c8] sm:$0xff]
      %v996 = vld [vmem:[#allocation3 + $0x2d0] sm:$0xff]
      %v997 = vld [vmem:[#allocation3 + $0x2d8] sm:$0xff]
      %v998 = vld [vmem:[#allocation3 + $0x2e0] sm:$0xff]
      %v999 = vld [vmem:[#allocation3 + $0x2e8] sm:$0xff]
      %v1000 = vld [vmem:[#allocation3 + $0x2f0] sm:$0xff]
      %v1001 = vld [vmem:[#allocation3 + $0x2f8] sm:$0xff]
      %v1002 = vld [vmem:[#allocation3 + $0x300] sm:$0xff]
      %v1003 = vld [vmem:[#allocation3 + $0x308] sm:$0xff]
      %v1004 = vld [vmem:[#allocation3 + $0x310] sm:$0xff]
      %v1005 = vld [vmem:[#allocation3 + $0x318] sm:$0xff]
      %v1006 = vld [vmem:[#allocation3 + $0x320] sm:$0xff]
      %v1007 = vld [vmem:[#allocation3 + $0x328] sm:$0xff]
      %v1008 = vld [vmem:[#allocation3 + $0x330] sm:$0xff]
      %v1009 = vld [vmem:[#allocation3 + $0x338] sm:$0xff]
      %v1010 = vld [vmem:[#allocation3 + $0x340] sm:$0xff]
      %v1011 = vld [vmem:[#allocation3 + $0x348] sm:$0xff]
      %v1012 = vld [vmem:[#allocation3 + $0x350] sm:$0xff]
      %v1013 = vld [vmem:[#allocation3 + $0x358] sm:$0xff]
      %v1014 = vld [vmem:[#allocation3 + $0x360] sm:$0xff]
      %v1015 = vld [vmem:[#allocation3 + $0x368] sm:$0xff]
      %v1016 = vld [vmem:[#allocation3 + $0x370] sm:$0xff]
      %v1017 = vld [vmem:[#allocation3 + $0x378] sm:$0xff]
      %v1018 = vld [vmem:[#allocation3 + $0x380] sm:$0xff]
      %v1019 = vld [vmem:[#allocation3 + $0x388] sm:$0xff]
      %v1020 = vld [vmem:[#allocation3 + $0x390] sm:$0xff]
      %v1021 = vld [vmem:[#allocation3 + $0x398] sm:$0xff]
      %v1022 = vld [vmem:[#allocation3 + $0x3a0] sm:$0xff]
      %v1023 = vld [vmem:[#allocation3 + $0x3a8] sm:$0xff]
      %v1024 = vld [vmem:[#allocation3 + $0x3b0] sm:$0xff]
      %v1025 = vld [vmem:[#allocation3 + $0x3b8] sm:$0xff]
      %v1026 = vld [vmem:[#allocation3 + $0x3c0] sm:$0xff]
      %v1027 = vld [vmem:[#allocation3 + $0x3c8] sm:$0xff]
      %v1028 = vld [vmem:[#allocation3 + $0x3d0] sm:$0xff]
      %v1029 = vld [vmem:[#allocation3 + $0x3d8] sm:$0xff]
      %v1030 = vld [vmem:[#allocation3 + $0x3e0] sm:$0xff]
      %v1031 = vld [vmem:[#allocation3 + $0x3e8] sm:$0xff]
      %v1032 = vld [vmem:[#allocation3 + $0x3f0] sm:$0xff]
      %v1033 = vld [vmem:[#allocation3 + $0x3f8] sm:$0xff]
      %v1034 = vld [vmem:[#allocation3 + $0x400] sm:$0xff]
      %v1035 = vld [vmem:[#allocation3 + $0x408] sm:$0xff]
      %v1036 = vld [vmem:[#allocation3 + $0x410] sm:$0xff]
      %v1037 = vld [vmem:[#allocation3 + $0x418] sm:$0xff]
      %v1038 = vld [vmem:[#allocation3 + $0x420] sm:$0xff]
      %v1039 = vld [vmem:[#allocation3 + $0x428] sm:$0xff]
      %v1040 = vld [vmem:[#allocation3 + $0x430] sm:$0xff]
      %v1041 = vld [vmem:[#allocation3 + $0x438] sm:$0xff]
      %v1042 = vld [vmem:[#allocation3 + $0x440] sm:$0xff]
      %v1043 = vld [vmem:[#allocation3 + $0x448] sm:$0xff]
      %v1044 = vld [vmem:[#allocation3 + $0x450] sm:$0xff]
      %v1045 = vld [vmem:[#allocation3 + $0x458] sm:$0xff]
      %v1046 = vld [vmem:[#allocation3 + $0x460] sm:$0xff]
      %v1047 = vld [vmem:[#allocation3 + $0x468] sm:$0xff]
      %v1048 = vld [vmem:[#allocation3 + $0x470] sm:$0xff]
      %v1049 = vld [vmem:[#allocation3 + $0x478] sm:$0xff]
      %v1050 = vld [vmem:[#allocation3 + $0x480] sm:$0xff]
      %v1051 = vld [vmem:[#allocation3 + $0x488] sm:$0xff]
      %v1052 = vld [vmem:[#allocation3 + $0x490] sm:$0xff]
      %v1053 = vld [vmem:[#allocation3 + $0x498] sm:$0xff]
      %v1054 = vld [vmem:[#allocation3 + $0x4a0] sm:$0xff]
      %v1055 = vld [vmem:[#allocation3 + $0x4a8] sm:$0xff]
      %v1056 = vld [vmem:[#allocation3 + $0x4b0] sm:$0xff]
      %v1057 = vld [vmem:[#allocation3 + $0x4b8] sm:$0xff]
      %v1058 = vld [vmem:[#allocation3 + $0x4c0] sm:$0xff]
      %v1059 = vld [vmem:[#allocation3 + $0x4c8] sm:$0xff]
      %v1060 = vld [vmem:[#allocation3 + $0x4d0] sm:$0xff]
      %v1061 = vld [vmem:[#allocation3 + $0x4d8] sm:$0xff]
      %v1062 = vld [vmem:[#allocation3 + $0x4e0] sm:$0xff]
      %v1063 = vld [vmem:[#allocation3 + $0x4e8] sm:$0xff]
      %v1064 = vld [vmem:[#allocation3 + $0x4f0] sm:$0xff]
      %v1065 = vld [vmem:[#allocation3 + $0x4f8] sm:$0xff]
      %v1066 = vld [vmem:[#allocation3 + $0x500] sm:$0xff]
      %v1067 = vld [vmem:[#allocation3 + $0x508] sm:$0xff]
      %v1068 = vld [vmem:[#allocation3 + $0x510] sm:$0xff]
      %v1069 = vld [vmem:[#allocation3 + $0x518] sm:$0xff]
      %v1070 = vld [vmem:[#allocation3 + $0x520] sm:$0xff]
      %v1071 = vld [vmem:[#allocation3 + $0x528] sm:$0xff]
      %v1072 = vld [vmem:[#allocation3 + $0x530] sm:$0xff]
      %v1073 = vld [vmem:[#allocation3 + $0x538] sm:$0xff]
      %v1074 = vld [vmem:[#allocation3 + $0x540] sm:$0xff]
      %v1075 = vld [vmem:[#allocation3 + $0x548] sm:$0xff]
      %v1076 = vld [vmem:[#allocation3 + $0x550] sm:$0xff]
      %v1077 = vld [vmem:[#allocation3 + $0x558] sm:$0xff]
      %v1078 = vld [vmem:[#allocation3 + $0x560] sm:$0xff]
      %v1079 = vld [vmem:[#allocation3 + $0x568] sm:$0xff]
      %v1080 = vld [vmem:[#allocation3 + $0x570] sm:$0xff]
      %v1081 = vld [vmem:[#allocation3 + $0x578] sm:$0xff]
      %v1082 = vld [vmem:[#allocation3 + $0x580] sm:$0xff]
      %v1083 = vld [vmem:[#allocation3 + $0x588] sm:$0xff]
      %v1084 = vld [vmem:[#allocation3 + $0x590] sm:$0xff]
      %v1085 = vld [vmem:[#allocation3 + $0x598] sm:$0xff]
      %v1086 = vld [vmem:[#allocation3 + $0x5a0] sm:$0xff]
      %v1087 = vld [vmem:[#allocation3 + $0x5a8] sm:$0xff]
      %v1088 = vld [vmem:[#allocation3 + $0x5b0] sm:$0xff]
      %v1089 = vld [vmem:[#allocation3 + $0x5b8] sm:$0xff]
      %v1090 = vld [vmem:[#allocation3 + $0x5c0] sm:$0xff]
      %v1091 = vld [vmem:[#allocation3 + $0x5c8] sm:$0xff]
      %v1092 = vld [vmem:[#allocation3 + $0x5d0] sm:$0xff]
      %v1093 = vld [vmem:[#allocation3 + $0x5d8] sm:$0xff]
      %v1094 = vld [vmem:[#allocation3 + $0x5e0] sm:$0xff]
      %v1095 = vld [vmem:[#allocation3 + $0x5e8] sm:$0xff]
      %v1096 = vld [vmem:[#allocation3 + $0x5f0] sm:$0xff]
      %v1097 = vld [vmem:[#allocation3 + $0x5f8] sm:$0xff]
      %v1098 = vld [vmem:[#allocation3 + $0x600] sm:$0xff]
      %v1099 = vld [vmem:[#allocation3 + $0x608] sm:$0xff]
      %v1100 = vld [vmem:[#allocation3 + $0x610] sm:$0xff]
      %v1101 = vld [vmem:[#allocation3 + $0x618] sm:$0xff]
      %v1102 = vld [vmem:[#allocation3 + $0x620] sm:$0xff]
      %v1103 = vld [vmem:[#allocation3 + $0x628] sm:$0xff]
      %v1104 = vld [vmem:[#allocation3 + $0x630] sm:$0xff]
      %v1105 = vld [vmem:[#allocation3 + $0x638] sm:$0xff]
      %v1106 = vld [vmem:[#allocation3 + $0x640] sm:$0xff]
      %v1107 = vld [vmem:[#allocation3 + $0x648] sm:$0xff]
      %v1108 = vld [vmem:[#allocation3 + $0x650] sm:$0xff]
      %v1109 = vld [vmem:[#allocation3 + $0x658] sm:$0xff]
      %v1110 = vld [vmem:[#allocation3 + $0x660] sm:$0xff]
      %v1111 = vld [vmem:[#allocation3 + $0x668] sm:$0xff]
      %v1112 = vld [vmem:[#allocation3 + $0x670] sm:$0xff]
      %v1113 = vld [vmem:[#allocation3 + $0x678] sm:$0xff]
      %v1114 = vld [vmem:[#allocation3 + $0x680] sm:$0xff]
      %v1115 = vld [vmem:[#allocation3 + $0x688] sm:$0xff]
      %v1116 = vld [vmem:[#allocation3 + $0x690] sm:$0xff]
      %v1117 = vld [vmem:[#allocation3 + $0x698] sm:$0xff]
      %v1118 = vld [vmem:[#allocation3 + $0x6a0] sm:$0xff]
      %v1119 = vld [vmem:[#allocation3 + $0x6a8] sm:$0xff]
      %v1120 = vld [vmem:[#allocation3 + $0x6b0] sm:$0xff]
      %v1121 = vld [vmem:[#allocation3 + $0x6b8] sm:$0xff]
      %v1122 = vld [vmem:[#allocation3 + $0x6c0] sm:$0xff]
      %v1123 = vld [vmem:[#allocation3 + $0x6c8] sm:$0xff]
      %v1124 = vld [vmem:[#allocation3 + $0x6d0] sm:$0xff]
      %v1125 = vld [vmem:[#allocation3 + $0x6d8] sm:$0xff]
      %v1126 = vld [vmem:[#allocation3 + $0x6e0] sm:$0xff]
      %v1127 = vld [vmem:[#allocation3 + $0x6e8] sm:$0xff]
      %v1128 = vld [vmem:[#allocation3 + $0x6f0] sm:$0xff]
      %v1129 = vld [vmem:[#allocation3 + $0x6f8] sm:$0xff]
      %v1130 = vld [vmem:[#allocation3 + $0x700] sm:$0xff]
      %v1131 = vld [vmem:[#allocation3 + $0x708] sm:$0xff]
      %v1132 = vld [vmem:[#allocation3 + $0x710] sm:$0xff]
      %v1133 = vld [vmem:[#allocation3 + $0x718] sm:$0xff]
      %v1134 = vld [vmem:[#allocation3 + $0x720] sm:$0xff]
      %v1135 = vld [vmem:[#allocation3 + $0x728] sm:$0xff]
      %v1136 = vld [vmem:[#allocation3 + $0x730] sm:$0xff]
      %v1137 = vld [vmem:[#allocation3 + $0x738] sm:$0xff]
      %v1138 = vld [vmem:[#allocation3 + $0x740] sm:$0xff]
      %v1139 = vld [vmem:[#allocation3 + $0x748] sm:$0xff]
      %v1140 = vld [vmem:[#allocation3 + $0x750] sm:$0xff]
      %v1141 = vld [vmem:[#allocation3 + $0x758] sm:$0xff]
      %v1142 = vld [vmem:[#allocation3 + $0x760] sm:$0xff]
      %v1143 = vld [vmem:[#allocation3 + $0x768] sm:$0xff]
      %v1144 = vld [vmem:[#allocation3 + $0x770] sm:$0xff]
      %v1145 = vld [vmem:[#allocation3 + $0x778] sm:$0xff]
      %v1146 = vld [vmem:[#allocation3 + $0x780] sm:$0xff]
      %v1147 = vld [vmem:[#allocation3 + $0x788] sm:$0xff]
      %v1148 = vld [vmem:[#allocation3 + $0x790] sm:$0xff]
      %v1149 = vld [vmem:[#allocation3 + $0x798] sm:$0xff]
      %v1150 = vld [vmem:[#allocation3 + $0x7a0] sm:$0xff]
      %v1151 = vld [vmem:[#allocation3 + $0x7a8] sm:$0xff]
      %v1152 = vld [vmem:[#allocation3 + $0x7b0] sm:$0xff]
      %v1153 = vld [vmem:[#allocation3 + $0x7b8] sm:$0xff]
      %v1154 = vld [vmem:[#allocation3 + $0x7c0] sm:$0xff]
      %v1155 = vld [vmem:[#allocation3 + $0x7c8] sm:$0xff]
      %v1156 = vld [vmem:[#allocation3 + $0x7d0] sm:$0xff]
      %v1157 = vld [vmem:[#allocation3 + $0x7d8] sm:$0xff]
      %v1158 = vld [vmem:[#allocation3 + $0x7e0] sm:$0xff]
      %v1159 = vld [vmem:[#allocation3 + $0x7e8] sm:$0xff]
      %v1160 = vld [vmem:[#allocation3 + $0x7f0] sm:$0xff]
      %v1161 = vld [vmem:[#allocation3 + $0x7f8] sm:$0xff]
      %v1162 = vld [vmem:[#allocation3 + $0x800] sm:$0xff]
      %v1163 = vld [vmem:[#allocation3 + $0x808] sm:$0xff]
      %v1164 = vld [vmem:[#allocation3 + $0x810] sm:$0xff]
      %v1165 = vld [vmem:[#allocation3 + $0x818] sm:$0xff]
      %v1166 = vld [vmem:[#allocation3 + $0x820] sm:$0xff]
      %v1167 = vld [vmem:[#allocation3 + $0x828] sm:$0xff]
      %v1168 = vld [vmem:[#allocation3 + $0x830] sm:$0xff]
      %v1169 = vld [vmem:[#allocation3 + $0x838] sm:$0xff]
      %v1170 = vld [vmem:[#allocation3 + $0x840] sm:$0xff]
      %v1171 = vld [vmem:[#allocation3 + $0x848] sm:$0xff]
      %v1172 = vld [vmem:[#allocation3 + $0x850] sm:$0xff]
      %v1173 = vld [vmem:[#allocation3 + $0x858] sm:$0xff]
      %v1174 = vld [vmem:[#allocation3 + $0x860] sm:$0xff]
      %v1175 = vld [vmem:[#allocation3 + $0x868] sm:$0xff]
      %v1176 = vld [vmem:[#allocation3 + $0x870] sm:$0xff]
      %v1177 = vld [vmem:[#allocation3 + $0x878] sm:$0xff]
      %v1178 = vld [vmem:[#allocation3 + $0x880] sm:$0xff]
      %v1179 = vld [vmem:[#allocation3 + $0x888] sm:$0xff]
      %v1180 = vld [vmem:[#allocation3 + $0x890] sm:$0xff]
      %v1181 = vld [vmem:[#allocation3 + $0x898] sm:$0xff]
      %v1182 = vld [vmem:[#allocation3 + $0x8a0] sm:$0xff]
      %v1183 = vld [vmem:[#allocation3 + $0x8a8] sm:$0xff]
      %v1184 = vld [vmem:[#allocation3 + $0x8b0] sm:$0xff]
      %v1185 = vld [vmem:[#allocation3 + $0x8b8] sm:$0xff]
      %v1186 = vld [vmem:[#allocation3 + $0x8c0] sm:$0xff]
      %v1187 = vld [vmem:[#allocation3 + $0x8c8] sm:$0xff]
      %v1188 = vld [vmem:[#allocation3 + $0x8d0] sm:$0xff]
      %v1189 = vld [vmem:[#allocation3 + $0x8d8] sm:$0xff]
      %v1190 = vld [vmem:[#allocation3 + $0x8e0] sm:$0xff]
      %v1191 = vld [vmem:[#allocation3 + $0x8e8] sm:$0xff]
      %v1192 = vld [vmem:[#allocation3 + $0x8f0] sm:$0xff]
      %v1193 = vld [vmem:[#allocation3 + $0x8f8] sm:$0xff]
      %v1194 = vld [vmem:[%s1] sm:$0xff]
      %v1195 = vld [vmem:[%s1 + $0x8] sm:$0xff]
      %v1196 = vld [vmem:[%s1 + $0x10] sm:$0xff]
      %v1197 = vld [vmem:[%s1 + $0x18] sm:$0xff]
      %v1198 = vld [vmem:[%s1 + $0x20] sm:$0xff]
      %v1199 = vld [vmem:[%s1 + $0x28] sm:$0xff]
      %v1200 = vld [vmem:[%s1 + $0x30] sm:$0xff]
      %v1201 = vld [vmem:[%s1 + $0x38] sm:$0xff]
      %v1202 = vld [vmem:[%s1 + $0x40] sm:$0xff]
      %v1203 = vld [vmem:[%s1 + $0x48] sm:$0xff]
      %v1204 = vld [vmem:[%s1 + $0x50] sm:$0xff]
      %v1205 = vld [vmem:[%s1 + $0x58] sm:$0xff]
      %v1206 = vld [vmem:[%s1 + $0x60] sm:$0xff]
      %v1207 = vld [vmem:[%s1 + $0x68] sm:$0xff]
      %v1208 = vld [vmem:[%s1 + $0x70] sm:$0xff]
      %v1209 = vld [vmem:[%s1 + $0x78] sm:$0xff]
      %v1210 = vld [vmem:[%s1 + $0x80] sm:$0xff]
      %v1211 = vld [vmem:[%s1 + $0x88] sm:$0xff]
      %v1212 = vld [vmem:[%s1 + $0x90] sm:$0xff]
      %v1213 = vld [vmem:[%s1 + $0x98] sm:$0xff]
      %v1214 = vld [vmem:[%s1 + $0xa0] sm:$0xff]
      %v1215 = vld [vmem:[%s1 + $0xa8] sm:$0xff]
      %v1216 = vld [vmem:[%s1 + $0xb0] sm:$0xff]
      %v1217 = vld [vmem:[%s1 + $0xb8] sm:$0xff]
      %v1218 = vld [vmem:[%s1 + $0xc0] sm:$0xff]
      %v1219 = vld [vmem:[%s1 + $0xc8] sm:$0xff]
      %v1220 = vld [vmem:[%s1 + $0xd0] sm:$0xff]
      %v1221 = vld [vmem:[%s1 + $0xd8] sm:$0xff]
      %v1222 = vld [vmem:[%s1 + $0xe0] sm:$0xff]
      %v1223 = vld [vmem:[%s1 + $0xe8] sm:$0xff]
      %v1224 = vld [vmem:[%s1 + $0xf0] sm:$0xff]
      %v1225 = vld [vmem:[%s1 + $0xf8] sm:$0xff]
      %v1226 = vld [vmem:[%s1 + $0x100] sm:$0xff]
      %v1227 = vld [vmem:[%s1 + $0x108] sm:$0xff]
      %v1228 = vld [vmem:[%s1 + $0x110] sm:$0xff]
      %v1229 = vld [vmem:[%s1 + $0x118] sm:$0xff]
      %v1230 = vld [vmem:[%s1 + $0x120] sm:$0xff]
      %v1231 = vld [vmem:[%s1 + $0x128] sm:$0xff]
      %v1232 = vld [vmem:[%s1 + $0x130] sm:$0xff]
      %v1233 = vld [vmem:[%s1 + $0x138] sm:$0xff]
      %v1234 = vld [vmem:[%s1 + $0x140] sm:$0xff]
      %v1235 = vld [vmem:[%s1 + $0x148] sm:$0xff]
      %v1236 = vld [vmem:[%s1 + $0x150] sm:$0xff]
      %v1237 = vld [vmem:[%s1 + $0x158] sm:$0xff]
      %v1238 = vld [vmem:[%s1 + $0x160] sm:$0xff]
      %v1239 = vld [vmem:[%s1 + $0x168] sm:$0xff]
      %v1240 = vld [vmem:[%s1 + $0x170] sm:$0xff]
      %v1241 = vld [vmem:[%s1 + $0x178] sm:$0xff]
      %v1242 = vld [vmem:[%s1 + $0x180] sm:$0xff]
      %v1243 = vld [vmem:[%s1 + $0x188] sm:$0xff]
      %v1244 = vld [vmem:[%s1 + $0x190] sm:$0xff]
      %v1245 = vld [vmem:[%s1 + $0x198] sm:$0xff]
      %v1246 = vld [vmem:[%s1 + $0x1a0] sm:$0xff]
      %v1247 = vld [vmem:[%s1 + $0x1a8] sm:$0xff]
      %v1248 = vld [vmem:[%s1 + $0x1b0] sm:$0xff]
      %v1249 = vld [vmem:[%s1 + $0x1b8] sm:$0xff]
      %v1250 = vld [vmem:[%s1 + $0x1c0] sm:$0xff]
      %v1251 = vld [vmem:[%s1 + $0x1c8] sm:$0xff]
      %v1252 = vld [vmem:[%s1 + $0x1d0] sm:$0xff]
      %v1253 = vld [vmem:[%s1 + $0x1d8] sm:$0xff]
      %v1254 = vld [vmem:[%s1 + $0x1e0] sm:$0xff]
      %v1255 = vld [vmem:[%s1 + $0x1e8] sm:$0xff]
      %v1256 = vld [vmem:[%s1 + $0x1f0] sm:$0xff]
      %v1257 = vld [vmem:[%s1 + $0x1f8] sm:$0xff]
      %v1258 = vld [vmem:[%s1 + $0x200] sm:$0xff]
      %v1259 = vld [vmem:[%s1 + $0x208] sm:$0xff]
      %v1260 = vld [vmem:[%s1 + $0x210] sm:$0xff]
      %v1261 = vld [vmem:[%s1 + $0x218] sm:$0xff]
      %v1262 = vld [vmem:[%s1 + $0x220] sm:$0xff]
      %v1263 = vld [vmem:[%s1 + $0x228] sm:$0xff]
      %v1264 = vld [vmem:[%s1 + $0x230] sm:$0xff]
      %v1265 = vld [vmem:[%s1 + $0x238] sm:$0xff]
      %v1266 = vld [vmem:[%s1 + $0x240] sm:$0xff]
      %v1267 = vld [vmem:[%s1 + $0x248] sm:$0xff]
      %v1268 = vld [vmem:[%s1 + $0x250] sm:$0xff]
      %v1269 = vld [vmem:[%s1 + $0x258] sm:$0xff]
      %v1270 = vld [vmem:[%s1 + $0x260] sm:$0xff]
      %v1271 = vld [vmem:[%s1 + $0x268] sm:$0xff]
      %v1272 = vld [vmem:[%s1 + $0x270] sm:$0xff]
      %v1273 = vld [vmem:[%s1 + $0x278] sm:$0xff]
      %v1274 = vld [vmem:[%s1 + $0x280] sm:$0xff]
      %v1275 = vld [vmem:[%s1 + $0x288] sm:$0xff]
      %v1276 = vld [vmem:[%s1 + $0x290] sm:$0xff]
      %v1277 = vld [vmem:[%s1 + $0x298] sm:$0xff]
      %v1278 = vld [vmem:[%s1 + $0x2a0] sm:$0xff]
      %v1279 = vld [vmem:[%s1 + $0x2a8] sm:$0xff]
      %v1280 = vld [vmem:[%s1 + $0x2b0] sm:$0xff]
      %v1281 = vld [vmem:[%s1 + $0x2b8] sm:$0xff]
      %v1282 = vld [vmem:[%s1 + $0x2c0] sm:$0xff]
      %v1283 = vld [vmem:[%s1 + $0x2c8] sm:$0xff]
      %v1284 = vld [vmem:[%s1 + $0x2d0] sm:$0xff]
      %v1285 = vld [vmem:[%s1 + $0x2d8] sm:$0xff]
      %v1286 = vld [vmem:[%s1 + $0x2e0] sm:$0xff]
      %v1287 = vld [vmem:[%s1 + $0x2e8] sm:$0xff]
      %v1288 = vld [vmem:[%s1 + $0x2f0] sm:$0xff]
      %v1289 = vld [vmem:[%s1 + $0x2f8] sm:$0xff]
      %v1290 = vld [vmem:[%s1 + $0x300] sm:$0xff]
      %v1291 = vld [vmem:[%s1 + $0x308] sm:$0xff]
      %v1292 = vld [vmem:[%s1 + $0x310] sm:$0xff]
      %v1293 = vld [vmem:[%s1 + $0x318] sm:$0xff]
      %v1294 = vld [vmem:[%s1 + $0x320] sm:$0xff]
      %v1295 = vld [vmem:[%s1 + $0x328] sm:$0xff]
      %v1296 = vld [vmem:[%s1 + $0x330] sm:$0xff]
      %v1297 = vld [vmem:[%s1 + $0x338] sm:$0xff]
      %v1298 = vld [vmem:[%s1 + $0x340] sm:$0xff]
      %v1299 = vld [vmem:[%s1 + $0x348] sm:$0xff]
      %v1300 = vld [vmem:[%s1 + $0x350] sm:$0xff]
      %v1301 = vld [vmem:[%s1 + $0x358] sm:$0xff]
      %v1302 = vld [vmem:[%s1 + $0x360] sm:$0xff]
      %v1303 = vld [vmem:[%s1 + $0x368] sm:$0xff]
      %v1304 = vld [vmem:[%s1 + $0x370] sm:$0xff]
      %v1305 = vld [vmem:[%s1 + $0x378] sm:$0xff]
      %v1306 = vld [vmem:[%s1 + $0x380] sm:$0xff]
      %v1307 = vld [vmem:[%s1 + $0x388] sm:$0xff]
      %v1308 = vld [vmem:[%s1 + $0x390] sm:$0xff]
      %v1309 = vld [vmem:[%s1 + $0x398] sm:$0xff]
      %v1310 = vld [vmem:[%s1 + $0x3a0] sm:$0xff]
      %v1311 = vld [vmem:[%s1 + $0x3a8] sm:$0xff]
      %v1312 = vld [vmem:[%s1 + $0x3b0] sm:$0xff]
      %v1313 = vld [vmem:[%s1 + $0x3b8] sm:$0xff]
      %v1314 = vld [vmem:[%s1 + $0x3c0] sm:$0xff]
      %v1315 = vld [vmem:[%s1 + $0x3c8] sm:$0xff]
      %v1316 = vld [vmem:[%s1 + $0x3d0] sm:$0xff]
      %v1317 = vld [vmem:[%s1 + $0x3d8] sm:$0xff]
      %v1318 = vld [vmem:[%s1 + $0x3e0] sm:$0xff]
      %v1319 = vld [vmem:[%s1 + $0x3e8] sm:$0xff]
      %v1320 = vld [vmem:[%s1 + $0x3f0] sm:$0xff]
      %v1321 = vld [vmem:[%s1 + $0x3f8] sm:$0xff]
      %v1322 = vld [vmem:[%s1 + $0x400] sm:$0xff]
      %v1323 = vld [vmem:[%s1 + $0x408] sm:$0xff]
      %v1324 = vld [vmem:[%s1 + $0x410] sm:$0xff]
      %v1325 = vld [vmem:[%s1 + $0x418] sm:$0xff]
      %v1326 = vld [vmem:[%s1 + $0x420] sm:$0xff]
      %v1327 = vld [vmem:[%s1 + $0x428] sm:$0xff]
      %v1328 = vld [vmem:[%s1 + $0x430] sm:$0xff]
      %v1329 = vld [vmem:[%s1 + $0x438] sm:$0xff]
      %v1330 = vld [vmem:[%s1 + $0x440] sm:$0xff]
      %v1331 = vld [vmem:[%s1 + $0x448] sm:$0xff]
      %v1332 = vld [vmem:[%s1 + $0x450] sm:$0xff]
      %v1333 = vld [vmem:[%s1 + $0x458] sm:$0xff]
      %v1334 = vld [vmem:[%s1 + $0x460] sm:$0xff]
      %v1335 = vld [vmem:[%s1 + $0x468] sm:$0xff]
      %v1336 = vld [vmem:[%s1 + $0x470] sm:$0xff]
      %v1337 = vld [vmem:[%s1 + $0x478] sm:$0xff]
      %v1338 = vld [vmem:[%s2] sm:$0x1]
      %v1340 = vlaneseq
      %v1341 = vshrl.u32 %v1340, 7
      %v1342 = vsub.s32 0, %v1341
      %v1343 = vrot.slane %v1338, %v1342
      %1345 = vmatprep.subr.mxu0 0.0
      %1346 = vmatpush1.msra.mxu0 %v1194
      %1347 = vmatprep.subr.mxu0 0.0
      %1348 = vmatpush1.msra.mxu0 %v1195
      %1349 = vmatprep.subr.mxu0 0.0
      %1350 = vmatpush1.msra.mxu0 %v1196
      %1351 = vmatprep.subr.mxu0 0.0
      %1352 = vmatpush1.msra.mxu0 %v1197
      %1353 = vmatprep.subr.mxu0 0.0
      %1354 = vmatpush1.msra.mxu0 %v1198
      %1355 = vmatprep.subr.mxu0 0.0
      %1356 = vmatpush1.msra.mxu0 %v1199
      %1357 = vmatprep.subr.mxu0 0.0
      %1358 = vmatpush1.msra.mxu0 %v1200
      %1359 = vmatprep.subr.mxu0 0.0
      %1360 = vmatpush1.msra.mxu0 %v1201
      %1361 = vmatprep.subr.mxu0 0.0
      %1362 = vmatpush1.msra.mxu0 %v1202
      %1363 = vmatprep.subr.mxu0 0.0
      %1364 = vmatpush1.msra.mxu0 %v1203
      %1365 = vmatprep.subr.mxu0 0.0
      %1366 = vmatpush1.msra.mxu0 %v1204
      %1367 = vmatprep.subr.mxu0 0.0
      %1368 = vmatpush1.msra.mxu0 %v1205
      %1369 = vmatprep.subr.mxu0 0.0
      %1370 = vmatpush1.msra.mxu0 %v1206
      %1371 = vmatprep.subr.mxu0 0.0
      %1372 = vmatpush1.msra.mxu0 %v1207
      %1373 = vmatprep.subr.mxu0 0.0
      %1374 = vmatpush1.msra.mxu0 %v1208
      %1375 = vmatprep.subr.mxu0 0.0
      %1376 = vmatpush1.msra.mxu0 %v1209
      %1377 = vmatprep.subr.mxu0 0.0
      %1378 = vmatpush1.msra.mxu0 %v1210
      %1379 = vmatprep.subr.mxu0 0.0
      %1380 = vmatpush1.msra.mxu0 %v1211
      %1381 = vmatprep.subr.mxu0 0.0
      %1382 = vmatpush1.msra.mxu0 %v1212
      %1383 = vmatprep.subr.mxu0 0.0
      %1384 = vmatpush1.msra.mxu0 %v1213
      %1385 = vmatprep.subr.mxu0 0.0
      %1386 = vmatpush1.msra.mxu0 %v1214
      %1387 = vmatprep.subr.mxu0 0.0
      %1388 = vmatpush1.msra.mxu0 %v1215
      %1389 = vmatprep.subr.mxu0 0.0
      %1390 = vmatpush1.msra.mxu0 %v1216
      %1391 = vmatprep.subr.mxu0 0.0
      %1392 = vmatpush1.msra.mxu0 %v1217
      %1393 = vmatprep.subr.mxu0 0.0
      %1394 = vmatpush1.msra.mxu0 %v1218
      %1395 = vmatprep.subr.mxu0 0.0
      %1396 = vmatpush1.msra.mxu0 %v1219
      %1397 = vmatprep.subr.mxu0 0.0
      %1398 = vmatpush1.msra.mxu0 %v1220
      %1399 = vmatprep.subr.mxu0 0.0
      %1400 = vmatpush1.msra.mxu0 %v1221
      %1401 = vmatprep.subr.mxu0 0.0
      %1402 = vmatpush1.msra.mxu0 %v1222
      %1403 = vmatprep.subr.mxu0 0.0
      %1404 = vmatpush1.msra.mxu0 %v1223
      %1405 = vmatprep.subr.mxu0 0.0
      %1406 = vmatpush1.msra.mxu0 %v1224
      %1407 = vmatprep.subr.mxu0 0.0
      %1408 = vmatpush1.msra.mxu0 %v1225
      %1409 = vmatprep.mubr.f32.mxu0 %v907
      %1410 = vmatmul.mubr.f32.gmra.mrb[0].mxu0 %v906
      %v1411 = vpop.f32.mrb[0].mxu0
      %v1412 = vadd.f32 %v1343, %v1411
      %v1413 = vpop.f32.mrb[0].mxu0
      %1414 = vmatprep.mubr.f32.mxu0 %v916
      %1415 = vmatmul.mubr.f32.gmra.mrb[0].mxu0 %v915
      %v1416 = vpop.f32.mrb[0].mxu0
      %v1417 = vadd.f32 %v1343, %v1416
      %v1418 = vpop.f32.mrb[0].mxu0
      %1419 = vmatprep.mubr.f32.mxu0 %v925
      %1420 = vmatmul.mubr.f32.gmra.mrb[0].mxu0 %v924
      %v1421 = vpop.f32.mrb[0].mxu0
      %v1422 = vadd.f32 %v1343, %v1421
      %v1423 = vpop.f32.mrb[0].mxu0
      %1424 = vmatprep.mubr.f32.mxu0 %v934
      %1425 = vmatmul.mubr.f32.gmra.mrb[0].mxu0 %v933
      %v1426 = vpop.f32.mrb[0].mxu0
      %v1427 = vadd.f32 %v1343, %v1426
      %v1428 = vpop.f32.mrb[0].mxu0
      %1429 = vmatprep.mubr.f32.mxu0 %v943
      %1430 = vmatmul.mubr.f32.gmra.mrb[0].mxu0 %v942
      %v1431 = vpop.f32.mrb[0].mxu0
      %v1432 = vadd.f32 %v1343, %v1431
      %v1433 = vpop.f32.mrb[0].mxu0
      %1434 = vmatprep.mubr.f32.mxu0 %v952
      %1435 = vmatmul.mubr.f32.gmra.mrb[0].mxu0 %v951
      %v1436 = vpop.f32.mrb[0].mxu0
      %v1437 = vadd.f32 %v1343, %v1436
      %v1438 = vpop.f32.mrb[0].mxu0
      %1439 = vmatprep.mubr.f32.mxu0 %v961
      %1440 = vmatmul.mubr.f32.gmra.mrb[0].mxu0 %v960
      %v1441 = vpop.f32.mrb[0].mxu0
      %v1442 = vadd.f32 %v1343, %v1441
      %v1443 = vpop.f32.mrb[0].mxu0
      %1444 = vmatprep.mubr.f32.mxu0 %v970
      %1445 = vmatmul.mubr.f32.gmra.mrb[0].mxu0 %v969
      %v1446 = vpop.f32.mrb[0].mxu0
      %v1447 = vadd.f32 %v1343, %v1446
      %v1448 = vpop.f32.mrb[0].mxu0
      %1449 = vmatprep.mubr.f32.mxu0 %v979
      %1450 = vmatmul.mubr.f32.gmra.mrb[0].mxu0 %v978
      %v1451 = vpop.f32.mrb[0].mxu0
      %v1452 = vadd.f32 %v1343, %v1451
      %v1453 = vpop.f32.mrb[0].mxu0
      %1454 = vmatprep.mubr.f32.mxu0 %v988
      %1455 = vmatmul.mubr.f32.gmra.mrb[0].mxu0 %v987
      %v1456 = vpop.f32.mrb[0].mxu0
      %v1457 = vadd.f32 %v1343, %v1456
      %v1458 = vpop.f32.mrb[0].mxu0
      %1459 = vmatprep.mubr.f32.mxu0 %v997
      %1460 = vmatmul.mubr.f32.gmra.mrb[0].mxu0 %v996
      %v1461 = vpop.f32.mrb[0].mxu0
      %v1462 = vadd.f32 %v1343, %v1461
      %v1463 = vpop.f32.mrb[0].mxu0
      %1464 = vmatprep.mubr.f32.mxu0 %v1006
      %1465 = vmatmul.mubr.f32.gmra.mrb[0].mxu0 %v1005
      %v1466 = vpop.f32.mrb[0].mxu0
      %v1467 = vadd.f32 %v1343, %v1466
      %v1468 = vpop.f32.mrb[0].mxu0
      %1469 = vmatprep.mubr.f32.mxu0 %v1015
      %1470 = vmatmul.mubr.f32.gmra.mrb[0].mxu0 %v1014
      %v1471 = vpop.f32.mrb[0].mxu0
      %v1472 = vadd.f32 %v1343, %v1471
      %v1473 = vpop.f32.mrb[0].mxu0
      %1474 = vmatprep.mubr.f32.mxu0 %v1024
      %1475 = vmatmul.mubr.f32.gmra.mrb[0].mxu0 %v1023
      %v1476 = vpop.f32.mrb[0].mxu0
      %v1477 = vadd.f32 %v1343, %v1476
      %v1478 = vpop.f32.mrb[0].mxu0
      %1479 = vmatprep.mubr.f32.mxu0 %v1033
      %1480 = vmatmul.mubr.f32.gmra.mrb[0].mxu0 %v1032
      %v1481 = vpop.f32.mrb[0].mxu0
      %v1482 = vadd.f32 %v1343, %v1481
      %v1483 = vpop.f32.mrb[0].mxu0
      %1484 = vmatprep.mubr.f32.mxu0 %v1042
      %1485 = vmatmul.mubr.f32.gmra.mrb[0].mxu0 %v1041
      %v1486 = vpop.f32.mrb[0].mxu0
      %v1487 = vadd.f32 %v1343, %v1486
      %v1488 = vpop.f32.mrb[0].mxu0
      %1489 = vmatprep.mubr.f32.mxu0 %v1051
      %1490 = vmatmul.mubr.f32.gmra.mrb[0].mxu0 %v1050
      %v1491 = vpop.f32.mrb[0].mxu0
      %v1492 = vadd.f32 %v1343, %v1491
      %v1493 = vpop.f32.mrb[0].mxu0
      %1494 = vmatprep.mubr.f32.mxu0 %v1060
      %1495 = vmatmul.mubr.f32.gmra.mrb[0].mxu0 %v1059
      %v1496 = vpop.f32.mrb[0].mxu0
      %v1497 = vadd.f32 %v1343, %v1496
      %v1498 = vpop.f32.mrb[0].mxu0
      %1499 = vmatprep.mubr.f32.mxu0 %v1069
      %1500 = vmatmul.mubr.f32.gmra.mrb[0].mxu0 %v1068
      %v1501 = vpop.f32.mrb[0].mxu0
      %v1502 = vadd.f32 %v1343, %v1501
      %v1503 = vpop.f32.mrb[0].mxu0
      %1504 = vmatprep.mubr.f32.mxu0 %v1078
      %1505 = vmatmul.mubr.f32.gmra.mrb[0].mxu0 %v1077
      %v1506 = vpop.f32.mrb[0].mxu0
      %v1507 = vadd.f32 %v1343, %v1506
      %v1508 = vpop.f32.mrb[0].mxu0
      %1509 = vmatprep.mubr.f32.mxu0 %v1087
      %1510 = vmatmul.mubr.f32.gmra.mrb[0].mxu0 %v1086
      %v1511 = vpop.f32.mrb[0].mxu0
      %v1512 = vadd.f32 %v1343, %v1511
      %v1513 = vpop.f32.mrb[0].mxu0
      %1514 = vmatprep.mubr.f32.mxu0 %v1096
      %1515 = vmatmul.mubr.f32.gmra.mrb[0].mxu0 %v1095
      %v1516 = vpop.f32.mrb[0].mxu0
      %v1517 = vadd.f32 %v1343, %v1516
      %v1518 = vpop.f32.mrb[0].mxu0
      %1519 = vmatprep.mubr.f32.mxu0 %v1105
      %1520 = vmatmul.mubr.f32.gmra.mrb[0].mxu0 %v1104
      %v1521 = vpop.f32.mrb[0].mxu0
      %v1522 = vadd.f32 %v1343, %v1521
      %v1523 = vpop.f32.mrb[0].mxu0
      %1524 = vmatprep.mubr.f32.mxu0 %v1114
      %1525 = vmatmul.mubr.f32.gmra.mrb[0].mxu0 %v1113
      %v1526 = vpop.f32.mrb[0].mxu0
      %v1527 = vadd.f32 %v1343, %v1526
      %v1528 = vpop.f32.mrb[0].mxu0
      %1529 = vmatprep.mubr.f32.mxu0 %v1123
      %1530 = vmatmul.mubr.f32.gmra.mrb[0].mxu0 %v1122
      %v1531 = vpop.f32.mrb[0].mxu0
      %v1532 = vadd.f32 %v1343, %v1531
      %v1533 = vpop.f32.mrb[0].mxu0
      %1534 = vmatprep.mubr.f32.mxu0 %v1132
      %1535 = vmatmul.mubr.f32.gmra.mrb[0].mxu0 %v1131
      %v1536 = vpop.f32.mrb[0].mxu0
      %v1537 = vadd.f32 %v1343, %v1536
      %v1538 = vpop.f32.mrb[0].mxu0
      %1539 = vmatprep.mubr.f32.mxu0 %v1141
      %1540 = vmatmul.mubr.f32.gmra.mrb[0].mxu0 %v1140
      %v1541 = vpop.f32.mrb[0].mxu0
      %v1542 = vadd.f32 %v1343, %v1541
      %v1543 = vpop.f32.mrb[0].mxu0
      %1544 = vmatprep.mubr.f32.mxu0 %v1150
      %1545 = vmatmul.mubr.f32.gmra.mrb[0].mxu0 %v1149
      %v1546 = vpop.f32.mrb[0].mxu0
      %v1547 = vadd.f32 %v1343, %v1546
      %v1548 = vpop.f32.mrb[0].mxu0
      %1549 = vmatprep.mubr.f32.mxu0 %v1159
      %1550 = vmatmul.mubr.f32.gmra.mrb[0].mxu0 %v1158
      %v1551 = vpop.f32.mrb[0].mxu0
      %v1552 = vadd.f32 %v1343, %v1551
      %v1553 = vpop.f32.mrb[0].mxu0
      %1554 = vmatprep.mubr.f32.mxu0 %v1168
      %1555 = vmatmul.mubr.f32.gmra.mrb[0].mxu0 %v1167
      %v1556 = vpop.f32.mrb[0].mxu0
      %v1557 = vadd.f32 %v1343, %v1556
      %v1558 = vpop.f32.mrb[0].mxu0
      %1559 = vmatprep.mubr.f32.mxu0 %v1177
      %1560 = vmatmul.mubr.f32.gmra.mrb[0].mxu0 %v1176
      %v1561 = vpop.f32.mrb[0].mxu0
      %v1562 = vadd.f32 %v1343, %v1561
      %v1563 = vpop.f32.mrb[0].mxu0
      %1564 = vmatprep.mubr.f32.mxu0 %v1186
      %1565 = vmatmul.mubr.f32.gmra.mrb[0].mxu0 %v1185
      %v1566 = vpop.f32.mrb[0].mxu0
      %v1567 = vadd.f32 %v1343, %v1566
      %v1568 = vpop.f32.mrb[0].mxu0
      %1569 = vdwg.mxu0
      %1570 = vmatprep.subr.mxu0 0.0
      %1571 = vmatpush1.msra.mxu0 %v1226
      %1572 = vmatprep.subr.mxu0 0.0
      %1573 = vmatpush1.msra.mxu0 %v1227
      %1574 = vmatprep.subr.mxu0 0.0
      %1575 = vmatpush1.msra.mxu0 %v1228
      %1576 = vmatprep.subr.mxu0 0.0
      %1577 = vmatpush1.msra.mxu0 %v1229
      %1578 = vmatprep.subr.mxu0 0.0
      %1579 = vmatpush1.msra.mxu0 %v1230
      %1580 = vmatprep.subr.mxu0 0.0
      %1581 = vmatpush1.msra.mxu0 %v1231
      %1582 = vmatprep.subr.mxu0 0.0
      %1583 = vmatpush1.msra.mxu0 %v1232
      %1584 = vmatprep.subr.mxu0 0.0
      %1585 = vmatpush1.msra.mxu0 %v1233
      %1586 = vmatprep.subr.mxu0 0.0
      %1587 = vmatpush1.msra.mxu0 %v1234
      %1588 = vmatprep.subr.mxu0 0.0
      %1589 = vmatpush1.msra.mxu0 %v1235
      %1590 = vmatprep.subr.mxu0 0.0
      %1591 = vmatpush1.msra.mxu0 %v1236
      %1592 = vmatprep.subr.mxu0 0.0
      %1593 = vmatpush1.msra.mxu0 %v1237
      %1594 = vmatprep.subr.mxu0 0.0
      %1595 = vmatpush1.msra.mxu0 %v1238
      %1596 = vmatprep.subr.mxu0 0.0
      %1597 = vmatpush1.msra.mxu0 %v1239
      %1598 = vmatprep.subr.mxu0 0.0
      %1599 = vmatpush1.msra.mxu0 %v1240
      %1600 = vmatprep.subr.mxu0 0.0
      %1601 = vmatpush1.msra.mxu0 %v1241
      %1602 = vmatprep.subr.mxu0 0.0
      %1603 = vmatpush1.msra.mxu0 %v1242
      %1604 = vmatprep.subr.mxu0 0.0
      %1605 = vmatpush1.msra.mxu0 %v1243
      %1606 = vmatprep.subr.mxu0 0.0
      %1607 = vmatpush1.msra.mxu0 %v1244
      %1608 = vmatprep.subr.mxu0 0.0
      %1609 = vmatpush1.msra.mxu0 %v1245
      %1610 = vmatprep.subr.mxu0 0.0
      %1611 = vmatpush1.msra.mxu0 %v1246
      %1612 = vmatprep.subr.mxu0 0.0
      %1613 = vmatpush1.msra.mxu0 %v1247
      %1614 = vmatprep.subr.mxu0 0.0
      %1615 = vmatpush1.msra.mxu0 %v1248
      %1616 = vmatprep.subr.mxu0 0.0
      %1617 = vmatpush1.msra.mxu0 %v1249
      %1618 = vmatprep.subr.mxu0 0.0
      %1619 = vmatpush1.msra.mxu0 %v1250
      %1620 = vmatprep.subr.mxu0 0.0
      %1621 = vmatpush1.msra.mxu0 %v1251
      %1622 = vmatprep.subr.mxu0 0.0
      %1623 = vmatpush1.msra.mxu0 %v1252
      %1624 = vmatprep.subr.mxu0 0.0
      %1625 = vmatpush1.msra.mxu0 %v1253
      %1626 = vmatprep.subr.mxu0 0.0
      %1627 = vmatpush1.msra.mxu0 %v1254
      %1628 = vmatprep.subr.mxu0 0.0
      %1629 = vmatpush1.msra.mxu0 %v1255
      %1630 = vmatprep.subr.mxu0 0.0
      %1631 = vmatpush1.msra.mxu0 %v1256
      %1632 = vmatprep.subr.mxu0 0.0
      %1633 = vmatpush1.msra.mxu0 %v1257
      %1634 = vmatprep.mubr.f32.mxu0 %v909
      %1635 = vmatmul.mubr.f32.gmra.mrb[0].mxu0 %v908
      %v1636 = vpop.f32.mrb[0].mxu0
      %v1637 = vadd.f32 %v1412, %v1636
      %v1638 = vpop.f32.mrb[0].mxu0
      %1639 = vmatprep.mubr.f32.mxu0 %v918
      %1640 = vmatmul.mubr.f32.gmra.mrb[0].mxu0 %v917
      %v1641 = vpop.f32.mrb[0].mxu0
      %v1642 = vadd.f32 %v1417, %v1641
      %v1643 = vpop.f32.mrb[0].mxu0
      %1644 = vmatprep.mubr.f32.mxu0 %v927
      %1645 = vmatmul.mubr.f32.gmra.mrb[0].mxu0 %v926
      %v1646 = vpop.f32.mrb[0].mxu0
      %v1647 = vadd.f32 %v1422, %v1646
      %v1648 = vpop.f32.mrb[0].mxu0
      %1649 = vmatprep.mubr.f32.mxu0 %v936
      %1650 = vmatmul.mubr.f32.gmra.mrb[0].mxu0 %v935
      %v1651 = vpop.f32.mrb[0].mxu0
      %v1652 = vadd.f32 %v1427, %v1651
      %v1653 = vpop.f32.mrb[0].mxu0
      %1654 = vmatprep.mubr.f32.mxu0 %v945
      %1655 = vmatmul.mubr.f32.gmra.mrb[0].mxu0 %v944
      %v1656 = vpop.f32.mrb[0].mxu0
      %v1657 = vadd.f32 %v1432, %v1656
      %v1658 = vpop.f32.mrb[0].mxu0
      %1659 = vmatprep.mubr.f32.mxu0 %v954
      %1660 = vmatmul.mubr.f32.gmra.mrb[0].mxu0 %v953
      %v1661 = vpop.f32.mrb[0].mxu0
      %v1662 = vadd.f32 %v1437, %v1661
      %v1663 = vpop.f32.mrb[0].mxu0
      %1664 = vmatprep.mubr.f32.mxu0 %v963
      %1665 = vmatmul.mubr.f32.gmra.mrb[0].mxu0 %v962
      %v1666 = vpop.f32.mrb[0].mxu0
      %v1667 = vadd.f32 %v1442, %v1666
      %v1668 = vpop.f32.mrb[0].mxu0
      %1669 = vmatprep.mubr.f32.mxu0 %v972
      %1670 = vmatmul.mubr.f32.gmra.mrb[0].mxu0 %v971
      %v1671 = vpop.f32.mrb[0].mxu0
      %v1672 = vadd.f32 %v1447, %v1671
      %v1673 = vpop.f32.mrb[0].mxu0
      %1674 = vmatprep.mubr.f32.mxu0 %v981
      %1675 = vmatmul.mubr.f32.gmra.mrb[0].mxu0 %v980
      %v1676 = vpop.f32.mrb[0].mxu0
      %v1677 = vadd.f32 %v1452, %v1676
      %v1678 = vpop.f32.mrb[0].mxu0
      %1679 = vmatprep.mubr.f32.mxu0 %v990
      %1680 = vmatmul.mubr.f32.gmra.mrb[0].mxu0 %v989
      %v1681 = vpop.f32.mrb[0].mxu0
      %v1682 = vadd.f32 %v1457, %v1681
      %v1683 = vpop.f32.mrb[0].mxu0
      %1684 = vmatprep.mubr.f32.mxu0 %v999
      %1685 = vmatmul.mubr.f32.gmra.mrb[0].mxu0 %v998
      %v1686 = vpop.f32.mrb[0].mxu0
      %v1687 = vadd.f32 %v1462, %v1686
      %v1688 = vpop.f32.mrb[0].mxu0
      %1689 = vmatprep.mubr.f32.mxu0 %v1008
      %1690 = vmatmul.mubr.f32.gmra.mrb[0].mxu0 %v1007
      %v1691 = vpop.f32.mrb[0].mxu0
      %v1692 = vadd.f32 %v1467, %v1691
      %v1693 = vpop.f32.mrb[0].mxu0
      %1694 = vmatprep.mubr.f32.mxu0 %v1017
      %1695 = vmatmul.mubr.f32.gmra.mrb[0].mxu0 %v1016
      %v1696 = vpop.f32.mrb[0].mxu0
      %v1697 = vadd.f32 %v1472, %v1696
      %v1698 = vpop.f32.mrb[0].mxu0
      %1699 = vmatprep.mubr.f32.mxu0 %v1026
      %1700 = vmatmul.mubr.f32.gmra.mrb[0].mxu0 %v1025
      %v1701 = vpop.f32.mrb[0].mxu0
      %v1702 = vadd.f32 %v1477, %v1701
      %v1703 = vpop.f32.mrb[0].mxu0
      %1704 = vmatprep.mubr.f32.mxu0 %v1035
      %1705 = vmatmul.mubr.f32.gmra.mrb[0].mxu0 %v1034
      %v1706 = vpop.f32.mrb[0].mxu0
      %v1707 = vadd.f32 %v1482, %v1706
      %v1708 = vpop.f32.mrb[0].mxu0
      %1709 = vmatprep.mubr.f32.mxu0 %v1044
      %1710 = vmatmul.mubr.f32.gmra.mrb[0].mxu0 %v1043
      %v1711 = vpop.f32.mrb[0].mxu0
      %v1712 = vadd.f32 %v1487, %v1711
      %v1713 = vpop.f32.mrb[0].mxu0
      %1714 = vmatprep.mubr.f32.mxu0 %v1053
      %1715 = vmatmul.mubr.f32.gmra.mrb[0].mxu0 %v1052
      %v1716 = vpop.f32.mrb[0].mxu0
      %v1717 = vadd.f32 %v1492, %v1716
      %v1718 = vpop.f32.mrb[0].mxu0
      %1719 = vmatprep.mubr.f32.mxu0 %v1062
      %1720 = vmatmul.mubr.f32.gmra.mrb[0].mxu0 %v1061
      %v1721 = vpop.f32.mrb[0].mxu0
      %v1722 = vadd.f32 %v1497, %v1721
      %v1723 = vpop.f32.mrb[0].mxu0
      %1724 = vmatprep.mubr.f32.mxu0 %v1071
      %1725 = vmatmul.mubr.f32.gmra.mrb[0].mxu0 %v1070
      %v1726 = vpop.f32.mrb[0].mxu0
      %v1727 = vadd.f32 %v1502, %v1726
      %v1728 = vpop.f32.mrb[0].mxu0
      %1729 = vmatprep.mubr.f32.mxu0 %v1080
      %1730 = vmatmul.mubr.f32.gmra.mrb[0].mxu0 %v1079
      %v1731 = vpop.f32.mrb[0].mxu0
      %v1732 = vadd.f32 %v1507, %v1731
      %v1733 = vpop.f32.mrb[0].mxu0
      %1734 = vmatprep.mubr.f32.mxu0 %v1089
      %1735 = vmatmul.mubr.f32.gmra.mrb[0].mxu0 %v1088
      %v1736 = vpop.f32.mrb[0].mxu0
      %v1737 = vadd.f32 %v1512, %v1736
      %v1738 = vpop.f32.mrb[0].mxu0
      %1739 = vmatprep.mubr.f32.mxu0 %v1098
      %1740 = vmatmul.mubr.f32.gmra.mrb[0].mxu0 %v1097
      %v1741 = vpop.f32.mrb[0].mxu0
      %v1742 = vadd.f32 %v1517, %v1741
      %v1743 = vpop.f32.mrb[0].mxu0
      %1744 = vmatprep.mubr.f32.mxu0 %v1107
      %1745 = vmatmul.mubr.f32.gmra.mrb[0].mxu0 %v1106
      %v1746 = vpop.f32.mrb[0].mxu0
      %v1747 = vadd.f32 %v1522, %v1746
      %v1748 = vpop.f32.mrb[0].mxu0
      %1749 = vmatprep.mubr.f32.mxu0 %v1116
      %1750 = vmatmul.mubr.f32.gmra.mrb[0].mxu0 %v1115
      %v1751 = vpop.f32.mrb[0].mxu0
      %v1752 = vadd.f32 %v1527, %v1751
      %v1753 = vpop.f32.mrb[0].mxu0
      %1754 = vmatprep.mubr.f32.mxu0 %v1125
      %1755 = vmatmul.mubr.f32.gmra.mrb[0].mxu0 %v1124
      %v1756 = vpop.f32.mrb[0].mxu0
      %v1757 = vadd.f32 %v1532, %v1756
      %v1758 = vpop.f32.mrb[0].mxu0
      %1759 = vmatprep.mubr.f32.mxu0 %v1134
      %1760 = vmatmul.mubr.f32.gmra.mrb[0].mxu0 %v1133
      %v1761 = vpop.f32.mrb[0].mxu0
      %v1762 = vadd.f32 %v1537, %v1761
      %v1763 = vpop.f32.mrb[0].mxu0
      %1764 = vmatprep.mubr.f32.mxu0 %v1143
      %1765 = vmatmul.mubr.f32.gmra.mrb[0].mxu0 %v1142
      %v1766 = vpop.f32.mrb[0].mxu0
      %v1767 = vadd.f32 %v1542, %v1766
      %v1768 = vpop.f32.mrb[0].mxu0
      %1769 = vmatprep.mubr.f32.mxu0 %v1152
      %1770 = vmatmul.mubr.f32.gmra.mrb[0].mxu0 %v1151
      %v1771 = vpop.f32.mrb[0].mxu0
      %v1772 = vadd.f32 %v1547, %v1771
      %v1773 = vpop.f32.mrb[0].mxu0
      %1774 = vmatprep.mubr.f32.mxu0 %v1161
      %1775 = vmatmul.mubr.f32.gmra.mrb[0].mxu0 %v1160
      %v1776 = vpop.f32.mrb[0].mxu0
      %v1777 = vadd.f32 %v1552, %v1776
      %v1778 = vpop.f32.mrb[0].mxu0
      %1779 = vmatprep.mubr.f32.mxu0 %v1170
      %1780 = vmatmul.mubr.f32.gmra.mrb[0].mxu0 %v1169
      %v1781 = vpop.f32.mrb[0].mxu0
      %v1782 = vadd.f32 %v1557, %v1781
      %v1783 = vpop.f32.mrb[0].mxu0
      %1784 = vmatprep.mubr.f32.mxu0 %v1179
      %1785 = vmatmul.mubr.f32.gmra.mrb[0].mxu0 %v1178
      %v1786 = vpop.f32.mrb[0].mxu0
      %v1787 = vadd.f32 %v1562, %v1786
      %v1788 = vpop.f32.mrb[0].mxu0
      %1789 = vmatprep.mubr.f32.mxu0 %v1188
      %1790 = vmatmul.mubr.f32.gmra.mrb[0].mxu0 %v1187
      %v1791 = vpop.f32.mrb[0].mxu0
      %v1792 = vadd.f32 %v1567, %v1791
      %v1793 = vpop.f32.mrb[0].mxu0
      %1794 = vdwg.mxu0
      %1795 = vmatprep.subr.mxu0 0.0
      %1796 = vmatpush1.msra.mxu0 %v1258
      %1797 = vmatprep.subr.mxu0 0.0
      %1798 = vmatpush1.msra.mxu0 %v1259
      %1799 = vmatprep.subr.mxu0 0.0
      %1800 = vmatpush1.msra.mxu0 %v1260
      %1801 = vmatprep.subr.mxu0 0.0
      %1802 = vmatpush1.msra.mxu0 %v1261
      %1803 = vmatprep.subr.mxu0 0.0
      %1804 = vmatpush1.msra.mxu0 %v1262
      %1805 = vmatprep.subr.mxu0 0.0
      %1806 = vmatpush1.msra.mxu0 %v1263
      %1807 = vmatprep.subr.mxu0 0.0
      %1808 = vmatpush1.msra.mxu0 %v1264
      %1809 = vmatprep.subr.mxu0 0.0
      %1810 = vmatpush1.msra.mxu0 %v1265
      %1811 = vmatprep.subr.mxu0 0.0
      %1812 = vmatpush1.msra.mxu0 %v1266
      %1813 = vmatprep.subr.mxu0 0.0
      %1814 = vmatpush1.msra.mxu0 %v1267
      %1815 = vmatprep.subr.mxu0 0.0
      %1816 = vmatpush1.msra.mxu0 %v1268
      %1817 = vmatprep.subr.mxu0 0.0
      %1818 = vmatpush1.msra.mxu0 %v1269
      %1819 = vmatprep.subr.mxu0 0.0
      %1820 = vmatpush1.msra.mxu0 %v1270
      %1821 = vmatprep.subr.mxu0 0.0
      %1822 = vmatpush1.msra.mxu0 %v1271
      %1823 = vmatprep.subr.mxu0 0.0
      %1824 = vmatpush1.msra.mxu0 %v1272
      %1825 = vmatprep.subr.mxu0 0.0
      %1826 = vmatpush1.msra.mxu0 %v1273
      %1827 = vmatprep.subr.mxu0 0.0
      %1828 = vmatpush1.msra.mxu0 %v1274
      %1829 = vmatprep.subr.mxu0 0.0
      %1830 = vmatpush1.msra.mxu0 %v1275
      %1831 = vmatprep.subr.mxu0 0.0
      %1832 = vmatpush1.msra.mxu0 %v1276
      %1833 = vmatprep.subr.mxu0 0.0
      %1834 = vmatpush1.msra.mxu0 %v1277
      %1835 = vmatprep.subr.mxu0 0.0
      %1836 = vmatpush1.msra.mxu0 %v1278
      %1837 = vmatprep.subr.mxu0 0.0
      %1838 = vmatpush1.msra.mxu0 %v1279
      %1839 = vmatprep.subr.mxu0 0.0
      %1840 = vmatpush1.msra.mxu0 %v1280
      %1841 = vmatprep.subr.mxu0 0.0
      %1842 = vmatpush1.msra.mxu0 %v1281
      %1843 = vmatprep.subr.mxu0 0.0
      %1844 = vmatpush1.msra.mxu0 %v1282
      %1845 = vmatprep.subr.mxu0 0.0
      %1846 = vmatpush1.msra.mxu0 %v1283
      %1847 = vmatprep.subr.mxu0 0.0
      %1848 = vmatpush1.msra.mxu0 %v1284
      %1849 = vmatprep.subr.mxu0 0.0
      %1850 = vmatpush1.msra.mxu0 %v1285
      %1851 = vmatprep.subr.mxu0 0.0
      %1852 = vmatpush1.msra.mxu0 %v1286
      %1853 = vmatprep.subr.mxu0 0.0
      %1854 = vmatpush1.msra.mxu0 %v1287
      %1855 = vmatprep.subr.mxu0 0.0
      %1856 = vmatpush1.msra.mxu0 %v1288
      %1857 = vmatprep.subr.mxu0 0.0
      %1858 = vmatpush1.msra.mxu0 %v1289
      %1859 = vmatprep.mubr.f32.mxu0 %v911
      %1860 = vmatmul.mubr.f32.gmra.mrb[0].mxu0 %v910
      %v1861 = vpop.f32.mrb[0].mxu0
      %v1862 = vadd.f32 %v1637, %v1861
      %v1863 = vpop.f32.mrb[0].mxu0
      %1864 = vmatprep.mubr.f32.mxu0 %v920
      %1865 = vmatmul.mubr.f32.gmra.mrb[0].mxu0 %v919
      %v1866 = vpop.f32.mrb[0].mxu0
      %v1867 = vadd.f32 %v1642, %v1866
      %v1868 = vpop.f32.mrb[0].mxu0
      %1869 = vmatprep.mubr.f32.mxu0 %v929
      %1870 = vmatmul.mubr.f32.gmra.mrb[0].mxu0 %v928
      %v1871 = vpop.f32.mrb[0].mxu0
      %v1872 = vadd.f32 %v1647, %v1871
      %v1873 = vpop.f32.mrb[0].mxu0
      %1874 = vmatprep.mubr.f32.mxu0 %v938
      %1875 = vmatmul.mubr.f32.gmra.mrb[0].mxu0 %v937
      %v1876 = vpop.f32.mrb[0].mxu0
      %v1877 = vadd.f32 %v1652, %v1876
      %v1878 = vpop.f32.mrb[0].mxu0
      %1879 = vmatprep.mubr.f32.mxu0 %v947
      %1880 = vmatmul.mubr.f32.gmra.mrb[0].mxu0 %v946
      %v1881 = vpop.f32.mrb[0].mxu0
      %v1882 = vadd.f32 %v1657, %v1881
      %v1883 = vpop.f32.mrb[0].mxu0
      %1884 = vmatprep.mubr.f32.mxu0 %v956
      %1885 = vmatmul.mubr.f32.gmra.mrb[0].mxu0 %v955
      %v1886 = vpop.f32.mrb[0].mxu0
      %v1887 = vadd.f32 %v1662, %v1886
      %v1888 = vpop.f32.mrb[0].mxu0
      %1889 = vmatprep.mubr.f32.mxu0 %v965
      %1890 = vmatmul.mubr.f32.gmra.mrb[0].mxu0 %v964
      %v1891 = vpop.f32.mrb[0].mxu0
      %v1892 = vadd.f32 %v1667, %v1891
      %v1893 = vpop.f32.mrb[0].mxu0
      %1894 = vmatprep.mubr.f32.mxu0 %v974
      %1895 = vmatmul.mubr.f32.gmra.mrb[0].mxu0 %v973
      %v1896 = vpop.f32.mrb[0].mxu0
      %v1897 = vadd.f32 %v1672, %v1896
      %v1898 = vpop.f32.mrb[0].mxu0
      %1899 = vmatprep.mubr.f32.mxu0 %v983
      %1900 = vmatmul.mubr.f32.gmra.mrb[0].mxu0 %v982
      %v1901 = vpop.f32.mrb[0].mxu0
      %v1902 = vadd.f32 %v1677, %v1901
      %v1903 = vpop.f32.mrb[0].mxu0
      %1904 = vmatprep.mubr.f32.mxu0 %v992
      %1905 = vmatmul.mubr.f32.gmra.mrb[0].mxu0 %v991
      %v1906 = vpop.f32.mrb[0].mxu0
      %v1907 = vadd.f32 %v1682, %v1906
      %v1908 = vpop.f32.mrb[0].mxu0
      %1909 = vmatprep.mubr.f32.mxu0 %v1001
      %1910 = vmatmul.mubr.f32.gmra.mrb[0].mxu0 %v1000
      %v1911 = vpop.f32.mrb[0].mxu0
      %v1912 = vadd.f32 %v1687, %v1911
      %v1913 = vpop.f32.mrb[0].mxu0
      %1914 = vmatprep.mubr.f32.mxu0 %v1010
      %1915 = vmatmul.mubr.f32.gmra.mrb[0].mxu0 %v1009
      %v1916 = vpop.f32.mrb[0].mxu0
      %v1917 = vadd.f32 %v1692, %v1916
      %v1918 = vpop.f32.mrb[0].mxu0
      %1919 = vmatprep.mubr.f32.mxu0 %v1019
      %1920 = vmatmul.mubr.f32.gmra.mrb[0].mxu0 %v1018
      %v1921 = vpop.f32.mrb[0].mxu0
      %v1922 = vadd.f32 %v1697, %v1921
      %v1923 = vpop.f32.mrb[0].mxu0
      %1924 = vmatprep.mubr.f32.mxu0 %v1028
      %1925 = vmatmul.mubr.f32.gmra.mrb[0].mxu0 %v1027
      %v1926 = vpop.f32.mrb[0].mxu0
      %v1927 = vadd.f32 %v1702, %v1926
      %v1928 = vpop.f32.mrb[0].mxu0
      %1929 = vmatprep.mubr.f32.mxu0 %v1037
      %1930 = vmatmul.mubr.f32.gmra.mrb[0].mxu0 %v1036
      %v1931 = vpop.f32.mrb[0].mxu0
      %v1932 = vadd.f32 %v1707, %v1931
      %v1933 = vpop.f32.mrb[0].mxu0
      %1934 = vmatprep.mubr.f32.mxu0 %v1046
      %1935 = vmatmul.mubr.f32.gmra.mrb[0].mxu0 %v1045
      %v1936 = vpop.f32.mrb[0].mxu0
      %v1937 = vadd.f32 %v1712, %v1936
      %v1938 = vpop.f32.mrb[0].mxu0
      %1939 = vmatprep.mubr.f32.mxu0 %v1055
      %1940 = vmatmul.mubr.f32.gmra.mrb[0].mxu0 %v1054
      %v1941 = vpop.f32.mrb[0].mxu0
      %v1942 = vadd.f32 %v1717, %v1941
      %v1943 = vpop.f32.mrb[0].mxu0
      %1944 = vmatprep.mubr.f32.mxu0 %v1064
      %1945 = vmatmul.mubr.f32.gmra.mrb[0].mxu0 %v1063
      %v1946 = vpop.f32.mrb[0].mxu0
      %v1947 = vadd.f32 %v1722, %v1946
      %v1948 = vpop.f32.mrb[0].mxu0
      %1949 = vmatprep.mubr.f32.mxu0 %v1073
      %1950 = vmatmul.mubr.f32.gmra.mrb[0].mxu0 %v1072
      %v1951 = vpop.f32.mrb[0].mxu0
      %v1952 = vadd.f32 %v1727, %v1951
      %v1953 = vpop.f32.mrb[0].mxu0
      %1954 = vmatprep.mubr.f32.mxu0 %v1082
      %1955 = vmatmul.mubr.f32.gmra.mrb[0].mxu0 %v1081
      %v1956 = vpop.f32.mrb[0].mxu0
      %v1957 = vadd.f32 %v1732, %v1956
      %v1958 = vpop.f32.mrb[0].mxu0
      %1959 = vmatprep.mubr.f32.mxu0 %v1091
      %1960 = vmatmul.mubr.f32.gmra.mrb[0].mxu0 %v1090
      %v1961 = vpop.f32.mrb[0].mxu0
      %v1962 = vadd.f32 %v1737, %v1961
      %v1963 = vpop.f32.mrb[0].mxu0
      %1964 = vmatprep.mubr.f32.mxu0 %v1100
      %1965 = vmatmul.mubr.f32.gmra.mrb[0].mxu0 %v1099
      %v1966 = vpop.f32.mrb[0].mxu0
      %v1967 = vadd.f32 %v1742, %v1966
      %v1968 = vpop.f32.mrb[0].mxu0
      %1969 = vmatprep.mubr.f32.mxu0 %v1109
      %1970 = vmatmul.mubr.f32.gmra.mrb[0].mxu0 %v1108
      %v1971 = vpop.f32.mrb[0].mxu0
      %v1972 = vadd.f32 %v1747, %v1971
      %v1973 = vpop.f32.mrb[0].mxu0
      %1974 = vmatprep.mubr.f32.mxu0 %v1118
      %1975 = vmatmul.mubr.f32.gmra.mrb[0].mxu0 %v1117
      %v1976 = vpop.f32.mrb[0].mxu0
      %v1977 = vadd.f32 %v1752, %v1976
      %v1978 = vpop.f32.mrb[0].mxu0
      %1979 = vmatprep.mubr.f32.mxu0 %v1127
      %1980 = vmatmul.mubr.f32.gmra.mrb[0].mxu0 %v1126
      %v1981 = vpop.f32.mrb[0].mxu0
      %v1982 = vadd.f32 %v1757, %v1981
      %v1983 = vpop.f32.mrb[0].mxu0
      %1984 = vmatprep.mubr.f32.mxu0 %v1136
      %1985 = vmatmul.mubr.f32.gmra.mrb[0].mxu0 %v1135
      %v1986 = vpop.f32.mrb[0].mxu0
      %v1987 = vadd.f32 %v1762, %v1986
      %v1988 = vpop.f32.mrb[0].mxu0
      %1989 = vmatprep.mubr.f32.mxu0 %v1145
      %1990 = vmatmul.mubr.f32.gmra.mrb[0].mxu0 %v1144
      %v1991 = vpop.f32.mrb[0].mxu0
      %v1992 = vadd.f32 %v1767, %v1991
      %v1993 = vpop.f32.mrb[0].mxu0
      %1994 = vmatprep.mubr.f32.mxu0 %v1154
      %1995 = vmatmul.mubr.f32.gmra.mrb[0].mxu0 %v1153
      %v1996 = vpop.f32.mrb[0].mxu0
      %v1997 = vadd.f32 %v1772, %v1996
      %v1998 = vpop.f32.mrb[0].mxu0
      %1999 = vmatprep.mubr.f32.mxu0 %v1163
      %2000 = vmatmul.mubr.f32.gmra.mrb[0].mxu0 %v1162
      %v2001 = vpop.f32.mrb[0].mxu0
      %v2002 = vadd.f32 %v1777, %v2001
      %v2003 = vpop.f32.mrb[0].mxu0
      %2004 = vmatprep.mubr.f32.mxu0 %v1172
      %2005 = vmatmul.mubr.f32.gmra.mrb[0].mxu0 %v1171
      %v2006 = vpop.f32.mrb[0].mxu0
      %v2007 = vadd.f32 %v1782, %v2006
      %v2008 = vpop.f32.mrb[0].mxu0
      %2009 = vmatprep.mubr.f32.mxu0 %v1181
      %2010 = vmatmul.mubr.f32.gmra.mrb[0].mxu0 %v1180
      %v2011 = vpop.f32.mrb[0].mxu0
      %v2012 = vadd.f32 %v1787, %v2011
      %v2013 = vpop.f32.mrb[0].mxu0
      %2014 = vmatprep.mubr.f32.mxu0 %v1190
      %2015 = vmatmul.mubr.f32.gmra.mrb[0].mxu0 %v1189
      %v2016 = vpop.f32.mrb[0].mxu0
      %v2017 = vadd.f32 %v1792, %v2016
      %v2018 = vpop.f32.mrb[0].mxu0
      %2019 = vdwg.mxu0
      %2020 = vmatprep.subr.mxu0 0.0
      %2021 = vmatpush1.msra.mxu0 %v1290
      %2022 = vmatprep.subr.mxu0 0.0
      %2023 = vmatpush1.msra.mxu0 %v1291
      %2024 = vmatprep.subr.mxu0 0.0
      %2025 = vmatpush1.msra.mxu0 %v1292
      %2026 = vmatprep.subr.mxu0 0.0
      %2027 = vmatpush1.msra.mxu0 %v1293
      %2028 = vmatprep.subr.mxu0 0.0
      %2029 = vmatpush1.msra.mxu0 %v1294
      %2030 = vmatprep.subr.mxu0 0.0
      %2031 = vmatpush1.msra.mxu0 %v1295
      %2032 = vmatprep.subr.mxu0 0.0
      %2033 = vmatpush1.msra.mxu0 %v1296
      %2034 = vmatprep.subr.mxu0 0.0
      %2035 = vmatpush1.msra.mxu0 %v1297
      %2036 = vmatprep.subr.mxu0 0.0
      %2037 = vmatpush1.msra.mxu0 %v1298
      %2038 = vmatprep.subr.mxu0 0.0
      %2039 = vmatpush1.msra.mxu0 %v1299
      %2040 = vmatprep.subr.mxu0 0.0
      %2041 = vmatpush1.msra.mxu0 %v1300
      %2042 = vmatprep.subr.mxu0 0.0
      %2043 = vmatpush1.msra.mxu0 %v1301
      %2044 = vmatprep.subr.mxu0 0.0
      %2045 = vmatpush1.msra.mxu0 %v1302
      %2046 = vmatprep.subr.mxu0 0.0
      %2047 = vmatpush1.msra.mxu0 %v1303
      %2048 = vmatprep.subr.mxu0 0.0
      %2049 = vmatpush1.msra.mxu0 %v1304
      %2050 = vmatprep.subr.mxu0 0.0
      %2051 = vmatpush1.msra.mxu0 %v1305
      %2052 = vmatprep.subr.mxu0 0.0
      %2053 = vmatpush1.msra.mxu0 %v1306
      %2054 = vmatprep.subr.mxu0 0.0
      %2055 = vmatpush1.msra.mxu0 %v1307
      %2056 = vmatprep.subr.mxu0 0.0
      %2057 = vmatpush1.msra.mxu0 %v1308
      %2058 = vmatprep.subr.mxu0 0.0
      %2059 = vmatpush1.msra.mxu0 %v1309
      %2060 = vmatprep.subr.mxu0 0.0
      %2061 = vmatpush1.msra.mxu0 %v1310
      %2062 = vmatprep.subr.mxu0 0.0
      %2063 = vmatpush1.msra.mxu0 %v1311
      %2064 = vmatprep.subr.mxu0 0.0
      %2065 = vmatpush1.msra.mxu0 %v1312
      %2066 = vmatprep.subr.mxu0 0.0
      %2067 = vmatpush1.msra.mxu0 %v1313
      %2068 = vmatprep.subr.mxu0 0.0
      %2069 = vmatpush1.msra.mxu0 %v1314
      %2070 = vmatprep.subr.mxu0 0.0
      %2071 = vmatpush1.msra.mxu0 %v1315
      %2072 = vmatprep.subr.mxu0 0.0
      %2073 = vmatpush1.msra.mxu0 %v1316
      %2074 = vmatprep.subr.mxu0 0.0
      %2075 = vmatpush1.msra.mxu0 %v1317
      %2076 = vmatprep.subr.mxu0 0.0
      %2077 = vmatpush1.msra.mxu0 %v1318
      %2078 = vmatprep.subr.mxu0 0.0
      %2079 = vmatpush1.msra.mxu0 %v1319
      %2080 = vmatprep.subr.mxu0 0.0
      %2081 = vmatpush1.msra.mxu0 %v1320
      %2082 = vmatprep.subr.mxu0 0.0
      %2083 = vmatpush1.msra.mxu0 %v1321
      %2084 = vmatprep.mubr.f32.mxu0 %v913
      %2085 = vmatmul.mubr.f32.gmra.mrb[0].mxu0 %v912
      %v2086 = vpop.f32.mrb[0].mxu0
      %v2087 = vadd.f32 %v1862, %v2086
      %v2088 = vpop.f32.mrb[0].mxu0
      %2089 = vmatprep.mubr.f32.mxu0 %v922
      %2090 = vmatmul.mubr.f32.gmra.mrb[0].mxu0 %v921
      %v2091 = vpop.f32.mrb[0].mxu0
      %v2092 = vadd.f32 %v1867, %v2091
      %v2093 = vpop.f32.mrb[0].mxu0
      %2094 = vmatprep.mubr.f32.mxu0 %v931
      %2095 = vmatmul.mubr.f32.gmra.mrb[0].mxu0 %v930
      %v2096 = vpop.f32.mrb[0].mxu0
      %v2097 = vadd.f32 %v1872, %v2096
      %v2098 = vpop.f32.mrb[0].mxu0
      %2099 = vmatprep.mubr.f32.mxu0 %v940
      %2100 = vmatmul.mubr.f32.gmra.mrb[0].mxu0 %v939
      %v2101 = vpop.f32.mrb[0].mxu0
      %v2102 = vadd.f32 %v1877, %v2101
      %v2103 = vpop.f32.mrb[0].mxu0
      %2104 = vmatprep.mubr.f32.mxu0 %v949
      %2105 = vmatmul.mubr.f32.gmra.mrb[0].mxu0 %v948
      %v2106 = vpop.f32.mrb[0].mxu0
      %v2107 = vadd.f32 %v1882, %v2106
      %v2108 = vpop.f32.mrb[0].mxu0
      %2109 = vmatprep.mubr.f32.mxu0 %v958
      %2110 = vmatmul.mubr.f32.gmra.mrb[0].mxu0 %v957
      %v2111 = vpop.f32.mrb[0].mxu0
      %v2112 = vadd.f32 %v1887, %v2111
      %v2113 = vpop.f32.mrb[0].mxu0
      %2114 = vmatprep.mubr.f32.mxu0 %v967
      %2115 = vmatmul.mubr.f32.gmra.mrb[0].mxu0 %v966
      %v2116 = vpop.f32.mrb[0].mxu0
      %v2117 = vadd.f32 %v1892, %v2116
      %v2118 = vpop.f32.mrb[0].mxu0
      %2119 = vmatprep.mubr.f32.mxu0 %v976
      %2120 = vmatmul.mubr.f32.gmra.mrb[0].mxu0 %v975
      %v2121 = vpop.f32.mrb[0].mxu0
      %v2122 = vadd.f32 %v1897, %v2121
      %v2123 = vpop.f32.mrb[0].mxu0
      %2124 = vmatprep.mubr.f32.mxu0 %v985
      %2125 = vmatmul.mubr.f32.gmra.mrb[0].mxu0 %v984
      %v2126 = vpop.f32.mrb[0].mxu0
      %v2127 = vadd.f32 %v1902, %v2126
      %v2128 = vpop.f32.mrb[0].mxu0
      %2129 = vmatprep.mubr.f32.mxu0 %v994
      %2130 = vmatmul.mubr.f32.gmra.mrb[0].mxu0 %v993
      %v2131 = vpop.f32.mrb[0].mxu0
      %v2132 = vadd.f32 %v1907, %v2131
      %v2133 = vpop.f32.mrb[0].mxu0
      %2134 = vmatprep.mubr.f32.mxu0 %v1003
      %2135 = vmatmul.mubr.f32.gmra.mrb[0].mxu0 %v1002
      %v2136 = vpop.f32.mrb[0].mxu0
      %v2137 = vadd.f32 %v1912, %v2136
      %v2138 = vpop.f32.mrb[0].mxu0
      %2139 = vmatprep.mubr.f32.mxu0 %v1012
      %2140 = vmatmul.mubr.f32.gmra.mrb[0].mxu0 %v1011
      %v2141 = vpop.f32.mrb[0].mxu0
      %v2142 = vadd.f32 %v1917, %v2141
      %v2143 = vpop.f32.mrb[0].mxu0
      %2144 = vmatprep.mubr.f32.mxu0 %v1021
      %2145 = vmatmul.mubr.f32.gmra.mrb[0].mxu0 %v1020
      %v2146 = vpop.f32.mrb[0].mxu0
      %v2147 = vadd.f32 %v1922, %v2146
      %v2148 = vpop.f32.mrb[0].mxu0
      %2149 = vmatprep.mubr.f32.mxu0 %v1030
      %2150 = vmatmul.mubr.f32.gmra.mrb[0].mxu0 %v1029
      %v2151 = vpop.f32.mrb[0].mxu0
      %v2152 = vadd.f32 %v1927, %v2151
      %v2153 = vpop.f32.mrb[0].mxu0
      %2154 = vmatprep.mubr.f32.mxu0 %v1039
      %2155 = vmatmul.mubr.f32.gmra.mrb[0].mxu0 %v1038
      %v2156 = vpop.f32.mrb[0].mxu0
      %v2157 = vadd.f32 %v1932, %v2156
      %v2158 = vpop.f32.mrb[0].mxu0
      %2159 = vmatprep.mubr.f32.mxu0 %v1048
      %2160 = vmatmul.mubr.f32.gmra.mrb[0].mxu0 %v1047
      %v2161 = vpop.f32.mrb[0].mxu0
      %v2162 = vadd.f32 %v1937, %v2161
      %v2163 = vpop.f32.mrb[0].mxu0
      %2164 = vmatprep.mubr.f32.mxu0 %v1057
      %2165 = vmatmul.mubr.f32.gmra.mrb[0].mxu0 %v1056
      %v2166 = vpop.f32.mrb[0].mxu0
      %v2167 = vadd.f32 %v1942, %v2166
      %v2168 = vpop.f32.mrb[0].mxu0
      %2169 = vmatprep.mubr.f32.mxu0 %v1066
      %2170 = vmatmul.mubr.f32.gmra.mrb[0].mxu0 %v1065
      %v2171 = vpop.f32.mrb[0].mxu0
      %v2172 = vadd.f32 %v1947, %v2171
      %v2173 = vpop.f32.mrb[0].mxu0
      %2174 = vmatprep.mubr.f32.mxu0 %v1075
      %2175 = vmatmul.mubr.f32.gmra.mrb[0].mxu0 %v1074
      %v2176 = vpop.f32.mrb[0].mxu0
      %v2177 = vadd.f32 %v1952, %v2176
      %v2178 = vpop.f32.mrb[0].mxu0
      %2179 = vmatprep.mubr.f32.mxu0 %v1084
      %2180 = vmatmul.mubr.f32.gmra.mrb[0].mxu0 %v1083
      %v2181 = vpop.f32.mrb[0].mxu0
      %v2182 = vadd.f32 %v1957, %v2181
      %v2183 = vpop.f32.mrb[0].mxu0
      %2184 = vmatprep.mubr.f32.mxu0 %v1093
      %2185 = vmatmul.mubr.f32.gmra.mrb[0].mxu0 %v1092
      %v2186 = vpop.f32.mrb[0].mxu0
      %v2187 = vadd.f32 %v1962, %v2186
      %v2188 = vpop.f32.mrb[0].mxu0
      %2189 = vmatprep.mubr.f32.mxu0 %v1102
      %2190 = vmatmul.mubr.f32.gmra.mrb[0].mxu0 %v1101
      %v2191 = vpop.f32.mrb[0].mxu0
      %v2192 = vadd.f32 %v1967, %v2191
      %v2193 = vpop.f32.mrb[0].mxu0
      %2194 = vmatprep.mubr.f32.mxu0 %v1111
      %2195 = vmatmul.mubr.f32.gmra.mrb[0].mxu0 %v1110
      %v2196 = vpop.f32.mrb[0].mxu0
      %v2197 = vadd.f32 %v1972, %v2196
      %v2198 = vpop.f32.mrb[0].mxu0
      %2199 = vmatprep.mubr.f32.mxu0 %v1120
      %2200 = vmatmul.mubr.f32.gmra.mrb[0].mxu0 %v1119
      %v2201 = vpop.f32.mrb[0].mxu0
      %v2202 = vadd.f32 %v1977, %v2201
      %v2203 = vpop.f32.mrb[0].mxu0
      %2204 = vmatprep.mubr.f32.mxu0 %v1129
      %2205 = vmatmul.mubr.f32.gmra.mrb[0].mxu0 %v1128
      %v2206 = vpop.f32.mrb[0].mxu0
      %v2207 = vadd.f32 %v1982, %v2206
      %v2208 = vpop.f32.mrb[0].mxu0
      %2209 = vmatprep.mubr.f32.mxu0 %v1138
      %2210 = vmatmul.mubr.f32.gmra.mrb[0].mxu0 %v1137
      %v2211 = vpop.f32.mrb[0].mxu0
      %v2212 = vadd.f32 %v1987, %v2211
      %v2213 = vpop.f32.mrb[0].mxu0
      %2214 = vmatprep.mubr.f32.mxu0 %v1147
      %2215 = vmatmul.mubr.f32.gmra.mrb[0].mxu0 %v1146
      %v2216 = vpop.f32.mrb[0].mxu0
      %v2217 = vadd.f32 %v1992, %v2216
      %v2218 = vpop.f32.mrb[0].mxu0
      %2219 = vmatprep.mubr.f32.mxu0 %v1156
      %2220 = vmatmul.mubr.f32.gmra.mrb[0].mxu0 %v1155
      %v2221 = vpop.f32.mrb[0].mxu0
      %v2222 = vadd.f32 %v1997, %v2221
      %v2223 = vpop.f32.mrb[0].mxu0
      %2224 = vmatprep.mubr.f32.mxu0 %v1165
      %2225 = vmatmul.mubr.f32.gmra.mrb[0].mxu0 %v1164
      %v2226 = vpop.f32.mrb[0].mxu0
      %v2227 = vadd.f32 %v2002, %v2226
      %v2228 = vpop.f32.mrb[0].mxu0
      %2229 = vmatprep.mubr.f32.mxu0 %v1174
      %2230 = vmatmul.mubr.f32.gmra.mrb[0].mxu0 %v1173
      %v2231 = vpop.f32.mrb[0].mxu0
      %v2232 = vadd.f32 %v2007, %v2231
      %v2233 = vpop.f32.mrb[0].mxu0
      %2234 = vmatprep.mubr.f32.mxu0 %v1183
      %2235 = vmatmul.mubr.f32.gmra.mrb[0].mxu0 %v1182
      %v2236 = vpop.f32.mrb[0].mxu0
      %v2237 = vadd.f32 %v2012, %v2236
      %v2238 = vpop.f32.mrb[0].mxu0
      %2239 = vmatprep.mubr.f32.mxu0 %v1192
      %2240 = vmatmul.mubr.f32.gmra.mrb[0].mxu0 %v1191
      %v2241 = vpop.f32.mrb[0].mxu0
      %v2242 = vadd.f32 %v2017, %v2241
      %v2243 = vpop.f32.mrb[0].mxu0
      %2244 = vdwg.mxu0
      %2245 = vmatprep.subr.mxu0 0.0
      %2246 = vmatpush1.msra.mxu0 %v1322
      %2247 = vmatprep.subr.mxu0 0.0
      %2248 = vmatpush1.msra.mxu0 %v1323
      %2249 = vmatprep.subr.mxu0 0.0
      %2250 = vmatpush1.msra.mxu0 %v1324
      %2251 = vmatprep.subr.mxu0 0.0
      %2252 = vmatpush1.msra.mxu0 %v1325
      %2253 = vmatprep.subr.mxu0 0.0
      %2254 = vmatpush1.msra.mxu0 %v1326
      %2255 = vmatprep.subr.mxu0 0.0
      %2256 = vmatpush1.msra.mxu0 %v1327
      %2257 = vmatprep.subr.mxu0 0.0
      %2258 = vmatpush1.msra.mxu0 %v1328
      %2259 = vmatprep.subr.mxu0 0.0
      %2260 = vmatpush1.msra.mxu0 %v1329
      %2261 = vmatprep.subr.mxu0 0.0
      %2262 = vmatpush1.msra.mxu0 %v1330
      %2263 = vmatprep.subr.mxu0 0.0
      %2264 = vmatpush1.msra.mxu0 %v1331
      %2265 = vmatprep.subr.mxu0 0.0
      %2266 = vmatpush1.msra.mxu0 %v1332
      %2267 = vmatprep.subr.mxu0 0.0
      %2268 = vmatpush1.msra.mxu0 %v1333
      %2269 = vmatprep.subr.mxu0 0.0
      %2270 = vmatpush1.msra.mxu0 %v1334
      %2271 = vmatprep.subr.mxu0 0.0
      %2272 = vmatpush1.msra.mxu0 %v1335
      %2273 = vmatprep.subr.mxu0 0.0
      %2274 = vmatpush1.msra.mxu0 %v1336
      %2275 = vmatprep.subr.mxu0 0.0
      %2276 = vmatpush1.msra.mxu0 %v1337
      %2277 = vmatprep.subr.mxu0 0.0
      %2278 = vmatpush1.msra.mxu0 0.0
      %2279 = vmatprep.subr.mxu0 0.0
      %2280 = vmatpush1.msra.mxu0 0.0
      %2281 = vmatprep.subr.mxu0 0.0
      %2282 = vmatpush1.msra.mxu0 0.0
      %2283 = vmatprep.subr.mxu0 0.0
      %2284 = vmatpush1.msra.mxu0 0.0
      %2285 = vmatprep.subr.mxu0 0.0
      %2286 = vmatpush1.msra.mxu0 0.0
      %2287 = vmatprep.subr.mxu0 0.0
      %2288 = vmatpush1.msra.mxu0 0.0
      %2289 = vmatprep.subr.mxu0 0.0
      %2290 = vmatpush1.msra.mxu0 0.0
      %2291 = vmatprep.subr.mxu0 0.0
      %2292 = vmatpush1.msra.mxu0 0.0
      %2293 = vmatprep.subr.mxu0 0.0
      %2294 = vmatpush1.msra.mxu0 0.0
      %2295 = vmatprep.subr.mxu0 0.0
      %2296 = vmatpush1.msra.mxu0 0.0
      %2297 = vmatprep.subr.mxu0 0.0
      %2298 = vmatpush1.msra.mxu0 0.0
      %2299 = vmatprep.subr.mxu0 0.0
      %2300 = vmatpush1.msra.mxu0 0.0
      %2301 = vmatprep.subr.mxu0 0.0
      %2302 = vmatpush1.msra.mxu0 0.0
      %2303 = vmatprep.subr.mxu0 0.0
      %2304 = vmatpush1.msra.mxu0 0.0
      %2305 = vmatprep.subr.mxu0 0.0
      %2306 = vmatpush1.msra.mxu0 0.0
      %2307 = vmatprep.subr.mxu0 0.0
      %2308 = vmatpush1.msra.mxu0 0.0
      %2309 = vmatprep.mubr.f32.mxu0 0.0
      %2310 = vmatmul.mubr.f32.gmra.mrb[0].mxu0 %v914
      %v2311 = vpop.f32.mrb[0].mxu0
      %v2312 = vadd.f32 %v2087, %v2311
      %v2313 = vpop.f32.mrb[0].mxu0
      %2314 = vmatprep.mubr.f32.mxu0 0.0
      %2315 = vmatmul.mubr.f32.gmra.mrb[0].mxu0 %v923
      %v2316 = vpop.f32.mrb[0].mxu0
      %v2317 = vadd.f32 %v2092, %v2316
      %v2318 = vpop.f32.mrb[0].mxu0
      %2319 = vmatprep.mubr.f32.mxu0 0.0
      %2320 = vmatmul.mubr.f32.gmra.mrb[0].mxu0 %v932
      %v2321 = vpop.f32.mrb[0].mxu0
      %v2322 = vadd.f32 %v2097, %v2321
      %v2323 = vpop.f32.mrb[0].mxu0
      %2324 = vmatprep.mubr.f32.mxu0 0.0
      %2325 = vmatmul.mubr.f32.gmra.mrb[0].mxu0 %v941
      %v2326 = vpop.f32.mrb[0].mxu0
      %v2327 = vadd.f32 %v2102, %v2326
      %v2328 = vpop.f32.mrb[0].mxu0
      %2329 = vmatprep.mubr.f32.mxu0 0.0
      %2330 = vmatmul.mubr.f32.gmra.mrb[0].mxu0 %v950
      %v2331 = vpop.f32.mrb[0].mxu0
      %v2332 = vadd.f32 %v2107, %v2331
      %v2333 = vpop.f32.mrb[0].mxu0
      %2334 = vmatprep.mubr.f32.mxu0 0.0
      %2335 = vmatmul.mubr.f32.gmra.mrb[0].mxu0 %v959
      %v2336 = vpop.f32.mrb[0].mxu0
      %v2337 = vadd.f32 %v2112, %v2336
      %v2338 = vpop.f32.mrb[0].mxu0
      %2339 = vmatprep.mubr.f32.mxu0 0.0
      %2340 = vmatmul.mubr.f32.gmra.mrb[0].mxu0 %v968
      %v2341 = vpop.f32.mrb[0].mxu0
      %v2342 = vadd.f32 %v2117, %v2341
      %v2343 = vpop.f32.mrb[0].mxu0
      %2344 = vmatprep.mubr.f32.mxu0 0.0
      %2345 = vmatmul.mubr.f32.gmra.mrb[0].mxu0 %v977
      %v2346 = vpop.f32.mrb[0].mxu0
      %v2347 = vadd.f32 %v2122, %v2346
      %v2348 = vpop.f32.mrb[0].mxu0
      %2349 = vmatprep.mubr.f32.mxu0 0.0
      %2350 = vmatmul.mubr.f32.gmra.mrb[0].mxu0 %v986
      %v2351 = vpop.f32.mrb[0].mxu0
      %v2352 = vadd.f32 %v2127, %v2351
      %v2353 = vpop.f32.mrb[0].mxu0
      %2354 = vmatprep.mubr.f32.mxu0 0.0
      %2355 = vmatmul.mubr.f32.gmra.mrb[0].mxu0 %v995
      %v2356 = vpop.f32.mrb[0].mxu0
      %v2357 = vadd.f32 %v2132, %v2356
      %v2358 = vpop.f32.mrb[0].mxu0
      %2359 = vmatprep.mubr.f32.mxu0 0.0
      %2360 = vmatmul.mubr.f32.gmra.mrb[0].mxu0 %v1004
      %v2361 = vpop.f32.mrb[0].mxu0
      %v2362 = vadd.f32 %v2137, %v2361
      %v2363 = vpop.f32.mrb[0].mxu0
      %2364 = vmatprep.mubr.f32.mxu0 0.0
      %2365 = vmatmul.mubr.f32.gmra.mrb[0].mxu0 %v1013
      %v2366 = vpop.f32.mrb[0].mxu0
      %v2367 = vadd.f32 %v2142, %v2366
      %v2368 = vpop.f32.mrb[0].mxu0
      %2369 = vmatprep.mubr.f32.mxu0 0.0
      %2370 = vmatmul.mubr.f32.gmra.mrb[0].mxu0 %v1022
      %v2371 = vpop.f32.mrb[0].mxu0
      %v2372 = vadd.f32 %v2147, %v2371
      %v2373 = vpop.f32.mrb[0].mxu0
      %2374 = vmatprep.mubr.f32.mxu0 0.0
      %2375 = vmatmul.mubr.f32.gmra.mrb[0].mxu0 %v1031
      %v2376 = vpop.f32.mrb[0].mxu0
      %v2377 = vadd.f32 %v2152, %v2376
      %v2378 = vpop.f32.mrb[0].mxu0
      %2379 = vmatprep.mubr.f32.mxu0 0.0
      %2380 = vmatmul.mubr.f32.gmra.mrb[0].mxu0 %v1040
      %v2381 = vpop.f32.mrb[0].mxu0
      %v2382 = vadd.f32 %v2157, %v2381
      %v2383 = vpop.f32.mrb[0].mxu0
      %2384 = vmatprep.mubr.f32.mxu0 0.0
      %2385 = vmatmul.mubr.f32.gmra.mrb[0].mxu0 %v1049
      %v2386 = vpop.f32.mrb[0].mxu0
      %v2387 = vadd.f32 %v2162, %v2386
      %v2388 = vpop.f32.mrb[0].mxu0
      %2389 = vmatprep.mubr.f32.mxu0 0.0
      %2390 = vmatmul.mubr.f32.gmra.mrb[0].mxu0 %v1058
      %v2391 = vpop.f32.mrb[0].mxu0
      %v2392 = vadd.f32 %v2167, %v2391
      %v2393 = vpop.f32.mrb[0].mxu0
      %2394 = vmatprep.mubr.f32.mxu0 0.0
      %2395 = vmatmul.mubr.f32.gmra.mrb[0].mxu0 %v1067
      %v2396 = vpop.f32.mrb[0].mxu0
      %v2397 = vadd.f32 %v2172, %v2396
      %v2398 = vpop.f32.mrb[0].mxu0
      %2399 = vmatprep.mubr.f32.mxu0 0.0
      %2400 = vmatmul.mubr.f32.gmra.mrb[0].mxu0 %v1076
      %v2401 = vpop.f32.mrb[0].mxu0
      %v2402 = vadd.f32 %v2177, %v2401
      %v2403 = vpop.f32.mrb[0].mxu0
      %2404 = vmatprep.mubr.f32.mxu0 0.0
      %2405 = vmatmul.mubr.f32.gmra.mrb[0].mxu0 %v1085
      %v2406 = vpop.f32.mrb[0].mxu0
      %v2407 = vadd.f32 %v2182, %v2406
      %v2408 = vpop.f32.mrb[0].mxu0
      %2409 = vmatprep.mubr.f32.mxu0 0.0
      %2410 = vmatmul.mubr.f32.gmra.mrb[0].mxu0 %v1094
      %v2411 = vpop.f32.mrb[0].mxu0
      %v2412 = vadd.f32 %v2187, %v2411
      %v2413 = vpop.f32.mrb[0].mxu0
      %2414 = vmatprep.mubr.f32.mxu0 0.0
      %2415 = vmatmul.mubr.f32.gmra.mrb[0].mxu0 %v1103
      %v2416 = vpop.f32.mrb[0].mxu0
      %v2417 = vadd.f32 %v2192, %v2416
      %v2418 = vpop.f32.mrb[0].mxu0
      %2419 = vmatprep.mubr.f32.mxu0 0.0
      %2420 = vmatmul.mubr.f32.gmra.mrb[0].mxu0 %v1112
      %v2421 = vpop.f32.mrb[0].mxu0
      %v2422 = vadd.f32 %v2197, %v2421
      %v2423 = vpop.f32.mrb[0].mxu0
      %2424 = vmatprep.mubr.f32.mxu0 0.0
      %2425 = vmatmul.mubr.f32.gmra.mrb[0].mxu0 %v1121
      %v2426 = vpop.f32.mrb[0].mxu0
      %v2427 = vadd.f32 %v2202, %v2426
      %v2428 = vpop.f32.mrb[0].mxu0
      %2429 = vmatprep.mubr.f32.mxu0 0.0
      %2430 = vmatmul.mubr.f32.gmra.mrb[0].mxu0 %v1130
      %v2431 = vpop.f32.mrb[0].mxu0
      %v2432 = vadd.f32 %v2207, %v2431
      %v2433 = vpop.f32.mrb[0].mxu0
      %2434 = vmatprep.mubr.f32.mxu0 0.0
      %2435 = vmatmul.mubr.f32.gmra.mrb[0].mxu0 %v1139
      %v2436 = vpop.f32.mrb[0].mxu0
      %v2437 = vadd.f32 %v2212, %v2436
      %v2438 = vpop.f32.mrb[0].mxu0
      %2439 = vmatprep.mubr.f32.mxu0 0.0
      %2440 = vmatmul.mubr.f32.gmra.mrb[0].mxu0 %v1148
      %v2441 = vpop.f32.mrb[0].mxu0
      %v2442 = vadd.f32 %v2217, %v2441
      %v2443 = vpop.f32.mrb[0].mxu0
      %2444 = vmatprep.mubr.f32.mxu0 0.0
      %2445 = vmatmul.mubr.f32.gmra.mrb[0].mxu0 %v1157
      %v2446 = vpop.f32.mrb[0].mxu0
      %v2447 = vadd.f32 %v2222, %v2446
      %v2448 = vpop.f32.mrb[0].mxu0
      %2449 = vmatprep.mubr.f32.mxu0 0.0
      %2450 = vmatmul.mubr.f32.gmra.mrb[0].mxu0 %v1166
      %v2451 = vpop.f32.mrb[0].mxu0
      %v2452 = vadd.f32 %v2227, %v2451
      %v2453 = vpop.f32.mrb[0].mxu0
      %2454 = vmatprep.mubr.f32.mxu0 0.0
      %2455 = vmatmul.mubr.f32.gmra.mrb[0].mxu0 %v1175
      %v2456 = vpop.f32.mrb[0].mxu0
      %v2457 = vadd.f32 %v2232, %v2456
      %v2458 = vpop.f32.mrb[0].mxu0
      %2459 = vmatprep.mubr.f32.mxu0 0.0
      %2460 = vmatmul.mubr.f32.gmra.mrb[0].mxu0 %v1184
      %v2461 = vpop.f32.mrb[0].mxu0
      %v2462 = vadd.f32 %v2237, %v2461
      %v2463 = vpop.f32.mrb[0].mxu0
      %2464 = vmatprep.mubr.f32.mxu0 0.0
      %2465 = vmatmul.mubr.f32.gmra.mrb[0].mxu0 %v1193
      %v2466 = vpop.f32.mrb[0].mxu0
      %v2467 = vadd.f32 %v2242, %v2466
      %v2468 = vpop.f32.mrb[0].mxu0
      %2469 = vdwg.mxu0
      %v2470 = vmax.f32 %v2312, 0.0
      %v2471 = vmax.f32 %v2317, 0.0
      %v2472 = vmax.f32 %v2322, 0.0
      %v2473 = vmax.f32 %v2327, 0.0
      %v2474 = vmax.f32 %v2332, 0.0
      %v2475 = vmax.f32 %v2337, 0.0
      %v2476 = vmax.f32 %v2342, 0.0
      %v2477 = vmax.f32 %v2347, 0.0
      %v2478 = vmax.f32 %v2352, 0.0
      %v2479 = vmax.f32 %v2357, 0.0
      %v2480 = vmax.f32 %v2362, 0.0
      %v2481 = vmax.f32 %v2367, 0.0
      %v2482 = vmax.f32 %v2372, 0.0
      %v2483 = vmax.f32 %v2377, 0.0
      %v2484 = vmax.f32 %v2382, 0.0
      %v2485 = vmax.f32 %v2387, 0.0
      %v2486 = vmax.f32 %v2392, 0.0
      %v2487 = vmax.f32 %v2397, 0.0
      %v2488 = vmax.f32 %v2402, 0.0
      %v2489 = vmax.f32 %v2407, 0.0
      %v2490 = vmax.f32 %v2412, 0.0
      %v2491 = vmax.f32 %v2417, 0.0
      %v2492 = vmax.f32 %v2422, 0.0
      %v2493 = vmax.f32 %v2427, 0.0
      %v2494 = vmax.f32 %v2432, 0.0
      %v2495 = vmax.f32 %v2437, 0.0
      %v2496 = vmax.f32 %v2442, 0.0
      %v2497 = vmax.f32 %v2447, 0.0
      %v2498 = vmax.f32 %v2452, 0.0
      %v2499 = vmax.f32 %v2457, 0.0
      %v2500 = vmax.f32 %v2462, 0.0
      %v2501 = vmax.f32 %v2467, 0.0
      %2502 = vst [vmem:[%s232 + $0x1] sm:$0xff] %v2470
      %2503 = vst [vmem:[%s232 + $0x9] sm:$0xff] %v2471
      %2504 = vst [vmem:[%s232 + $0x19] sm:$0xff] %v2472
      %2505 = vst [vmem:[%s232 + $0x21] sm:$0xff] %v2473
      %2506 = vst [vmem:[%s232 + $0x31] sm:$0xff] %v2474
      %2507 = vst [vmem:[%s232 + $0x39] sm:$0xff] %v2475
      %2508 = vst [vmem:[%s232 + $0x49] sm:$0xff] %v2476
      %2509 = vst [vmem:[%s232 + $0x51] sm:$0xff] %v2477
      %2510 = vst [vmem:[%s232 + $0x61] sm:$0xff] %v2478
      %2511 = vst [vmem:[%s232 + $0x69] sm:$0xff] %v2479
      %2512 = vst [vmem:[%s232 + $0x79] sm:$0xff] %v2480
      %2513 = vst [vmem:[%s232 + $0x81] sm:$0xff] %v2481
      %2514 = vst [vmem:[%s232 + $0x91] sm:$0xff] %v2482
      %2515 = vst [vmem:[%s232 + $0x99] sm:$0xff] %v2483
      %2516 = vst [vmem:[%s232 + $0xa9] sm:$0xff] %v2484
      %2517 = vst [vmem:[%s232 + $0xb1] sm:$0xff] %v2485
      %2518 = vst [vmem:[%s232 + $0xc1] sm:$0xff] %v2486
      %2519 = vst [vmem:[%s232 + $0xc9] sm:$0xff] %v2487
      %2520 = vst [vmem:[%s232 + $0xd9] sm:$0xff] %v2488
      %2521 = vst [vmem:[%s232 + $0xe1] sm:$0xff] %v2489
      %2522 = vst [vmem:[%s232 + $0xf1] sm:$0xff] %v2490
      %2523 = vst [vmem:[%s232 + $0xf9] sm:$0xff] %v2491
      %2524 = vst [vmem:[%s232 + $0x109] sm:$0xff] %v2492
      %2525 = vst [vmem:[%s232 + $0x111] sm:$0xff] %v2493
      %2526 = vst [vmem:[%s232 + $0x121] sm:$0xff] %v2494
      %2527 = vst [vmem:[%s232 + $0x129] sm:$0xff] %v2495
      %2528 = vst [vmem:[%s232 + $0x139] sm:$0xff] %v2496
      %2529 = vst [vmem:[%s232 + $0x141] sm:$0xff] %v2497
      %2530 = vst [vmem:[%s232 + $0x151] sm:$0xff] %v2498
      %2531 = vst [vmem:[%s232 + $0x159] sm:$0xff] %v2499
      %2532 = vst [vmem:[%s232 + $0x169] sm:$0xff] %v2500
      %2533 = vst [vmem:[%s232 + $0x171] sm:$0xff] %v2501
      %v2534 = vld [vmem:[#allocation2] sm:$0xff]
      %v2535 = vld [vmem:[#allocation2 + $0x8] sm:$0xff]
      %v2536 = vld [vmem:[#allocation2 + $0x18] sm:$0xff]
      %v2537 = vld [vmem:[#allocation2 + $0x20] sm:$0xff]
      %v2538 = vld [vmem:[#allocation2 + $0x30] sm:$0xff]
      %v2539 = vld [vmem:[#allocation2 + $0x38] sm:$0xff]
      %v2540 = vld [vmem:[#allocation2 + $0x48] sm:$0xff]
      %v2541 = vld [vmem:[#allocation2 + $0x50] sm:$0xff]
      %v2542 = vld [vmem:[#allocation2 + $0x60] sm:$0xff]
      %v2543 = vld [vmem:[#allocation2 + $0x68] sm:$0xff]
      %v2544 = vld [vmem:[#allocation2 + $0x78] sm:$0xff]
      %v2545 = vld [vmem:[#allocation2 + $0x80] sm:$0xff]
      %v2546 = vld [vmem:[#allocation2 + $0x90] sm:$0xff]
      %v2547 = vld [vmem:[#allocation2 + $0x98] sm:$0xff]
      %v2548 = vld [vmem:[#allocation2 + $0xa8] sm:$0xff]
      %v2549 = vld [vmem:[#allocation2 + $0xb0] sm:$0xff]
      %v2550 = vld [vmem:[#allocation2 + $0xc0] sm:$0xff]
      %v2551 = vld [vmem:[#allocation2 + $0xc8] sm:$0xff]
      %v2552 = vld [vmem:[#allocation2 + $0xd8] sm:$0xff]
      %v2553 = vld [vmem:[#allocation2 + $0xe0] sm:$0xff]
      %v2554 = vld [vmem:[#allocation2 + $0xf0] sm:$0xff]
      %v2555 = vld [vmem:[#allocation2 + $0xf8] sm:$0xff]
      %v2556 = vld [vmem:[#allocation2 + $0x108] sm:$0xff]
      %v2557 = vld [vmem:[#allocation2 + $0x110] sm:$0xff]
      %v2558 = vld [vmem:[#allocation2 + $0x120] sm:$0xff]
      %v2559 = vld [vmem:[#allocation2 + $0x128] sm:$0xff]
      %v2560 = vld [vmem:[#allocation2 + $0x138] sm:$0xff]
      %v2561 = vld [vmem:[#allocation2 + $0x140] sm:$0xff]
      %v2562 = vld [vmem:[#allocation2 + $0x150] sm:$0xff]
      %v2563 = vld [vmem:[#allocation2 + $0x158] sm:$0xff]
      %v2564 = vld [vmem:[#allocation2 + $0x168] sm:$0xff]
      %v2565 = vld [vmem:[#allocation2 + $0x170] sm:$0xff]
      %2566 = vst [vmem:[#allocation3] sm:$0xff] %v2534
      %2567 = vst [vmem:[#allocation3 + $0x48] sm:$0xff] %v2535
      %2568 = vst [vmem:[#allocation3 + $0x90] sm:$0xff] %v2536
      %2569 = vst [vmem:[#allocation3 + $0xd8] sm:$0xff] %v2537
      %2570 = vst [vmem:[#allocation3 + $0x120] sm:$0xff] %v2538
      %2571 = vst [vmem:[#allocation3 + $0x168] sm:$0xff] %v2539
      %2572 = vst [vmem:[#allocation3 + $0x1b0] sm:$0xff] %v2540
      %2573 = vst [vmem:[#allocation3 + $0x1f8] sm:$0xff] %v2541
      %2574 = vst [vmem:[#allocation3 + $0x240] sm:$0xff] %v2542
      %2575 = vst [vmem:[#allocation3 + $0x288] sm:$0xff] %v2543
      %2576 = vst [vmem:[#allocation3 + $0x2d0] sm:$0xff] %v2544
      %2577 = vst [vmem:[#allocation3 + $0x318] sm:$0xff] %v2545
      %2578 = vst [vmem:[#allocation3 + $0x360] sm:$0xff] %v2546
      %2579 = vst [vmem:[#allocation3 + $0x3a8] sm:$0xff] %v2547
      %2580 = vst [vmem:[#allocation3 + $0x3f0] sm:$0xff] %v2548
      %2581 = vst [vmem:[#allocation3 + $0x438] sm:$0xff] %v2549
      %2582 = vst [vmem:[#allocation3 + $0x480] sm:$0xff] %v2550
      %2583 = vst [vmem:[#allocation3 + $0x4c8] sm:$0xff] %v2551
      %2584 = vst [vmem:[#allocation3 + $0x510] sm:$0xff] %v2552
      %2585 = vst [vmem:[#allocation3 + $0x558] sm:$0xff] %v2553
      %2586 = vst [vmem:[#allocation3 + $0x5a0] sm:$0xff] %v2554
      %2587 = vst [vmem:[#allocation3 + $0x5e8] sm:$0xff] %v2555
      %2588 = vst [vmem:[#allocation3 + $0x630] sm:$0xff] %v2556
      %2589 = vst [vmem:[#allocation3 + $0x678] sm:$0xff] %v2557
      %2590 = vst [vmem:[#allocation3 + $0x6c0] sm:$0xff] %v2558
      %2591 = vst [vmem:[#allocation3 + $0x708] sm:$0xff] %v2559
      %2592 = vst [vmem:[#allocation3 + $0x750] sm:$0xff] %v2560
      %2593 = vst [vmem:[#allocation3 + $0x798] sm:$0xff] %v2561
      %2594 = vst [vmem:[#allocation3 + $0x7e0] sm:$0xff] %v2562
      %2595 = vst [vmem:[#allocation3 + $0x828] sm:$0xff] %v2563
      %2596 = vst [vmem:[#allocation3 + $0x870] sm:$0xff] %v2564
      %2597 = vst [vmem:[#allocation3 + $0x8b8] sm:$0xff] %v2565
      %v2598 = vld [vmem:[#allocation2 + $0x1] sm:$0xff]
      %v2599 = vld [vmem:[#allocation2 + $0x9] sm:$0xff]
      %v2600 = vld [vmem:[#allocation2 + $0x19] sm:$0xff]
      %v2601 = vld [vmem:[#allocation2 + $0x21] sm:$0xff]
      %v2602 = vld [vmem:[#allocation2 + $0x31] sm:$0xff]
      %v2603 = vld [vmem:[#allocation2 + $0x39] sm:$0xff]
      %v2604 = vld [vmem:[#allocation2 + $0x49] sm:$0xff]
      %v2605 = vld [vmem:[#allocation2 + $0x51] sm:$0xff]
      %v2606 = vld [vmem:[#allocation2 + $0x61] sm:$0xff]
      %v2607 = vld [vmem:[#allocation2 + $0x69] sm:$0xff]
      %v2608 = vld [vmem:[#allocation2 + $0x79] sm:$0xff]
      %v2609 = vld [vmem:[#allocation2 + $0x81] sm:$0xff]
      %v2610 = vld [vmem:[#allocation2 + $0x91] sm:$0xff]
      %v2611 = vld [vmem:[#allocation2 + $0x99] sm:$0xff]
      %v2612 = vld [vmem:[#allocation2 + $0xa9] sm:$0xff]
      %v2613 = vld [vmem:[#allocation2 + $0xb1] sm:$0xff]
      %v2614 = vld [vmem:[#allocation2 + $0xc1] sm:$0xff]
      %v2615 = vld [vmem:[#allocation2 + $0xc9] sm:$0xff]
      %v2616 = vld [vmem:[#allocation2 + $0xd9] sm:$0xff]
      %v2617 = vld [vmem:[#allocation2 + $0xe1] sm:$0xff]
      %v2618 = vld [vmem:[#allocation2 + $0xf1] sm:$0xff]
      %v2619 = vld [vmem:[#allocation2 + $0xf9] sm:$0xff]
      %v2620 = vld [vmem:[#allocation2 + $0x109] sm:$0xff]
      %v2621 = vld [vmem:[#allocation2 + $0x111] sm:$0xff]
      %v2622 = vld [vmem:[#allocation2 + $0x121] sm:$0xff]
      %v2623 = vld [vmem:[#allocation2 + $0x129] sm:$0xff]
      %v2624 = vld [vmem:[#allocation2 + $0x139] sm:$0xff]
      %v2625 = vld [vmem:[#allocation2 + $0x141] sm:$0xff]
      %v2626 = vld [vmem:[#allocation2 + $0x151] sm:$0xff]
      %v2627 = vld [vmem:[#allocation2 + $0x159] sm:$0xff]
      %v2628 = vld [vmem:[#allocation2 + $0x169] sm:$0xff]
      %v2629 = vld [vmem:[#allocation2 + $0x171] sm:$0xff]
      %2630 = vst [vmem:[#allocation3 + $0x8] sm:$0xff] %v2598
      %2631 = vst [vmem:[#allocation3 + $0x50] sm:$0xff] %v2599
      %2632 = vst [vmem:[#allocation3 + $0x98] sm:$0xff] %v2600
      %2633 = vst [vmem:[#allocation3 + $0xe0] sm:$0xff] %v2601
      %2634 = vst [vmem:[#allocation3 + $0x128] sm:$0xff] %v2602
      %2635 = vst [vmem:[#allocation3 + $0x170] sm:$0xff] %v2603
      %2636 = vst [vmem:[#allocation3 + $0x1b8] sm:$0xff] %v2604
      %2637 = vst [vmem:[#allocation3 + $0x200] sm:$0xff] %v2605
      %2638 = vst [vmem:[#allocation3 + $0x248] sm:$0xff] %v2606
      %2639 = vst [vmem:[#allocation3 + $0x290] sm:$0xff] %v2607
      %2640 = vst [vmem:[#allocation3 + $0x2d8] sm:$0xff] %v2608
      %2641 = vst [vmem:[#allocation3 + $0x320] sm:$0xff] %v2609
      %2642 = vst [vmem:[#allocation3 + $0x368] sm:$0xff] %v2610
      %2643 = vst [vmem:[#allocation3 + $0x3b0] sm:$0xff] %v2611
      %2644 = vst [vmem:[#allocation3 + $0x3f8] sm:$0xff] %v2612
      %2645 = vst [vmem:[#allocation3 + $0x440] sm:$0xff] %v2613
      %2646 = vst [vmem:[#allocation3 + $0x488] sm:$0xff] %v2614
      %2647 = vst [vmem:[#allocation3 + $0x4d0] sm:$0xff] %v2615
      %2648 = vst [vmem:[#allocation3 + $0x518] sm:$0xff] %v2616
      %2649 = vst [vmem:[#allocation3 + $0x560] sm:$0xff] %v2617
      %2650 = vst [vmem:[#allocation3 + $0x5a8] sm:$0xff] %v2618
      %2651 = vst [vmem:[#allocation3 + $0x5f0] sm:$0xff] %v2619
      %2652 = vst [vmem:[#allocation3 + $0x638] sm:$0xff] %v2620
      %2653 = vst [vmem:[#allocation3 + $0x680] sm:$0xff] %v2621
      %2654 = vst [vmem:[#allocation3 + $0x6c8] sm:$0xff] %v2622
      %2655 = vst [vmem:[#allocation3 + $0x710] sm:$0xff] %v2623
      %2656 = vst [vmem:[#allocation3 + $0x758] sm:$0xff] %v2624
      %2657 = vst [vmem:[#allocation3 + $0x7a0] sm:$0xff] %v2625
      %2658 = vst [vmem:[#allocation3 + $0x7e8] sm:$0xff] %v2626
      %2659 = vst [vmem:[#allocation3 + $0x830] sm:$0xff] %v2627
      %2660 = vst [vmem:[#allocation3 + $0x878] sm:$0xff] %v2628
      %2661 = vst [vmem:[#allocation3 + $0x8c0] sm:$0xff] %v2629
      %v2662 = vld [vmem:[#allocation2 + $0x2] sm:$0xff]
      %v2663 = vld [vmem:[#allocation2 + $0xa] sm:$0xff]
      %v2664 = vld [vmem:[#allocation2 + $0x1a] sm:$0xff]
      %v2665 = vld [vmem:[#allocation2 + $0x22] sm:$0xff]
      %v2666 = vld [vmem:[#allocation2 + $0x32] sm:$0xff]
      %v2667 = vld [vmem:[#allocation2 + $0x3a] sm:$0xff]
      %v2668 = vld [vmem:[#allocation2 + $0x4a] sm:$0xff]
      %v2669 = vld [vmem:[#allocation2 + $0x52] sm:$0xff]
      %v2670 = vld [vmem:[#allocation2 + $0x62] sm:$0xff]
      %v2671 = vld [vmem:[#allocation2 + $0x6a] sm:$0xff]
      %v2672 = vld [vmem:[#allocation2 + $0x7a] sm:$0xff]
      %v2673 = vld [vmem:[#allocation2 + $0x82] sm:$0xff]
      %v2674 = vld [vmem:[#allocation2 + $0x92] sm:$0xff]
      %v2675 = vld [vmem:[#allocation2 + $0x9a] sm:$0xff]
      %v2676 = vld [vmem:[#allocation2 + $0xaa] sm:$0xff]
      %v2677 = vld [vmem:[#allocation2 + $0xb2] sm:$0xff]
      %v2678 = vld [vmem:[#allocation2 + $0xc2] sm:$0xff]
      %v2679 = vld [vmem:[#allocation2 + $0xca] sm:$0xff]
      %v2680 = vld [vmem:[#allocation2 + $0xda] sm:$0xff]
      %v2681 = vld [vmem:[#allocation2 + $0xe2] sm:$0xff]
      %v2682 = vld [vmem:[#allocation2 + $0xf2] sm:$0xff]
      %v2683 = vld [vmem:[#allocation2 + $0xfa] sm:$0xff]
      %v2684 = vld [vmem:[#allocation2 + $0x10a] sm:$0xff]
      %v2685 = vld [vmem:[#allocation2 + $0x112] sm:$0xff]
      %v2686 = vld [vmem:[#allocation2 + $0x122] sm:$0xff]
      %v2687 = vld [vmem:[#allocation2 + $0x12a] sm:$0xff]
      %v2688 = vld [vmem:[#allocation2 + $0x13a] sm:$0xff]
      %v2689 = vld [vmem:[#allocation2 + $0x142] sm:$0xff]
      %v2690 = vld [vmem:[#allocation2 + $0x152] sm:$0xff]
      %v2691 = vld [vmem:[#allocation2 + $0x15a] sm:$0xff]
      %v2692 = vld [vmem:[#allocation2 + $0x16a] sm:$0xff]
      %v2693 = vld [vmem:[#allocation2 + $0x172] sm:$0xff]
      %2694 = vst [vmem:[#allocation3 + $0x10] sm:$0xff] %v2662
      %2695 = vst [vmem:[#allocation3 + $0x58] sm:$0xff] %v2663
      %2696 = vst [vmem:[#allocation3 + $0xa0] sm:$0xff] %v2664
      %2697 = vst [vmem:[#allocation3 + $0xe8] sm:$0xff] %v2665
      %2698 = vst [vmem:[#allocation3 + $0x130] sm:$0xff] %v2666
      %2699 = vst [vmem:[#allocation3 + $0x178] sm:$0xff] %v2667
      %2700 = vst [vmem:[#allocation3 + $0x1c0] sm:$0xff] %v2668
      %2701 = vst [vmem:[#allocation3 + $0x208] sm:$0xff] %v2669
      %2702 = vst [vmem:[#allocation3 + $0x250] sm:$0xff] %v2670
      %2703 = vst [vmem:[#allocation3 + $0x298] sm:$0xff] %v2671
      %2704 = vst [vmem:[#allocation3 + $0x2e0] sm:$0xff] %v2672
      %2705 = vst [vmem:[#allocation3 + $0x328] sm:$0xff] %v2673
      %2706 = vst [vmem:[#allocation3 + $0x370] sm:$0xff] %v2674
      %2707 = vst [vmem:[#allocation3 + $0x3b8] sm:$0xff] %v2675
      %2708 = vst [vmem:[#allocation3 + $0x400] sm:$0xff] %v2676
      %2709 = vst [vmem:[#allocation3 + $0x448] sm:$0xff] %v2677
      %2710 = vst [vmem:[#allocation3 + $0x490] sm:$0xff] %v2678
      %2711 = vst [vmem:[#allocation3 + $0x4d8] sm:$0xff] %v2679
      %2712 = vst [vmem:[#allocation3 + $0x520] sm:$0xff] %v2680
      %2713 = vst [vmem:[#allocation3 + $0x568] sm:$0xff] %v2681
      %2714 = vst [vmem:[#allocation3 + $0x5b0] sm:$0xff] %v2682
      %2715 = vst [vmem:[#allocation3 + $0x5f8] sm:$0xff] %v2683
      %2716 = vst [vmem:[#allocation3 + $0x640] sm:$0xff] %v2684
      %2717 = vst [vmem:[#allocation3 + $0x688] sm:$0xff] %v2685
      %2718 = vst [vmem:[#allocation3 + $0x6d0] sm:$0xff] %v2686
      %2719 = vst [vmem:[#allocation3 + $0x718] sm:$0xff] %v2687
      %2720 = vst [vmem:[#allocation3 + $0x760] sm:$0xff] %v2688
      %2721 = vst [vmem:[#allocation3 + $0x7a8] sm:$0xff] %v2689
      %2722 = vst [vmem:[#allocation3 + $0x7f0] sm:$0xff] %v2690
      %2723 = vst [vmem:[#allocation3 + $0x838] sm:$0xff] %v2691
      %2724 = vst [vmem:[#allocation3 + $0x880] sm:$0xff] %v2692
      %2725 = vst [vmem:[#allocation3 + $0x8c8] sm:$0xff] %v2693
      %v2726 = vld [vmem:[%s232] sm:$0xff]
      %v2727 = vld [vmem:[%s232 + $0x8] sm:$0xff]
      %v2728 = vld [vmem:[%s232 + $0x18] sm:$0xff]
      %v2729 = vld [vmem:[%s232 + $0x20] sm:$0xff]
      %v2730 = vld [vmem:[%s232 + $0x30] sm:$0xff]
      %v2731 = vld [vmem:[%s232 + $0x38] sm:$0xff]
      %v2732 = vld [vmem:[%s232 + $0x48] sm:$0xff]
      %v2733 = vld [vmem:[%s232 + $0x50] sm:$0xff]
      %v2734 = vld [vmem:[%s232 + $0x60] sm:$0xff]
      %v2735 = vld [vmem:[%s232 + $0x68] sm:$0xff]
      %v2736 = vld [vmem:[%s232 + $0x78] sm:$0xff]
      %v2737 = vld [vmem:[%s232 + $0x80] sm:$0xff]
      %v2738 = vld [vmem:[%s232 + $0x90] sm:$0xff]
      %v2739 = vld [vmem:[%s232 + $0x98] sm:$0xff]
      %v2740 = vld [vmem:[%s232 + $0xa8] sm:$0xff]
      %v2741 = vld [vmem:[%s232 + $0xb0] sm:$0xff]
      %v2742 = vld [vmem:[%s232 + $0xc0] sm:$0xff]
      %v2743 = vld [vmem:[%s232 + $0xc8] sm:$0xff]
      %v2744 = vld [vmem:[%s232 + $0xd8] sm:$0xff]
      %v2745 = vld [vmem:[%s232 + $0xe0] sm:$0xff]
      %v2746 = vld [vmem:[%s232 + $0xf0] sm:$0xff]
      %v2747 = vld [vmem:[%s232 + $0xf8] sm:$0xff]
      %v2748 = vld [vmem:[%s232 + $0x108] sm:$0xff]
      %v2749 = vld [vmem:[%s232 + $0x110] sm:$0xff]
      %v2750 = vld [vmem:[%s232 + $0x120] sm:$0xff]
      %v2751 = vld [vmem:[%s232 + $0x128] sm:$0xff]
      %v2752 = vld [vmem:[%s232 + $0x138] sm:$0xff]
      %v2753 = vld [vmem:[%s232 + $0x140] sm:$0xff]
      %v2754 = vld [vmem:[%s232 + $0x150] sm:$0xff]
      %v2755 = vld [vmem:[%s232 + $0x158] sm:$0xff]
      %v2756 = vld [vmem:[%s232 + $0x168] sm:$0xff]
      %v2757 = vld [vmem:[%s232 + $0x170] sm:$0xff]
      %2758 = vst [vmem:[#allocation3 + $0x18] sm:$0xff] %v2726
      %2759 = vst [vmem:[#allocation3 + $0x60] sm:$0xff] %v2727
      %2760 = vst [vmem:[#allocation3 + $0xa8] sm:$0xff] %v2728
      %2761 = vst [vmem:[#allocation3 + $0xf0] sm:$0xff] %v2729
      %2762 = vst [vmem:[#allocation3 + $0x138] sm:$0xff] %v2730
      %2763 = vst [vmem:[#allocation3 + $0x180] sm:$0xff] %v2731
      %2764 = vst [vmem:[#allocation3 + $0x1c8] sm:$0xff] %v2732
      %2765 = vst [vmem:[#allocation3 + $0x210] sm:$0xff] %v2733
      %2766 = vst [vmem:[#allocation3 + $0x258] sm:$0xff] %v2734
      %2767 = vst [vmem:[#allocation3 + $0x2a0] sm:$0xff] %v2735
      %2768 = vst [vmem:[#allocation3 + $0x2e8] sm:$0xff] %v2736
      %2769 = vst [vmem:[#allocation3 + $0x330] sm:$0xff] %v2737
      %2770 = vst [vmem:[#allocation3 + $0x378] sm:$0xff] %v2738
      %2771 = vst [vmem:[#allocation3 + $0x3c0] sm:$0xff] %v2739
      %2772 = vst [vmem:[#allocation3 + $0x408] sm:$0xff] %v2740
      %2773 = vst [vmem:[#allocation3 + $0x450] sm:$0xff] %v2741
      %2774 = vst [vmem:[#allocation3 + $0x498] sm:$0xff] %v2742
      %2775 = vst [vmem:[#allocation3 + $0x4e0] sm:$0xff] %v2743
      %2776 = vst [vmem:[#allocation3 + $0x528] sm:$0xff] %v2744
      %2777 = vst [vmem:[#allocation3 + $0x570] sm:$0xff] %v2745
      %2778 = vst [vmem:[#allocation3 + $0x5b8] sm:$0xff] %v2746
      %2779 = vst [vmem:[#allocation3 + $0x600] sm:$0xff] %v2747
      %2780 = vst [vmem:[#allocation3 + $0x648] sm:$0xff] %v2748
      %2781 = vst [vmem:[#allocation3 + $0x690] sm:$0xff] %v2749
      %2782 = vst [vmem:[#allocation3 + $0x6d8] sm:$0xff] %v2750
      %2783 = vst [vmem:[#allocation3 + $0x720] sm:$0xff] %v2751
      %2784 = vst [vmem:[#allocation3 + $0x768] sm:$0xff] %v2752
      %2785 = vst [vmem:[#allocation3 + $0x7b0] sm:$0xff] %v2753
      %2786 = vst [vmem:[#allocation3 + $0x7f8] sm:$0xff] %v2754
      %2787 = vst [vmem:[#allocation3 + $0x840] sm:$0xff] %v2755
      %2788 = vst [vmem:[#allocation3 + $0x888] sm:$0xff] %v2756
      %2789 = vst [vmem:[#allocation3 + $0x8d0] sm:$0xff] %v2757
      %v2790 = vld [vmem:[%s232 + $0x1] sm:$0xff]
      %v2791 = vld [vmem:[%s232 + $0x9] sm:$0xff]
      %v2792 = vld [vmem:[%s232 + $0x19] sm:$0xff]
      %v2793 = vld [vmem:[%s232 + $0x21] sm:$0xff]
      %v2794 = vld [vmem:[%s232 + $0x31] sm:$0xff]
      %v2795 = vld [vmem:[%s232 + $0x39] sm:$0xff]
      %v2796 = vld [vmem:[%s232 + $0x49] sm:$0xff]
      %v2797 = vld [vmem:[%s232 + $0x51] sm:$0xff]
      %v2798 = vld [vmem:[%s232 + $0x61] sm:$0xff]
      %v2799 = vld [vmem:[%s232 + $0x69] sm:$0xff]
      %v2800 = vld [vmem:[%s232 + $0x79] sm:$0xff]
      %v2801 = vld [vmem:[%s232 + $0x81] sm:$0xff]
      %v2802 = vld [vmem:[%s232 + $0x91] sm:$0xff]
      %v2803 = vld [vmem:[%s232 + $0x99] sm:$0xff]
      %v2804 = vld [vmem:[%s232 + $0xa9] sm:$0xff]
      %v2805 = vld [vmem:[%s232 + $0xb1] sm:$0xff]
      %v2806 = vld [vmem:[%s232 + $0xc1] sm:$0xff]
      %v2807 = vld [vmem:[%s232 + $0xc9] sm:$0xff]
      %v2808 = vld [vmem:[%s232 + $0xd9] sm:$0xff]
      %v2809 = vld [vmem:[%s232 + $0xe1] sm:$0xff]
      %v2810 = vld [vmem:[%s232 + $0xf1] sm:$0xff]
      %v2811 = vld [vmem:[%s232 + $0xf9] sm:$0xff]
      %v2812 = vld [vmem:[%s232 + $0x109] sm:$0xff]
      %v2813 = vld [vmem:[%s232 + $0x111] sm:$0xff]
      %v2814 = vld [vmem:[%s232 + $0x121] sm:$0xff]
      %v2815 = vld [vmem:[%s232 + $0x129] sm:$0xff]
      %v2816 = vld [vmem:[%s232 + $0x139] sm:$0xff]
      %v2817 = vld [vmem:[%s232 + $0x141] sm:$0xff]
      %v2818 = vld [vmem:[%s232 + $0x151] sm:$0xff]
      %v2819 = vld [vmem:[%s232 + $0x159] sm:$0xff]
      %v2820 = vld [vmem:[%s232 + $0x169] sm:$0xff]
      %v2821 = vld [vmem:[%s232 + $0x171] sm:$0xff]
      %2822 = vst [vmem:[#allocation3 + $0x20] sm:$0xff] %v2790
      %2823 = vst [vmem:[#allocation3 + $0x68] sm:$0xff] %v2791
      %2824 = vst [vmem:[#allocation3 + $0xb0] sm:$0xff] %v2792
      %2825 = vst [vmem:[#allocation3 + $0xf8] sm:$0xff] %v2793
      %2826 = vst [vmem:[#allocation3 + $0x140] sm:$0xff] %v2794
      %2827 = vst [vmem:[#allocation3 + $0x188] sm:$0xff] %v2795
      %2828 = vst [vmem:[#allocation3 + $0x1d0] sm:$0xff] %v2796
      %2829 = vst [vmem:[#allocation3 + $0x218] sm:$0xff] %v2797
      %2830 = vst [vmem:[#allocation3 + $0x260] sm:$0xff] %v2798
      %2831 = vst [vmem:[#allocation3 + $0x2a8] sm:$0xff] %v2799
      %2832 = vst [vmem:[#allocation3 + $0x2f0] sm:$0xff] %v2800
      %2833 = vst [vmem:[#allocation3 + $0x338] sm:$0xff] %v2801
      %2834 = vst [vmem:[#allocation3 + $0x380] sm:$0xff] %v2802
      %2835 = vst [vmem:[#allocation3 + $0x3c8] sm:$0xff] %v2803
      %2836 = vst [vmem:[#allocation3 + $0x410] sm:$0xff] %v2804
      %2837 = vst [vmem:[#allocation3 + $0x458] sm:$0xff] %v2805
      %2838 = vst [vmem:[#allocation3 + $0x4a0] sm:$0xff] %v2806
      %2839 = vst [vmem:[#allocation3 + $0x4e8] sm:$0xff] %v2807
      %2840 = vst [vmem:[#allocation3 + $0x530] sm:$0xff] %v2808
      %2841 = vst [vmem:[#allocation3 + $0x578] sm:$0xff] %v2809
      %2842 = vst [vmem:[#allocation3 + $0x5c0] sm:$0xff] %v2810
      %2843 = vst [vmem:[#allocation3 + $0x608] sm:$0xff] %v2811
      %2844 = vst [vmem:[#allocation3 + $0x650] sm:$0xff] %v2812
      %2845 = vst [vmem:[#allocation3 + $0x698] sm:$0xff] %v2813
      %2846 = vst [vmem:[#allocation3 + $0x6e0] sm:$0xff] %v2814
      %2847 = vst [vmem:[#allocation3 + $0x728] sm:$0xff] %v2815
      %2848 = vst [vmem:[#allocation3 + $0x770] sm:$0xff] %v2816
      %2849 = vst [vmem:[#allocation3 + $0x7b8] sm:$0xff] %v2817
      %2850 = vst [vmem:[#allocation3 + $0x800] sm:$0xff] %v2818
      %2851 = vst [vmem:[#allocation3 + $0x848] sm:$0xff] %v2819
      %2852 = vst [vmem:[#allocation3 + $0x890] sm:$0xff] %v2820
      %2853 = vst [vmem:[#allocation3 + $0x8d8] sm:$0xff] %v2821
      %v2854 = vld [vmem:[%s232 + $0x2] sm:$0xff]
      %v2855 = vld [vmem:[%s232 + $0xa] sm:$0xff]
      %v2856 = vld [vmem:[%s232 + $0x1a] sm:$0xff]
      %v2857 = vld [vmem:[%s232 + $0x22] sm:$0xff]
      %v2858 = vld [vmem:[%s232 + $0x32] sm:$0xff]
      %v2859 = vld [vmem:[%s232 + $0x3a] sm:$0xff]
      %v2860 = vld [vmem:[%s232 + $0x4a] sm:$0xff]
      %v2861 = vld [vmem:[%s232 + $0x52] sm:$0xff]
      %v2862 = vld [vmem:[%s232 + $0x62] sm:$0xff]
      %v2863 = vld [vmem:[%s232 + $0x6a] sm:$0xff]
      %v2864 = vld [vmem:[%s232 + $0x7a] sm:$0xff]
      %v2865 = vld [vmem:[%s232 + $0x82] sm:$0xff]
      %v2866 = vld [vmem:[%s232 + $0x92] sm:$0xff]
      %v2867 = vld [vmem:[%s232 + $0x9a] sm:$0xff]
      %v2868 = vld [vmem:[%s232 + $0xaa] sm:$0xff]
      %v2869 = vld [vmem:[%s232 + $0xb2] sm:$0xff]
      %v2870 = vld [vmem:[%s232 + $0xc2] sm:$0xff]
      %v2871 = vld [vmem:[%s232 + $0xca] sm:$0xff]
      %v2872 = vld [vmem:[%s232 + $0xda] sm:$0xff]
      %v2873 = vld [vmem:[%s232 + $0xe2] sm:$0xff]
      %v2874 = vld [vmem:[%s232 + $0xf2] sm:$0xff]
      %v2875 = vld [vmem:[%s232 + $0xfa] sm:$0xff]
      %v2876 = vld [vmem:[%s232 + $0x10a] sm:$0xff]
      %v2877 = vld [vmem:[%s232 + $0x112] sm:$0xff]
      %v2878 = vld [vmem:[%s232 + $0x122] sm:$0xff]
      %v2879 = vld [vmem:[%s232 + $0x12a] sm:$0xff]
      %v2880 = vld [vmem:[%s232 + $0x13a] sm:$0xff]
      %v2881 = vld [vmem:[%s232 + $0x142] sm:$0xff]
      %v2882 = vld [vmem:[%s232 + $0x152] sm:$0xff]
      %v2883 = vld [vmem:[%s232 + $0x15a] sm:$0xff]
      %v2884 = vld [vmem:[%s232 + $0x16a] sm:$0xff]
      %v2885 = vld [vmem:[%s232 + $0x172] sm:$0xff]
      %2886 = vst [vmem:[#allocation3 + $0x28] sm:$0xff] %v2854
      %2887 = vst [vmem:[#allocation3 + $0x70] sm:$0xff] %v2855
      %2888 = vst [vmem:[#allocation3 + $0xb8] sm:$0xff] %v2856
      %2889 = vst [vmem:[#allocation3 + $0x100] sm:$0xff] %v2857
      %2890 = vst [vmem:[#allocation3 + $0x148] sm:$0xff] %v2858
      %2891 = vst [vmem:[#allocation3 + $0x190] sm:$0xff] %v2859
      %2892 = vst [vmem:[#allocation3 + $0x1d8] sm:$0xff] %v2860
      %2893 = vst [vmem:[#allocation3 + $0x220] sm:$0xff] %v2861
      %2894 = vst [vmem:[#allocation3 + $0x268] sm:$0xff] %v2862
      %2895 = vst [vmem:[#allocation3 + $0x2b0] sm:$0xff] %v2863
      %2896 = vst [vmem:[#allocation3 + $0x2f8] sm:$0xff] %v2864
      %2897 = vst [vmem:[#allocation3 + $0x340] sm:$0xff] %v2865
      %2898 = vst [vmem:[#allocation3 + $0x388] sm:$0xff] %v2866
      %2899 = vst [vmem:[#allocation3 + $0x3d0] sm:$0xff] %v2867
      %2900 = vst [vmem:[#allocation3 + $0x418] sm:$0xff] %v2868
      %2901 = vst [vmem:[#allocation3 + $0x460] sm:$0xff] %v2869
      %2902 = vst [vmem:[#allocation3 + $0x4a8] sm:$0xff] %v2870
      %2903 = vst [vmem:[#allocation3 + $0x4f0] sm:$0xff] %v2871
      %2904 = vst [vmem:[#allocation3 + $0x538] sm:$0xff] %v2872
      %2905 = vst [vmem:[#allocation3 + $0x580] sm:$0xff] %v2873
      %2906 = vst [vmem:[#allocation3 + $0x5c8] sm:$0xff] %v2874
      %2907 = vst [vmem:[#allocation3 + $0x610] sm:$0xff] %v2875
      %2908 = vst [vmem:[#allocation3 + $0x658] sm:$0xff] %v2876
      %2909 = vst [vmem:[#allocation3 + $0x6a0] sm:$0xff] %v2877
      %2910 = vst [vmem:[#allocation3 + $0x6e8] sm:$0xff] %v2878
      %2911 = vst [vmem:[#allocation3 + $0x730] sm:$0xff] %v2879
      %2912 = vst [vmem:[#allocation3 + $0x778] sm:$0xff] %v2880
      %2913 = vst [vmem:[#allocation3 + $0x7c0] sm:$0xff] %v2881
      %2914 = vst [vmem:[#allocation3 + $0x808] sm:$0xff] %v2882
      %2915 = vst [vmem:[#allocation3 + $0x850] sm:$0xff] %v2883
      %2916 = vst [vmem:[#allocation3 + $0x898] sm:$0xff] %v2884
      %2917 = vst [vmem:[#allocation3 + $0x8e0] sm:$0xff] %v2885
      %v2918 = vld [vmem:[%s713] sm:$0xff]
      %v2919 = vld [vmem:[%s713 + $0x8] sm:$0xff]
      %v2920 = vld [vmem:[%s713 + $0x18] sm:$0xff]
      %v2921 = vld [vmem:[%s713 + $0x20] sm:$0xff]
      %v2922 = vld [vmem:[%s713 + $0x30] sm:$0xff]
      %v2923 = vld [vmem:[%s713 + $0x38] sm:$0xff]
      %v2924 = vld [vmem:[%s713 + $0x48] sm:$0xff]
      %v2925 = vld [vmem:[%s713 + $0x50] sm:$0xff]
      %v2926 = vld [vmem:[%s713 + $0x60] sm:$0xff]
      %v2927 = vld [vmem:[%s713 + $0x68] sm:$0xff]
      %v2928 = vld [vmem:[%s713 + $0x78] sm:$0xff]
      %v2929 = vld [vmem:[%s713 + $0x80] sm:$0xff]
      %v2930 = vld [vmem:[%s713 + $0x90] sm:$0xff]
      %v2931 = vld [vmem:[%s713 + $0x98] sm:$0xff]
      %v2932 = vld [vmem:[%s713 + $0xa8] sm:$0xff]
      %v2933 = vld [vmem:[%s713 + $0xb0] sm:$0xff]
      %v2934 = vld [vmem:[%s713 + $0xc0] sm:$0xff]
      %v2935 = vld [vmem:[%s713 + $0xc8] sm:$0xff]
      %v2936 = vld [vmem:[%s713 + $0xd8] sm:$0xff]
      %v2937 = vld [vmem:[%s713 + $0xe0] sm:$0xff]
      %v2938 = vld [vmem:[%s713 + $0xf0] sm:$0xff]
      %v2939 = vld [vmem:[%s713 + $0xf8] sm:$0xff]
      %v2940 = vld [vmem:[%s713 + $0x108] sm:$0xff]
      %v2941 = vld [vmem:[%s713 + $0x110] sm:$0xff]
      %v2942 = vld [vmem:[%s713 + $0x120] sm:$0xff]
      %v2943 = vld [vmem:[%s713 + $0x128] sm:$0xff]
      %v2944 = vld [vmem:[%s713 + $0x138] sm:$0xff]
      %v2945 = vld [vmem:[%s713 + $0x140] sm:$0xff]
      %v2946 = vld [vmem:[%s713 + $0x150] sm:$0xff]
      %v2947 = vld [vmem:[%s713 + $0x158] sm:$0xff]
      %v2948 = vld [vmem:[%s713 + $0x168] sm:$0xff]
      %v2949 = vld [vmem:[%s713 + $0x170] sm:$0xff]
      %2950 = vst [vmem:[#allocation3 + $0x30] sm:$0xff] %v2918
      %2951 = vst [vmem:[#allocation3 + $0x78] sm:$0xff] %v2919
      %2952 = vst [vmem:[#allocation3 + $0xc0] sm:$0xff] %v2920
      %2953 = vst [vmem:[#allocation3 + $0x108] sm:$0xff] %v2921
      %2954 = vst [vmem:[#allocation3 + $0x150] sm:$0xff] %v2922
      %2955 = vst [vmem:[#allocation3 + $0x198] sm:$0xff] %v2923
      %2956 = vst [vmem:[#allocation3 + $0x1e0] sm:$0xff] %v2924
      %2957 = vst [vmem:[#allocation3 + $0x228] sm:$0xff] %v2925
      %2958 = vst [vmem:[#allocation3 + $0x270] sm:$0xff] %v2926
      %2959 = vst [vmem:[#allocation3 + $0x2b8] sm:$0xff] %v2927
      %2960 = vst [vmem:[#allocation3 + $0x300] sm:$0xff] %v2928
      %2961 = vst [vmem:[#allocation3 + $0x348] sm:$0xff] %v2929
      %2962 = vst [vmem:[#allocation3 + $0x390] sm:$0xff] %v2930
      %2963 = vst [vmem:[#allocation3 + $0x3d8] sm:$0xff] %v2931
      %2964 = vst [vmem:[#allocation3 + $0x420] sm:$0xff] %v2932
      %2965 = vst [vmem:[#allocation3 + $0x468] sm:$0xff] %v2933
      %2966 = vst [vmem:[#allocation3 + $0x4b0] sm:$0xff] %v2934
      %2967 = vst [vmem:[#allocation3 + $0x4f8] sm:$0xff] %v2935
      %2968 = vst [vmem:[#allocation3 + $0x540] sm:$0xff] %v2936
      %2969 = vst [vmem:[#allocation3 + $0x588] sm:$0xff] %v2937
      %2970 = vst [vmem:[#allocation3 + $0x5d0] sm:$0xff] %v2938
      %2971 = vst [vmem:[#allocation3 + $0x618] sm:$0xff] %v2939
      %2972 = vst [vmem:[#allocation3 + $0x660] sm:$0xff] %v2940
      %2973 = vst [vmem:[#allocation3 + $0x6a8] sm:$0xff] %v2941
      %2974 = vst [vmem:[#allocation3 + $0x6f0] sm:$0xff] %v2942
      %2975 = vst [vmem:[#allocation3 + $0x738] sm:$0xff] %v2943
      %2976 = vst [vmem:[#allocation3 + $0x780] sm:$0xff] %v2944
      %2977 = vst [vmem:[#allocation3 + $0x7c8] sm:$0xff] %v2945
      %2978 = vst [vmem:[#allocation3 + $0x810] sm:$0xff] %v2946
      %2979 = vst [vmem:[#allocation3 + $0x858] sm:$0xff] %v2947
      %2980 = vst [vmem:[#allocation3 + $0x8a0] sm:$0xff] %v2948
      %2981 = vst [vmem:[#allocation3 + $0x8e8] sm:$0xff] %v2949
      %v2982 = vld [vmem:[%s713 + $0x1] sm:$0xff]
      %v2983 = vld [vmem:[%s713 + $0x9] sm:$0xff]
      %v2984 = vld [vmem:[%s713 + $0x19] sm:$0xff]
      %v2985 = vld [vmem:[%s713 + $0x21] sm:$0xff]
      %v2986 = vld [vmem:[%s713 + $0x31] sm:$0xff]
      %v2987 = vld [vmem:[%s713 + $0x39] sm:$0xff]
      %v2988 = vld [vmem:[%s713 + $0x49] sm:$0xff]
      %v2989 = vld [vmem:[%s713 + $0x51] sm:$0xff]
      %v2990 = vld [vmem:[%s713 + $0x61] sm:$0xff]
      %v2991 = vld [vmem:[%s713 + $0x69] sm:$0xff]
      %v2992 = vld [vmem:[%s713 + $0x79] sm:$0xff]
      %v2993 = vld [vmem:[%s713 + $0x81] sm:$0xff]
      %v2994 = vld [vmem:[%s713 + $0x91] sm:$0xff]
      %v2995 = vld [vmem:[%s713 + $0x99] sm:$0xff]
      %v2996 = vld [vmem:[%s713 + $0xa9] sm:$0xff]
      %v2997 = vld [vmem:[%s713 + $0xb1] sm:$0xff]
      %v2998 = vld [vmem:[%s713 + $0xc1] sm:$0xff]
      %v2999 = vld [vmem:[%s713 + $0xc9] sm:$0xff]
      %v3000 = vld [vmem:[%s713 + $0xd9] sm:$0xff]
      %v3001 = vld [vmem:[%s713 + $0xe1] sm:$0xff]
      %v3002 = vld [vmem:[%s713 + $0xf1] sm:$0xff]
      %v3003 = vld [vmem:[%s713 + $0xf9] sm:$0xff]
      %v3004 = vld [vmem:[%s713 + $0x109] sm:$0xff]
      %v3005 = vld [vmem:[%s713 + $0x111] sm:$0xff]
      %v3006 = vld [vmem:[%s713 + $0x121] sm:$0xff]
      %v3007 = vld [vmem:[%s713 + $0x129] sm:$0xff]
      %v3008 = vld [vmem:[%s713 + $0x139] sm:$0xff]
      %v3009 = vld [vmem:[%s713 + $0x141] sm:$0xff]
      %v3010 = vld [vmem:[%s713 + $0x151] sm:$0xff]
      %v3011 = vld [vmem:[%s713 + $0x159] sm:$0xff]
      %v3012 = vld [vmem:[%s713 + $0x169] sm:$0xff]
      %v3013 = vld [vmem:[%s713 + $0x171] sm:$0xff]
      %3014 = vst [vmem:[#allocation3 + $0x38] sm:$0xff] %v2982
      %3015 = vst [vmem:[#allocation3 + $0x80] sm:$0xff] %v2983
      %3016 = vst [vmem:[#allocation3 + $0xc8] sm:$0xff] %v2984
      %3017 = vst [vmem:[#allocation3 + $0x110] sm:$0xff] %v2985
      %3018 = vst [vmem:[#allocation3 + $0x158] sm:$0xff] %v2986
      %3019 = vst [vmem:[#allocation3 + $0x1a0] sm:$0xff] %v2987
      %3020 = vst [vmem:[#allocation3 + $0x1e8] sm:$0xff] %v2988
      %3021 = vst [vmem:[#allocation3 + $0x230] sm:$0xff] %v2989
      %3022 = vst [vmem:[#allocation3 + $0x278] sm:$0xff] %v2990
      %3023 = vst [vmem:[#allocation3 + $0x2c0] sm:$0xff] %v2991
      %3024 = vst [vmem:[#allocation3 + $0x308] sm:$0xff] %v2992
      %3025 = vst [vmem:[#allocation3 + $0x350] sm:$0xff] %v2993
      %3026 = vst [vmem:[#allocation3 + $0x398] sm:$0xff] %v2994
      %3027 = vst [vmem:[#allocation3 + $0x3e0] sm:$0xff] %v2995
      %3028 = vst [vmem:[#allocation3 + $0x428] sm:$0xff] %v2996
      %3029 = vst [vmem:[#allocation3 + $0x470] sm:$0xff] %v2997
      %3030 = vst [vmem:[#allocation3 + $0x4b8] sm:$0xff] %v2998
      %3031 = vst [vmem:[#allocation3 + $0x500] sm:$0xff] %v2999
      %3032 = vst [vmem:[#allocation3 + $0x548] sm:$0xff] %v3000
      %3033 = vst [vmem:[#allocation3 + $0x590] sm:$0xff] %v3001
      %3034 = vst [vmem:[#allocation3 + $0x5d8] sm:$0xff] %v3002
      %3035 = vst [vmem:[#allocation3 + $0x620] sm:$0xff] %v3003
      %3036 = vst [vmem:[#allocation3 + $0x668] sm:$0xff] %v3004
      %3037 = vst [vmem:[#allocation3 + $0x6b0] sm:$0xff] %v3005
      %3038 = vst [vmem:[#allocation3 + $0x6f8] sm:$0xff] %v3006
      %3039 = vst [vmem:[#allocation3 + $0x740] sm:$0xff] %v3007
      %3040 = vst [vmem:[#allocation3 + $0x788] sm:$0xff] %v3008
      %3041 = vst [vmem:[#allocation3 + $0x7d0] sm:$0xff] %v3009
      %3042 = vst [vmem:[#allocation3 + $0x818] sm:$0xff] %v3010
      %3043 = vst [vmem:[#allocation3 + $0x860] sm:$0xff] %v3011
      %3044 = vst [vmem:[#allocation3 + $0x8a8] sm:$0xff] %v3012
      %3045 = vst [vmem:[#allocation3 + $0x8f0] sm:$0xff] %v3013
      %v3046 = vld [vmem:[%s713 + $0x2] sm:$0xff]
      %v3047 = vld [vmem:[%s713 + $0xa] sm:$0xff]
      %v3048 = vld [vmem:[%s713 + $0x1a] sm:$0xff]
      %v3049 = vld [vmem:[%s713 + $0x22] sm:$0xff]
      %v3050 = vld [vmem:[%s713 + $0x32] sm:$0xff]
      %v3051 = vld [vmem:[%s713 + $0x3a] sm:$0xff]
      %v3052 = vld [vmem:[%s713 + $0x4a] sm:$0xff]
      %v3053 = vld [vmem:[%s713 + $0x52] sm:$0xff]
      %v3054 = vld [vmem:[%s713 + $0x62] sm:$0xff]
      %v3055 = vld [vmem:[%s713 + $0x6a] sm:$0xff]
      %v3056 = vld [vmem:[%s713 + $0x7a] sm:$0xff]
      %v3057 = vld [vmem:[%s713 + $0x82] sm:$0xff]
      %v3058 = vld [vmem:[%s713 + $0x92] sm:$0xff]
      %v3059 = vld [vmem:[%s713 + $0x9a] sm:$0xff]
      %v3060 = vld [vmem:[%s713 + $0xaa] sm:$0xff]
      %v3061 = vld [vmem:[%s713 + $0xb2] sm:$0xff]
      %v3062 = vld [vmem:[%s713 + $0xc2] sm:$0xff]
      %v3063 = vld [vmem:[%s713 + $0xca] sm:$0xff]
      %v3064 = vld [vmem:[%s713 + $0xda] sm:$0xff]
      %v3065 = vld [vmem:[%s713 + $0xe2] sm:$0xff]
      %v3066 = vld [vmem:[%s713 + $0xf2] sm:$0xff]
      %v3067 = vld [vmem:[%s713 + $0xfa] sm:$0xff]
      %v3068 = vld [vmem:[%s713 + $0x10a] sm:$0xff]
      %v3069 = vld [vmem:[%s713 + $0x112] sm:$0xff]
      %v3070 = vld [vmem:[%s713 + $0x122] sm:$0xff]
      %v3071 = vld [vmem:[%s713 + $0x12a] sm:$0xff]
      %v3072 = vld [vmem:[%s713 + $0x13a] sm:$0xff]
      %v3073 = vld [vmem:[%s713 + $0x142] sm:$0xff]
      %v3074 = vld [vmem:[%s713 + $0x152] sm:$0xff]
      %v3075 = vld [vmem:[%s713 + $0x15a] sm:$0xff]
      %v3076 = vld [vmem:[%s713 + $0x16a] sm:$0xff]
      %v3077 = vld [vmem:[%s713 + $0x172] sm:$0xff]
      %3078 = vst [vmem:[#allocation3 + $0x40] sm:$0xff] %v3046
      %3079 = vst [vmem:[#allocation3 + $0x88] sm:$0xff] %v3047
      %3080 = vst [vmem:[#allocation3 + $0xd0] sm:$0xff] %v3048
      %3081 = vst [vmem:[#allocation3 + $0x118] sm:$0xff] %v3049
      %3082 = vst [vmem:[#allocation3 + $0x160] sm:$0xff] %v3050
      %3083 = vst [vmem:[#allocation3 + $0x1a8] sm:$0xff] %v3051
      %3084 = vst [vmem:[#allocation3 + $0x1f0] sm:$0xff] %v3052
      %3085 = vst [vmem:[#allocation3 + $0x238] sm:$0xff] %v3053
      %3086 = vst [vmem:[#allocation3 + $0x280] sm:$0xff] %v3054
      %3087 = vst [vmem:[#allocation3 + $0x2c8] sm:$0xff] %v3055
      %3088 = vst [vmem:[#allocation3 + $0x310] sm:$0xff] %v3056
      %3089 = vst [vmem:[#allocation3 + $0x358] sm:$0xff] %v3057
      %3090 = vst [vmem:[#allocation3 + $0x3a0] sm:$0xff] %v3058
      %3091 = vst [vmem:[#allocation3 + $0x3e8] sm:$0xff] %v3059
      %3092 = vst [vmem:[#allocation3 + $0x430] sm:$0xff] %v3060
      %3093 = vst [vmem:[#allocation3 + $0x478] sm:$0xff] %v3061
      %3094 = vst [vmem:[#allocation3 + $0x4c0] sm:$0xff] %v3062
      %3095 = vst [vmem:[#allocation3 + $0x508] sm:$0xff] %v3063
      %3096 = vst [vmem:[#allocation3 + $0x550] sm:$0xff] %v3064
      %3097 = vst [vmem:[#allocation3 + $0x598] sm:$0xff] %v3065
      %3098 = vst [vmem:[#allocation3 + $0x5e0] sm:$0xff] %v3066
      %3099 = vst [vmem:[#allocation3 + $0x628] sm:$0xff] %v3067
      %3100 = vst [vmem:[#allocation3 + $0x670] sm:$0xff] %v3068
      %3101 = vst [vmem:[#allocation3 + $0x6b8] sm:$0xff] %v3069
      %3102 = vst [vmem:[#allocation3 + $0x700] sm:$0xff] %v3070
      %3103 = vst [vmem:[#allocation3 + $0x748] sm:$0xff] %v3071
      %3104 = vst [vmem:[#allocation3 + $0x790] sm:$0xff] %v3072
      %3105 = vst [vmem:[#allocation3 + $0x7d8] sm:$0xff] %v3073
      %3106 = vst [vmem:[#allocation3 + $0x820] sm:$0xff] %v3074
      %3107 = vst [vmem:[#allocation3 + $0x868] sm:$0xff] %v3075
      %3108 = vst [vmem:[#allocation3 + $0x8b0] sm:$0xff] %v3076
      %3109 = vst [vmem:[#allocation3 + $0x8f8] sm:$0xff] %v3077
      %v3110 = vld [vmem:[#allocation3] sm:$0xff]
      %v3111 = vld [vmem:[#allocation3 + $0x8] sm:$0xff]
      %v3112 = vld [vmem:[#allocation3 + $0x10] sm:$0xff]
      %v3113 = vld [vmem:[#allocation3 + $0x18] sm:$0xff]
      %v3114 = vld [vmem:[#allocation3 + $0x20] sm:$0xff]
      %v3115 = vld [vmem:[#allocation3 + $0x28] sm:$0xff]
      %v3116 = vld [vmem:[#allocation3 + $0x30] sm:$0xff]
      %v3117 = vld [vmem:[#allocation3 + $0x38] sm:$0xff]
      %v3118 = vld [vmem:[#allocation3 + $0x40] sm:$0xff]
      %v3119 = vld [vmem:[#allocation3 + $0x48] sm:$0xff]
      %v3120 = vld [vmem:[#allocation3 + $0x50] sm:$0xff]
      %v3121 = vld [vmem:[#allocation3 + $0x58] sm:$0xff]
      %v3122 = vld [vmem:[#allocation3 + $0x60] sm:$0xff]
      %v3123 = vld [vmem:[#allocation3 + $0x68] sm:$0xff]
      %v3124 = vld [vmem:[#allocation3 + $0x70] sm:$0xff]
      %v3125 = vld [vmem:[#allocation3 + $0x78] sm:$0xff]
      %v3126 = vld [vmem:[#allocation3 + $0x80] sm:$0xff]
      %v3127 = vld [vmem:[#allocation3 + $0x88] sm:$0xff]
      %v3128 = vld [vmem:[#allocation3 + $0x90] sm:$0xff]
      %v3129 = vld [vmem:[#allocation3 + $0x98] sm:$0xff]
      %v3130 = vld [vmem:[#allocation3 + $0xa0] sm:$0xff]
      %v3131 = vld [vmem:[#allocation3 + $0xa8] sm:$0xff]
      %v3132 = vld [vmem:[#allocation3 + $0xb0] sm:$0xff]
      %v3133 = vld [vmem:[#allocation3 + $0xb8] sm:$0xff]
      %v3134 = vld [vmem:[#allocation3 + $0xc0] sm:$0xff]
      %v3135 = vld [vmem:[#allocation3 + $0xc8] sm:$0xff]
      %v3136 = vld [vmem:[#allocation3 + $0xd0] sm:$0xff]
      %v3137 = vld [vmem:[#allocation3 + $0xd8] sm:$0xff]
      %v3138 = vld [vmem:[#allocation3 + $0xe0] sm:$0xff]
      %v3139 = vld [vmem:[#allocation3 + $0xe8] sm:$0xff]
      %v3140 = vld [vmem:[#allocation3 + $0xf0] sm:$0xff]
      %v3141 = vld [vmem:[#allocation3 + $0xf8] sm:$0xff]
      %v3142 = vld [vmem:[#allocation3 + $0x100] sm:$0xff]
      %v3143 = vld [vmem:[#allocation3 + $0x108] sm:$0xff]
      %v3144 = vld [vmem:[#allocation3 + $0x110] sm:$0xff]
      %v3145 = vld [vmem:[#allocation3 + $0x118] sm:$0xff]
      %v3146 = vld [vmem:[#allocation3 + $0x120] sm:$0xff]
      %v3147 = vld [vmem:[#allocation3 + $0x128] sm:$0xff]
      %v3148 = vld [vmem:[#allocation3 + $0x130] sm:$0xff]
      %v3149 = vld [vmem:[#allocation3 + $0x138] sm:$0xff]
      %v3150 = vld [vmem:[#allocation3 + $0x140] sm:$0xff]
      %v3151 = vld [vmem:[#allocation3 + $0x148] sm:$0xff]
      %v3152 = vld [vmem:[#allocation3 + $0x150] sm:$0xff]
      %v3153 = vld [vmem:[#allocation3 + $0x158] sm:$0xff]
      %v3154 = vld [vmem:[#allocation3 + $0x160] sm:$0xff]
      %v3155 = vld [vmem:[#allocation3 + $0x168] sm:$0xff]
      %v3156 = vld [vmem:[#allocation3 + $0x170] sm:$0xff]
      %v3157 = vld [vmem:[#allocation3 + $0x178] sm:$0xff]
      %v3158 = vld [vmem:[#allocation3 + $0x180] sm:$0xff]
      %v3159 = vld [vmem:[#allocation3 + $0x188] sm:$0xff]
      %v3160 = vld [vmem:[#allocation3 + $0x190] sm:$0xff]
      %v3161 = vld [vmem:[#allocation3 + $0x198] sm:$0xff]
      %v3162 = vld [vmem:[#allocation3 + $0x1a0] sm:$0xff]
      %v3163 = vld [vmem:[#allocation3 + $0x1a8] sm:$0xff]
      %v3164 = vld [vmem:[#allocation3 + $0x1b0] sm:$0xff]
      %v3165 = vld [vmem:[#allocation3 + $0x1b8] sm:$0xff]
      %v3166 = vld [vmem:[#allocation3 + $0x1c0] sm:$0xff]
      %v3167 = vld [vmem:[#allocation3 + $0x1c8] sm:$0xff]
      %v3168 = vld [vmem:[#allocation3 + $0x1d0] sm:$0xff]
      %v3169 = vld [vmem:[#allocation3 + $0x1d8] sm:$0xff]
      %v3170 = vld [vmem:[#allocation3 + $0x1e0] sm:$0xff]
      %v3171 = vld [vmem:[#allocation3 + $0x1e8] sm:$0xff]
      %v3172 = vld [vmem:[#allocation3 + $0x1f0] sm:$0xff]
      %v3173 = vld [vmem:[#allocation3 + $0x1f8] sm:$0xff]
      %v3174 = vld [vmem:[#allocation3 + $0x200] sm:$0xff]
      %v3175 = vld [vmem:[#allocation3 + $0x208] sm:$0xff]
      %v3176 = vld [vmem:[#allocation3 + $0x210] sm:$0xff]
      %v3177 = vld [vmem:[#allocation3 + $0x218] sm:$0xff]
      %v3178 = vld [vmem:[#allocation3 + $0x220] sm:$0xff]
      %v3179 = vld [vmem:[#allocation3 + $0x228] sm:$0xff]
      %v3180 = vld [vmem:[#allocation3 + $0x230] sm:$0xff]
      %v3181 = vld [vmem:[#allocation3 + $0x238] sm:$0xff]
      %v3182 = vld [vmem:[#allocation3 + $0x240] sm:$0xff]
      %v3183 = vld [vmem:[#allocation3 + $0x248] sm:$0xff]
      %v3184 = vld [vmem:[#allocation3 + $0x250] sm:$0xff]
      %v3185 = vld [vmem:[#allocation3 + $0x258] sm:$0xff]
      %v3186 = vld [vmem:[#allocation3 + $0x260] sm:$0xff]
      %v3187 = vld [vmem:[#allocation3 + $0x268] sm:$0xff]
      %v3188 = vld [vmem:[#allocation3 + $0x270] sm:$0xff]
      %v3189 = vld [vmem:[#allocation3 + $0x278] sm:$0xff]
      %v3190 = vld [vmem:[#allocation3 + $0x280] sm:$0xff]
      %v3191 = vld [vmem:[#allocation3 + $0x288] sm:$0xff]
      %v3192 = vld [vmem:[#allocation3 + $0x290] sm:$0xff]
      %v3193 = vld [vmem:[#allocation3 + $0x298] sm:$0xff]
      %v3194 = vld [vmem:[#allocation3 + $0x2a0] sm:$0xff]
      %v3195 = vld [vmem:[#allocation3 + $0x2a8] sm:$0xff]
      %v3196 = vld [vmem:[#allocation3 + $0x2b0] sm:$0xff]
      %v3197 = vld [vmem:[#allocation3 + $0x2b8] sm:$0xff]
      %v3198 = vld [vmem:[#allocation3 + $0x2c0] sm:$0xff]
      %v3199 = vld [vmem:[#allocation3 + $0x2c8] sm:$0xff]
      %v3200 = vld [vmem:[#allocation3 + $0x2d0] sm:$0xff]
      %v3201 = vld [vmem:[#allocation3 + $0x2d8] sm:$0xff]
      %v3202 = vld [vmem:[#allocation3 + $0x2e0] sm:$0xff]
      %v3203 = vld [vmem:[#allocation3 + $0x2e8] sm:$0xff]
      %v3204 = vld [vmem:[#allocation3 + $0x2f0] sm:$0xff]
      %v3205 = vld [vmem:[#allocation3 + $0x2f8] sm:$0xff]
      %v3206 = vld [vmem:[#allocation3 + $0x300] sm:$0xff]
      %v3207 = vld [vmem:[#allocation3 + $0x308] sm:$0xff]
      %v3208 = vld [vmem:[#allocation3 + $0x310] sm:$0xff]
      %v3209 = vld [vmem:[#allocation3 + $0x318] sm:$0xff]
      %v3210 = vld [vmem:[#allocation3 + $0x320] sm:$0xff]
      %v3211 = vld [vmem:[#allocation3 + $0x328] sm:$0xff]
      %v3212 = vld [vmem:[#allocation3 + $0x330] sm:$0xff]
      %v3213 = vld [vmem:[#allocation3 + $0x338] sm:$0xff]
      %v3214 = vld [vmem:[#allocation3 + $0x340] sm:$0xff]
      %v3215 = vld [vmem:[#allocation3 + $0x348] sm:$0xff]
      %v3216 = vld [vmem:[#allocation3 + $0x350] sm:$0xff]
      %v3217 = vld [vmem:[#allocation3 + $0x358] sm:$0xff]
      %v3218 = vld [vmem:[#allocation3 + $0x360] sm:$0xff]
      %v3219 = vld [vmem:[#allocation3 + $0x368] sm:$0xff]
      %v3220 = vld [vmem:[#allocation3 + $0x370] sm:$0xff]
      %v3221 = vld [vmem:[#allocation3 + $0x378] sm:$0xff]
      %v3222 = vld [vmem:[#allocation3 + $0x380] sm:$0xff]
      %v3223 = vld [vmem:[#allocation3 + $0x388] sm:$0xff]
      %v3224 = vld [vmem:[#allocation3 + $0x390] sm:$0xff]
      %v3225 = vld [vmem:[#allocation3 + $0x398] sm:$0xff]
      %v3226 = vld [vmem:[#allocation3 + $0x3a0] sm:$0xff]
      %v3227 = vld [vmem:[#allocation3 + $0x3a8] sm:$0xff]
      %v3228 = vld [vmem:[#allocation3 + $0x3b0] sm:$0xff]
      %v3229 = vld [vmem:[#allocation3 + $0x3b8] sm:$0xff]
      %v3230 = vld [vmem:[#allocation3 + $0x3c0] sm:$0xff]
      %v3231 = vld [vmem:[#allocation3 + $0x3c8] sm:$0xff]
      %v3232 = vld [vmem:[#allocation3 + $0x3d0] sm:$0xff]
      %v3233 = vld [vmem:[#allocation3 + $0x3d8] sm:$0xff]
      %v3234 = vld [vmem:[#allocation3 + $0x3e0] sm:$0xff]
      %v3235 = vld [vmem:[#allocation3 + $0x3e8] sm:$0xff]
      %v3236 = vld [vmem:[#allocation3 + $0x3f0] sm:$0xff]
      %v3237 = vld [vmem:[#allocation3 + $0x3f8] sm:$0xff]
      %v3238 = vld [vmem:[#allocation3 + $0x400] sm:$0xff]
      %v3239 = vld [vmem:[#allocation3 + $0x408] sm:$0xff]
      %v3240 = vld [vmem:[#allocation3 + $0x410] sm:$0xff]
      %v3241 = vld [vmem:[#allocation3 + $0x418] sm:$0xff]
      %v3242 = vld [vmem:[#allocation3 + $0x420] sm:$0xff]
      %v3243 = vld [vmem:[#allocation3 + $0x428] sm:$0xff]
      %v3244 = vld [vmem:[#allocation3 + $0x430] sm:$0xff]
      %v3245 = vld [vmem:[#allocation3 + $0x438] sm:$0xff]
      %v3246 = vld [vmem:[#allocation3 + $0x440] sm:$0xff]
      %v3247 = vld [vmem:[#allocation3 + $0x448] sm:$0xff]
      %v3248 = vld [vmem:[#allocation3 + $0x450] sm:$0xff]
      %v3249 = vld [vmem:[#allocation3 + $0x458] sm:$0xff]
      %v3250 = vld [vmem:[#allocation3 + $0x460] sm:$0xff]
      %v3251 = vld [vmem:[#allocation3 + $0x468] sm:$0xff]
      %v3252 = vld [vmem:[#allocation3 + $0x470] sm:$0xff]
      %v3253 = vld [vmem:[#allocation3 + $0x478] sm:$0xff]
      %v3254 = vld [vmem:[#allocation3 + $0x480] sm:$0xff]
      %v3255 = vld [vmem:[#allocation3 + $0x488] sm:$0xff]
      %v3256 = vld [vmem:[#allocation3 + $0x490] sm:$0xff]
      %v3257 = vld [vmem:[#allocation3 + $0x498] sm:$0xff]
      %v3258 = vld [vmem:[#allocation3 + $0x4a0] sm:$0xff]
      %v3259 = vld [vmem:[#allocation3 + $0x4a8] sm:$0xff]
      %v3260 = vld [vmem:[#allocation3 + $0x4b0] sm:$0xff]
      %v3261 = vld [vmem:[#allocation3 + $0x4b8] sm:$0xff]
      %v3262 = vld [vmem:[#allocation3 + $0x4c0] sm:$0xff]
      %v3263 = vld [vmem:[#allocation3 + $0x4c8] sm:$0xff]
      %v3264 = vld [vmem:[#allocation3 + $0x4d0] sm:$0xff]
      %v3265 = vld [vmem:[#allocation3 + $0x4d8] sm:$0xff]
      %v3266 = vld [vmem:[#allocation3 + $0x4e0] sm:$0xff]
      %v3267 = vld [vmem:[#allocation3 + $0x4e8] sm:$0xff]
      %v3268 = vld [vmem:[#allocation3 + $0x4f0] sm:$0xff]
      %v3269 = vld [vmem:[#allocation3 + $0x4f8] sm:$0xff]
      %v3270 = vld [vmem:[#allocation3 + $0x500] sm:$0xff]
      %v3271 = vld [vmem:[#allocation3 + $0x508] sm:$0xff]
      %v3272 = vld [vmem:[#allocation3 + $0x510] sm:$0xff]
      %v3273 = vld [vmem:[#allocation3 + $0x518] sm:$0xff]
      %v3274 = vld [vmem:[#allocation3 + $0x520] sm:$0xff]
      %v3275 = vld [vmem:[#allocation3 + $0x528] sm:$0xff]
      %v3276 = vld [vmem:[#allocation3 + $0x530] sm:$0xff]
      %v3277 = vld [vmem:[#allocation3 + $0x538] sm:$0xff]
      %v3278 = vld [vmem:[#allocation3 + $0x540] sm:$0xff]
      %v3279 = vld [vmem:[#allocation3 + $0x548] sm:$0xff]
      %v3280 = vld [vmem:[#allocation3 + $0x550] sm:$0xff]
      %v3281 = vld [vmem:[#allocation3 + $0x558] sm:$0xff]
      %v3282 = vld [vmem:[#allocation3 + $0x560] sm:$0xff]
      %v3283 = vld [vmem:[#allocation3 + $0x568] sm:$0xff]
      %v3284 = vld [vmem:[#allocation3 + $0x570] sm:$0xff]
      %v3285 = vld [vmem:[#allocation3 + $0x578] sm:$0xff]
      %v3286 = vld [vmem:[#allocation3 + $0x580] sm:$0xff]
      %v3287 = vld [vmem:[#allocation3 + $0x588] sm:$0xff]
      %v3288 = vld [vmem:[#allocation3 + $0x590] sm:$0xff]
      %v3289 = vld [vmem:[#allocation3 + $0x598] sm:$0xff]
      %v3290 = vld [vmem:[#allocation3 + $0x5a0] sm:$0xff]
      %v3291 = vld [vmem:[#allocation3 + $0x5a8] sm:$0xff]
      %v3292 = vld [vmem:[#allocation3 + $0x5b0] sm:$0xff]
      %v3293 = vld [vmem:[#allocation3 + $0x5b8] sm:$0xff]
      %v3294 = vld [vmem:[#allocation3 + $0x5c0] sm:$0xff]
      %v3295 = vld [vmem:[#allocation3 + $0x5c8] sm:$0xff]
      %v3296 = vld [vmem:[#allocation3 + $0x5d0] sm:$0xff]
      %v3297 = vld [vmem:[#allocation3 + $0x5d8] sm:$0xff]
      %v3298 = vld [vmem:[#allocation3 + $0x5e0] sm:$0xff]
      %v3299 = vld [vmem:[#allocation3 + $0x5e8] sm:$0xff]
      %v3300 = vld [vmem:[#allocation3 + $0x5f0] sm:$0xff]
      %v3301 = vld [vmem:[#allocation3 + $0x5f8] sm:$0xff]
      %v3302 = vld [vmem:[#allocation3 + $0x600] sm:$0xff]
      %v3303 = vld [vmem:[#allocation3 + $0x608] sm:$0xff]
      %v3304 = vld [vmem:[#allocation3 + $0x610] sm:$0xff]
      %v3305 = vld [vmem:[#allocation3 + $0x618] sm:$0xff]
      %v3306 = vld [vmem:[#allocation3 + $0x620] sm:$0xff]
      %v3307 = vld [vmem:[#allocation3 + $0x628] sm:$0xff]
      %v3308 = vld [vmem:[#allocation3 + $0x630] sm:$0xff]
      %v3309 = vld [vmem:[#allocation3 + $0x638] sm:$0xff]
      %v3310 = vld [vmem:[#allocation3 + $0x640] sm:$0xff]
      %v3311 = vld [vmem:[#allocation3 + $0x648] sm:$0xff]
      %v3312 = vld [vmem:[#allocation3 + $0x650] sm:$0xff]
      %v3313 = vld [vmem:[#allocation3 + $0x658] sm:$0xff]
      %v3314 = vld [vmem:[#allocation3 + $0x660] sm:$0xff]
      %v3315 = vld [vmem:[#allocation3 + $0x668] sm:$0xff]
      %v3316 = vld [vmem:[#allocation3 + $0x670] sm:$0xff]
      %v3317 = vld [vmem:[#allocation3 + $0x678] sm:$0xff]
      %v3318 = vld [vmem:[#allocation3 + $0x680] sm:$0xff]
      %v3319 = vld [vmem:[#allocation3 + $0x688] sm:$0xff]
      %v3320 = vld [vmem:[#allocation3 + $0x690] sm:$0xff]
      %v3321 = vld [vmem:[#allocation3 + $0x698] sm:$0xff]
      %v3322 = vld [vmem:[#allocation3 + $0x6a0] sm:$0xff]
      %v3323 = vld [vmem:[#allocation3 + $0x6a8] sm:$0xff]
      %v3324 = vld [vmem:[#allocation3 + $0x6b0] sm:$0xff]
      %v3325 = vld [vmem:[#allocation3 + $0x6b8] sm:$0xff]
      %v3326 = vld [vmem:[#allocation3 + $0x6c0] sm:$0xff]
      %v3327 = vld [vmem:[#allocation3 + $0x6c8] sm:$0xff]
      %v3328 = vld [vmem:[#allocation3 + $0x6d0] sm:$0xff]
      %v3329 = vld [vmem:[#allocation3 + $0x6d8] sm:$0xff]
      %v3330 = vld [vmem:[#allocation3 + $0x6e0] sm:$0xff]
      %v3331 = vld [vmem:[#allocation3 + $0x6e8] sm:$0xff]
      %v3332 = vld [vmem:[#allocation3 + $0x6f0] sm:$0xff]
      %v3333 = vld [vmem:[#allocation3 + $0x6f8] sm:$0xff]
      %v3334 = vld [vmem:[#allocation3 + $0x700] sm:$0xff]
      %v3335 = vld [vmem:[#allocation3 + $0x708] sm:$0xff]
      %v3336 = vld [vmem:[#allocation3 + $0x710] sm:$0xff]
      %v3337 = vld [vmem:[#allocation3 + $0x718] sm:$0xff]
      %v3338 = vld [vmem:[#allocation3 + $0x720] sm:$0xff]
      %v3339 = vld [vmem:[#allocation3 + $0x728] sm:$0xff]
      %v3340 = vld [vmem:[#allocation3 + $0x730] sm:$0xff]
      %v3341 = vld [vmem:[#allocation3 + $0x738] sm:$0xff]
      %v3342 = vld [vmem:[#allocation3 + $0x740] sm:$0xff]
      %v3343 = vld [vmem:[#allocation3 + $0x748] sm:$0xff]
      %v3344 = vld [vmem:[#allocation3 + $0x750] sm:$0xff]
      %v3345 = vld [vmem:[#allocation3 + $0x758] sm:$0xff]
      %v3346 = vld [vmem:[#allocation3 + $0x760] sm:$0xff]
      %v3347 = vld [vmem:[#allocation3 + $0x768] sm:$0xff]
      %v3348 = vld [vmem:[#allocation3 + $0x770] sm:$0xff]
      %v3349 = vld [vmem:[#allocation3 + $0x778] sm:$0xff]
      %v3350 = vld [vmem:[#allocation3 + $0x780] sm:$0xff]
      %v3351 = vld [vmem:[#allocation3 + $0x788] sm:$0xff]
      %v3352 = vld [vmem:[#allocation3 + $0x790] sm:$0xff]
      %v3353 = vld [vmem:[#allocation3 + $0x798] sm:$0xff]
      %v3354 = vld [vmem:[#allocation3 + $0x7a0] sm:$0xff]
      %v3355 = vld [vmem:[#allocation3 + $0x7a8] sm:$0xff]
      %v3356 = vld [vmem:[#allocation3 + $0x7b0] sm:$0xff]
      %v3357 = vld [vmem:[#allocation3 + $0x7b8] sm:$0xff]
      %v3358 = vld [vmem:[#allocation3 + $0x7c0] sm:$0xff]
      %v3359 = vld [vmem:[#allocation3 + $0x7c8] sm:$0xff]
      %v3360 = vld [vmem:[#allocation3 + $0x7d0] sm:$0xff]
      %v3361 = vld [vmem:[#allocation3 + $0x7d8] sm:$0xff]
      %v3362 = vld [vmem:[#allocation3 + $0x7e0] sm:$0xff]
      %v3363 = vld [vmem:[#allocation3 + $0x7e8] sm:$0xff]
      %v3364 = vld [vmem:[#allocation3 + $0x7f0] sm:$0xff]
      %v3365 = vld [vmem:[#allocation3 + $0x7f8] sm:$0xff]
      %v3366 = vld [vmem:[#allocation3 + $0x800] sm:$0xff]
      %v3367 = vld [vmem:[#allocation3 + $0x808] sm:$0xff]
      %v3368 = vld [vmem:[#allocation3 + $0x810] sm:$0xff]
      %v3369 = vld [vmem:[#allocation3 + $0x818] sm:$0xff]
      %v3370 = vld [vmem:[#allocation3 + $0x820] sm:$0xff]
      %v3371 = vld [vmem:[#allocation3 + $0x828] sm:$0xff]
      %v3372 = vld [vmem:[#allocation3 + $0x830] sm:$0xff]
      %v3373 = vld [vmem:[#allocation3 + $0x838] sm:$0xff]
      %v3374 = vld [vmem:[#allocation3 + $0x840] sm:$0xff]
      %v3375 = vld [vmem:[#allocation3 + $0x848] sm:$0xff]
      %v3376 = vld [vmem:[#allocation3 + $0x850] sm:$0xff]
      %v3377 = vld [vmem:[#allocation3 + $0x858] sm:$0xff]
      %v3378 = vld [vmem:[#allocation3 + $0x860] sm:$0xff]
      %v3379 = vld [vmem:[#allocation3 + $0x868] sm:$0xff]
      %v3380 = vld [vmem:[#allocation3 + $0x870] sm:$0xff]
      %v3381 = vld [vmem:[#allocation3 + $0x878] sm:$0xff]
      %v3382 = vld [vmem:[#allocation3 + $0x880] sm:$0xff]
      %v3383 = vld [vmem:[#allocation3 + $0x888] sm:$0xff]
      %v3384 = vld [vmem:[#allocation3 + $0x890] sm:$0xff]
      %v3385 = vld [vmem:[#allocation3 + $0x898] sm:$0xff]
      %v3386 = vld [vmem:[#allocation3 + $0x8a0] sm:$0xff]
      %v3387 = vld [vmem:[#allocation3 + $0x8a8] sm:$0xff]
      %v3388 = vld [vmem:[#allocation3 + $0x8b0] sm:$0xff]
      %v3389 = vld [vmem:[#allocation3 + $0x8b8] sm:$0xff]
      %v3390 = vld [vmem:[#allocation3 + $0x8c0] sm:$0xff]
      %v3391 = vld [vmem:[#allocation3 + $0x8c8] sm:$0xff]
      %v3392 = vld [vmem:[#allocation3 + $0x8d0] sm:$0xff]
      %v3393 = vld [vmem:[#allocation3 + $0x8d8] sm:$0xff]
      %v3394 = vld [vmem:[#allocation3 + $0x8e0] sm:$0xff]
      %v3395 = vld [vmem:[#allocation3 + $0x8e8] sm:$0xff]
      %v3396 = vld [vmem:[#allocation3 + $0x8f0] sm:$0xff]
      %v3397 = vld [vmem:[#allocation3 + $0x8f8] sm:$0xff]
      %v3398 = vld [vmem:[%s3] sm:$0xff]
      %v3399 = vld [vmem:[%s3 + $0x8] sm:$0xff]
      %v3400 = vld [vmem:[%s3 + $0x10] sm:$0xff]
      %v3401 = vld [vmem:[%s3 + $0x18] sm:$0xff]
      %v3402 = vld [vmem:[%s3 + $0x20] sm:$0xff]
      %v3403 = vld [vmem:[%s3 + $0x28] sm:$0xff]
      %v3404 = vld [vmem:[%s3 + $0x30] sm:$0xff]
      %v3405 = vld [vmem:[%s3 + $0x38] sm:$0xff]
      %v3406 = vld [vmem:[%s3 + $0x40] sm:$0xff]
      %v3407 = vld [vmem:[%s3 + $0x48] sm:$0xff]
      %v3408 = vld [vmem:[%s3 + $0x50] sm:$0xff]
      %v3409 = vld [vmem:[%s3 + $0x58] sm:$0xff]
      %v3410 = vld [vmem:[%s3 + $0x60] sm:$0xff]
      %v3411 = vld [vmem:[%s3 + $0x68] sm:$0xff]
      %v3412 = vld [vmem:[%s3 + $0x70] sm:$0xff]
      %v3413 = vld [vmem:[%s3 + $0x78] sm:$0xff]
      %v3414 = vld [vmem:[%s3 + $0x80] sm:$0xff]
      %v3415 = vld [vmem:[%s3 + $0x88] sm:$0xff]
      %v3416 = vld [vmem:[%s3 + $0x90] sm:$0xff]
      %v3417 = vld [vmem:[%s3 + $0x98] sm:$0xff]
      %v3418 = vld [vmem:[%s3 + $0xa0] sm:$0xff]
      %v3419 = vld [vmem:[%s3 + $0xa8] sm:$0xff]
      %v3420 = vld [vmem:[%s3 + $0xb0] sm:$0xff]
      %v3421 = vld [vmem:[%s3 + $0xb8] sm:$0xff]
      %v3422 = vld [vmem:[%s3 + $0xc0] sm:$0xff]
      %v3423 = vld [vmem:[%s3 + $0xc8] sm:$0xff]
      %v3424 = vld [vmem:[%s3 + $0xd0] sm:$0xff]
      %v3425 = vld [vmem:[%s3 + $0xd8] sm:$0xff]
      %v3426 = vld [vmem:[%s3 + $0xe0] sm:$0xff]
      %v3427 = vld [vmem:[%s3 + $0xe8] sm:$0xff]
      %v3428 = vld [vmem:[%s3 + $0xf0] sm:$0xff]
      %v3429 = vld [vmem:[%s3 + $0xf8] sm:$0xff]
      %v3430 = vld [vmem:[%s3 + $0x100] sm:$0xff]
      %v3431 = vld [vmem:[%s3 + $0x108] sm:$0xff]
      %v3432 = vld [vmem:[%s3 + $0x110] sm:$0xff]
      %v3433 = vld [vmem:[%s3 + $0x118] sm:$0xff]
      %v3434 = vld [vmem:[%s3 + $0x120] sm:$0xff]
      %v3435 = vld [vmem:[%s3 + $0x128] sm:$0xff]
      %v3436 = vld [vmem:[%s3 + $0x130] sm:$0xff]
      %v3437 = vld [vmem:[%s3 + $0x138] sm:$0xff]
      %v3438 = vld [vmem:[%s3 + $0x140] sm:$0xff]
      %v3439 = vld [vmem:[%s3 + $0x148] sm:$0xff]
      %v3440 = vld [vmem:[%s3 + $0x150] sm:$0xff]
      %v3441 = vld [vmem:[%s3 + $0x158] sm:$0xff]
      %v3442 = vld [vmem:[%s3 + $0x160] sm:$0xff]
      %v3443 = vld [vmem:[%s3 + $0x168] sm:$0xff]
      %v3444 = vld [vmem:[%s3 + $0x170] sm:$0xff]
      %v3445 = vld [vmem:[%s3 + $0x178] sm:$0xff]
      %v3446 = vld [vmem:[%s3 + $0x180] sm:$0xff]
      %v3447 = vld [vmem:[%s3 + $0x188] sm:$0xff]
      %v3448 = vld [vmem:[%s3 + $0x190] sm:$0xff]
      %v3449 = vld [vmem:[%s3 + $0x198] sm:$0xff]
      %v3450 = vld [vmem:[%s3 + $0x1a0] sm:$0xff]
      %v3451 = vld [vmem:[%s3 + $0x1a8] sm:$0xff]
      %v3452 = vld [vmem:[%s3 + $0x1b0] sm:$0xff]
      %v3453 = vld [vmem:[%s3 + $0x1b8] sm:$0xff]
      %v3454 = vld [vmem:[%s3 + $0x1c0] sm:$0xff]
      %v3455 = vld [vmem:[%s3 + $0x1c8] sm:$0xff]
      %v3456 = vld [vmem:[%s3 + $0x1d0] sm:$0xff]
      %v3457 = vld [vmem:[%s3 + $0x1d8] sm:$0xff]
      %v3458 = vld [vmem:[%s3 + $0x1e0] sm:$0xff]
      %v3459 = vld [vmem:[%s3 + $0x1e8] sm:$0xff]
      %v3460 = vld [vmem:[%s3 + $0x1f0] sm:$0xff]
      %v3461 = vld [vmem:[%s3 + $0x1f8] sm:$0xff]
      %v3462 = vld [vmem:[%s3 + $0x200] sm:$0xff]
      %v3463 = vld [vmem:[%s3 + $0x208] sm:$0xff]
      %v3464 = vld [vmem:[%s3 + $0x210] sm:$0xff]
      %v3465 = vld [vmem:[%s3 + $0x218] sm:$0xff]
      %v3466 = vld [vmem:[%s3 + $0x220] sm:$0xff]
      %v3467 = vld [vmem:[%s3 + $0x228] sm:$0xff]
      %v3468 = vld [vmem:[%s3 + $0x230] sm:$0xff]
      %v3469 = vld [vmem:[%s3 + $0x238] sm:$0xff]
      %v3470 = vld [vmem:[%s3 + $0x240] sm:$0xff]
      %v3471 = vld [vmem:[%s3 + $0x248] sm:$0xff]
      %v3472 = vld [vmem:[%s3 + $0x250] sm:$0xff]
      %v3473 = vld [vmem:[%s3 + $0x258] sm:$0xff]
      %v3474 = vld [vmem:[%s3 + $0x260] sm:$0xff]
      %v3475 = vld [vmem:[%s3 + $0x268] sm:$0xff]
      %v3476 = vld [vmem:[%s3 + $0x270] sm:$0xff]
      %v3477 = vld [vmem:[%s3 + $0x278] sm:$0xff]
      %v3478 = vld [vmem:[%s3 + $0x280] sm:$0xff]
      %v3479 = vld [vmem:[%s3 + $0x288] sm:$0xff]
      %v3480 = vld [vmem:[%s3 + $0x290] sm:$0xff]
      %v3481 = vld [vmem:[%s3 + $0x298] sm:$0xff]
      %v3482 = vld [vmem:[%s3 + $0x2a0] sm:$0xff]
      %v3483 = vld [vmem:[%s3 + $0x2a8] sm:$0xff]
      %v3484 = vld [vmem:[%s3 + $0x2b0] sm:$0xff]
      %v3485 = vld [vmem:[%s3 + $0x2b8] sm:$0xff]
      %v3486 = vld [vmem:[%s3 + $0x2c0] sm:$0xff]
      %v3487 = vld [vmem:[%s3 + $0x2c8] sm:$0xff]
      %v3488 = vld [vmem:[%s3 + $0x2d0] sm:$0xff]
      %v3489 = vld [vmem:[%s3 + $0x2d8] sm:$0xff]
      %v3490 = vld [vmem:[%s3 + $0x2e0] sm:$0xff]
      %v3491 = vld [vmem:[%s3 + $0x2e8] sm:$0xff]
      %v3492 = vld [vmem:[%s3 + $0x2f0] sm:$0xff]
      %v3493 = vld [vmem:[%s3 + $0x2f8] sm:$0xff]
      %v3494 = vld [vmem:[%s3 + $0x300] sm:$0xff]
      %v3495 = vld [vmem:[%s3 + $0x308] sm:$0xff]
      %v3496 = vld [vmem:[%s3 + $0x310] sm:$0xff]
      %v3497 = vld [vmem:[%s3 + $0x318] sm:$0xff]
      %v3498 = vld [vmem:[%s3 + $0x320] sm:$0xff]
      %v3499 = vld [vmem:[%s3 + $0x328] sm:$0xff]
      %v3500 = vld [vmem:[%s3 + $0x330] sm:$0xff]
      %v3501 = vld [vmem:[%s3 + $0x338] sm:$0xff]
      %v3502 = vld [vmem:[%s3 + $0x340] sm:$0xff]
      %v3503 = vld [vmem:[%s3 + $0x348] sm:$0xff]
      %v3504 = vld [vmem:[%s3 + $0x350] sm:$0xff]
      %v3505 = vld [vmem:[%s3 + $0x358] sm:$0xff]
      %v3506 = vld [vmem:[%s3 + $0x360] sm:$0xff]
      %v3507 = vld [vmem:[%s3 + $0x368] sm:$0xff]
      %v3508 = vld [vmem:[%s3 + $0x370] sm:$0xff]
      %v3509 = vld [vmem:[%s3 + $0x378] sm:$0xff]
      %v3510 = vld [vmem:[%s3 + $0x380] sm:$0xff]
      %v3511 = vld [vmem:[%s3 + $0x388] sm:$0xff]
      %v3512 = vld [vmem:[%s3 + $0x390] sm:$0xff]
      %v3513 = vld [vmem:[%s3 + $0x398] sm:$0xff]
      %v3514 = vld [vmem:[%s3 + $0x3a0] sm:$0xff]
      %v3515 = vld [vmem:[%s3 + $0x3a8] sm:$0xff]
      %v3516 = vld [vmem:[%s3 + $0x3b0] sm:$0xff]
      %v3517 = vld [vmem:[%s3 + $0x3b8] sm:$0xff]
      %v3518 = vld [vmem:[%s3 + $0x3c0] sm:$0xff]
      %v3519 = vld [vmem:[%s3 + $0x3c8] sm:$0xff]
      %v3520 = vld [vmem:[%s3 + $0x3d0] sm:$0xff]
      %v3521 = vld [vmem:[%s3 + $0x3d8] sm:$0xff]
      %v3522 = vld [vmem:[%s3 + $0x3e0] sm:$0xff]
      %v3523 = vld [vmem:[%s3 + $0x3e8] sm:$0xff]
      %v3524 = vld [vmem:[%s3 + $0x3f0] sm:$0xff]
      %v3525 = vld [vmem:[%s3 + $0x3f8] sm:$0xff]
      %v3526 = vld [vmem:[%s3 + $0x400] sm:$0xff]
      %v3527 = vld [vmem:[%s3 + $0x408] sm:$0xff]
      %v3528 = vld [vmem:[%s3 + $0x410] sm:$0xff]
      %v3529 = vld [vmem:[%s3 + $0x418] sm:$0xff]
      %v3530 = vld [vmem:[%s3 + $0x420] sm:$0xff]
      %v3531 = vld [vmem:[%s3 + $0x428] sm:$0xff]
      %v3532 = vld [vmem:[%s3 + $0x430] sm:$0xff]
      %v3533 = vld [vmem:[%s3 + $0x438] sm:$0xff]
      %v3534 = vld [vmem:[%s3 + $0x440] sm:$0xff]
      %v3535 = vld [vmem:[%s3 + $0x448] sm:$0xff]
      %v3536 = vld [vmem:[%s3 + $0x450] sm:$0xff]
      %v3537 = vld [vmem:[%s3 + $0x458] sm:$0xff]
      %v3538 = vld [vmem:[%s3 + $0x460] sm:$0xff]
      %v3539 = vld [vmem:[%s3 + $0x468] sm:$0xff]
      %v3540 = vld [vmem:[%s3 + $0x470] sm:$0xff]
      %v3541 = vld [vmem:[%s3 + $0x478] sm:$0xff]
      %v3542 = vld [vmem:[%s4] sm:$0x1]
      %v3544 = vlaneseq
      %v3545 = vshrl.u32 %v3544, 7
      %v3546 = vsub.s32 0, %v3545
      %v3547 = vrot.slane %v3542, %v3546
      %3549 = vmatprep.subr.mxu0 0.0
      %3550 = vmatpush1.msra.mxu0 %v3398
      %3551 = vmatprep.subr.mxu0 0.0
      %3552 = vmatpush1.msra.mxu0 %v3399
      %3553 = vmatprep.subr.mxu0 0.0
      %3554 = vmatpush1.msra.mxu0 %v3400
      %3555 = vmatprep.subr.mxu0 0.0
      %3556 = vmatpush1.msra.mxu0 %v3401
      %3557 = vmatprep.subr.mxu0 0.0
      %3558 = vmatpush1.msra.mxu0 %v3402
      %3559 = vmatprep.subr.mxu0 0.0
      %3560 = vmatpush1.msra.mxu0 %v3403
      %3561 = vmatprep.subr.mxu0 0.0
      %3562 = vmatpush1.msra.mxu0 %v3404
      %3563 = vmatprep.subr.mxu0 0.0
      %3564 = vmatpush1.msra.mxu0 %v3405
      %3565 = vmatprep.subr.mxu0 0.0
      %3566 = vmatpush1.msra.mxu0 %v3406
      %3567 = vmatprep.subr.mxu0 0.0
      %3568 = vmatpush1.msra.mxu0 %v3407
      %3569 = vmatprep.subr.mxu0 0.0
      %3570 = vmatpush1.msra.mxu0 %v3408
      %3571 = vmatprep.subr.mxu0 0.0
      %3572 = vmatpush1.msra.mxu0 %v3409
      %3573 = vmatprep.subr.mxu0 0.0
      %3574 = vmatpush1.msra.mxu0 %v3410
      %3575 = vmatprep.subr.mxu0 0.0
      %3576 = vmatpush1.msra.mxu0 %v3411
      %3577 = vmatprep.subr.mxu0 0.0
      %3578 = vmatpush1.msra.mxu0 %v3412
      %3579 = vmatprep.subr.mxu0 0.0
      %3580 = vmatpush1.msra.mxu0 %v3413
      %3581 = vmatprep.subr.mxu0 0.0
      %3582 = vmatpush1.msra.mxu0 %v3414
      %3583 = vmatprep.subr.mxu0 0.0
      %3584 = vmatpush1.msra.mxu0 %v3415
      %3585 = vmatprep.subr.mxu0 0.0
      %3586 = vmatpush1.msra.mxu0 %v3416
      %3587 = vmatprep.subr.mxu0 0.0
      %3588 = vmatpush1.msra.mxu0 %v3417
      %3589 = vmatprep.subr.mxu0 0.0
      %3590 = vmatpush1.msra.mxu0 %v3418
      %3591 = vmatprep.subr.mxu0 0.0
      %3592 = vmatpush1.msra.mxu0 %v3419
      %3593 = vmatprep.subr.mxu0 0.0
      %3594 = vmatpush1.msra.mxu0 %v3420
      %3595 = vmatprep.subr.mxu0 0.0
      %3596 = vmatpush1.msra.mxu0 %v3421
      %3597 = vmatprep.subr.mxu0 0.0
      %3598 = vmatpush1.msra.mxu0 %v3422
      %3599 = vmatprep.subr.mxu0 0.0
      %3600 = vmatpush1.msra.mxu0 %v3423
      %3601 = vmatprep.subr.mxu0 0.0
      %3602 = vmatpush1.msra.mxu0 %v3424
      %3603 = vmatprep.subr.mxu0 0.0
      %3604 = vmatpush1.msra.mxu0 %v3425
      %3605 = vmatprep.subr.mxu0 0.0
      %3606 = vmatpush1.msra.mxu0 %v3426
      %3607 = vmatprep.subr.mxu0 0.0
      %3608 = vmatpush1.msra.mxu0 %v3427
      %3609 = vmatprep.subr.mxu0 0.0
      %3610 = vmatpush1.msra.mxu0 %v3428
      %3611 = vmatprep.subr.mxu0 0.0
      %3612 = vmatpush1.msra.mxu0 %v3429
      %3613 = vmatprep.mubr.f32.mxu0 %v3111
      %3614 = vmatmul.mubr.f32.gmra.mrb[0].mxu0 %v3110
      %v3615 = vpop.f32.mrb[0].mxu0
      %v3616 = vadd.f32 %v3547, %v3615
      %v3617 = vpop.f32.mrb[0].mxu0
      %3618 = vmatprep.mubr.f32.mxu0 %v3120
      %3619 = vmatmul.mubr.f32.gmra.mrb[0].mxu0 %v3119
      %v3620 = vpop.f32.mrb[0].mxu0
      %v3621 = vadd.f32 %v3547, %v3620
      %v3622 = vpop.f32.mrb[0].mxu0
      %3623 = vmatprep.mubr.f32.mxu0 %v3129
      %3624 = vmatmul.mubr.f32.gmra.mrb[0].mxu0 %v3128
      %v3625 = vpop.f32.mrb[0].mxu0
      %v3626 = vadd.f32 %v3547, %v3625
      %v3627 = vpop.f32.mrb[0].mxu0
      %3628 = vmatprep.mubr.f32.mxu0 %v3138
      %3629 = vmatmul.mubr.f32.gmra.mrb[0].mxu0 %v3137
      %v3630 = vpop.f32.mrb[0].mxu0
      %v3631 = vadd.f32 %v3547, %v3630
      %v3632 = vpop.f32.mrb[0].mxu0
      %3633 = vmatprep.mubr.f32.mxu0 %v3147
      %3634 = vmatmul.mubr.f32.gmra.mrb[0].mxu0 %v3146
      %v3635 = vpop.f32.mrb[0].mxu0
      %v3636 = vadd.f32 %v3547, %v3635
      %v3637 = vpop.f32.mrb[0].mxu0
      %3638 = vmatprep.mubr.f32.mxu0 %v3156
      %3639 = vmatmul.mubr.f32.gmra.mrb[0].mxu0 %v3155
      %v3640 = vpop.f32.mrb[0].mxu0
      %v3641 = vadd.f32 %v3547, %v3640
      %v3642 = vpop.f32.mrb[0].mxu0
      %3643 = vmatprep.mubr.f32.mxu0 %v3165
      %3644 = vmatmul.mubr.f32.gmra.mrb[0].mxu0 %v3164
      %v3645 = vpop.f32.mrb[0].mxu0
      %v3646 = vadd.f32 %v3547, %v3645
      %v3647 = vpop.f32.mrb[0].mxu0
      %3648 = vmatprep.mubr.f32.mxu0 %v3174
      %3649 = vmatmul.mubr.f32.gmra.mrb[0].mxu0 %v3173
      %v3650 = vpop.f32.mrb[0].mxu0
      %v3651 = vadd.f32 %v3547, %v3650
      %v3652 = vpop.f32.mrb[0].mxu0
      %3653 = vmatprep.mubr.f32.mxu0 %v3183
      %3654 = vmatmul.mubr.f32.gmra.mrb[0].mxu0 %v3182
      %v3655 = vpop.f32.mrb[0].mxu0
      %v3656 = vadd.f32 %v3547, %v3655
      %v3657 = vpop.f32.mrb[0].mxu0
      %3658 = vmatprep.mubr.f32.mxu0 %v3192
      %3659 = vmatmul.mubr.f32.gmra.mrb[0].mxu0 %v3191
      %v3660 = vpop.f32.mrb[0].mxu0
      %v3661 = vadd.f32 %v3547, %v3660
      %v3662 = vpop.f32.mrb[0].mxu0
      %3663 = vmatprep.mubr.f32.mxu0 %v3201
      %3664 = vmatmul.mubr.f32.gmra.mrb[0].mxu0 %v3200
      %v3665 = vpop.f32.mrb[0].mxu0
      %v3666 = vadd.f32 %v3547, %v3665
      %v3667 = vpop.f32.mrb[0].mxu0
      %3668 = vmatprep.mubr.f32.mxu0 %v3210
      %3669 = vmatmul.mubr.f32.gmra.mrb[0].mxu0 %v3209
      %v3670 = vpop.f32.mrb[0].mxu0
      %v3671 = vadd.f32 %v3547, %v3670
      %v3672 = vpop.f32.mrb[0].mxu0
      %3673 = vmatprep.mubr.f32.mxu0 %v3219
      %3674 = vmatmul.mubr.f32.gmra.mrb[0].mxu0 %v3218
      %v3675 = vpop.f32.mrb[0].mxu0
      %v3676 = vadd.f32 %v3547, %v3675
      %v3677 = vpop.f32.mrb[0].mxu0
      %3678 = vmatprep.mubr.f32.mxu0 %v3228
      %3679 = vmatmul.mubr.f32.gmra.mrb[0].mxu0 %v3227
      %v3680 = vpop.f32.mrb[0].mxu0
      %v3681 = vadd.f32 %v3547, %v3680
      %v3682 = vpop.f32.mrb[0].mxu0
      %3683 = vmatprep.mubr.f32.mxu0 %v3237
      %3684 = vmatmul.mubr.f32.gmra.mrb[0].mxu0 %v3236
      %v3685 = vpop.f32.mrb[0].mxu0
      %v3686 = vadd.f32 %v3547, %v3685
      %v3687 = vpop.f32.mrb[0].mxu0
      %3688 = vmatprep.mubr.f32.mxu0 %v3246
      %3689 = vmatmul.mubr.f32.gmra.mrb[0].mxu0 %v3245
      %v3690 = vpop.f32.mrb[0].mxu0
      %v3691 = vadd.f32 %v3547, %v3690
      %v3692 = vpop.f32.mrb[0].mxu0
      %3693 = vmatprep.mubr.f32.mxu0 %v3255
      %3694 = vmatmul.mubr.f32.gmra.mrb[0].mxu0 %v3254
      %v3695 = vpop.f32.mrb[0].mxu0
      %v3696 = vadd.f32 %v3547, %v3695
      %v3697 = vpop.f32.mrb[0].mxu0
      %3698 = vmatprep.mubr.f32.mxu0 %v3264
      %3699 = vmatmul.mubr.f32.gmra.mrb[0].mxu0 %v3263
      %v3700 = vpop.f32.mrb[0].mxu0
      %v3701 = vadd.f32 %v3547, %v3700
      %v3702 = vpop.f32.mrb[0].mxu0
      %3703 = vmatprep.mubr.f32.mxu0 %v3273
      %3704 = vmatmul.mubr.f32.gmra.mrb[0].mxu0 %v3272
      %v3705 = vpop.f32.mrb[0].mxu0
      %v3706 = vadd.f32 %v3547, %v3705
      %v3707 = vpop.f32.mrb[0].mxu0
      %3708 = vmatprep.mubr.f32.mxu0 %v3282
      %3709 = vmatmul.mubr.f32.gmra.mrb[0].mxu0 %v3281
      %v3710 = vpop.f32.mrb[0].mxu0
      %v3711 = vadd.f32 %v3547, %v3710
      %v3712 = vpop.f32.mrb[0].mxu0
      %3713 = vmatprep.mubr.f32.mxu0 %v3291
      %3714 = vmatmul.mubr.f32.gmra.mrb[0].mxu0 %v3290
      %v3715 = vpop.f32.mrb[0].mxu0
      %v3716 = vadd.f32 %v3547, %v3715
      %v3717 = vpop.f32.mrb[0].mxu0
      %3718 = vmatprep.mubr.f32.mxu0 %v3300
      %3719 = vmatmul.mubr.f32.gmra.mrb[0].mxu0 %v3299
      %v3720 = vpop.f32.mrb[0].mxu0
      %v3721 = vadd.f32 %v3547, %v3720
      %v3722 = vpop.f32.mrb[0].mxu0
      %3723 = vmatprep.mubr.f32.mxu0 %v3309
      %3724 = vmatmul.mubr.f32.gmra.mrb[0].mxu0 %v3308
      %v3725 = vpop.f32.mrb[0].mxu0
      %v3726 = vadd.f32 %v3547, %v3725
      %v3727 = vpop.f32.mrb[0].mxu0
      %3728 = vmatprep.mubr.f32.mxu0 %v3318
      %3729 = vmatmul.mubr.f32.gmra.mrb[0].mxu0 %v3317
      %v3730 = vpop.f32.mrb[0].mxu0
      %v3731 = vadd.f32 %v3547, %v3730
      %v3732 = vpop.f32.mrb[0].mxu0
      %3733 = vmatprep.mubr.f32.mxu0 %v3327
      %3734 = vmatmul.mubr.f32.gmra.mrb[0].mxu0 %v3326
      %v3735 = vpop.f32.mrb[0].mxu0
      %v3736 = vadd.f32 %v3547, %v3735
      %v3737 = vpop.f32.mrb[0].mxu0
      %3738 = vmatprep.mubr.f32.mxu0 %v3336
      %3739 = vmatmul.mubr.f32.gmra.mrb[0].mxu0 %v3335
      %v3740 = vpop.f32.mrb[0].mxu0
      %v3741 = vadd.f32 %v3547, %v3740
      %v3742 = vpop.f32.mrb[0].mxu0
      %3743 = vmatprep.mubr.f32.mxu0 %v3345
      %3744 = vmatmul.mubr.f32.gmra.mrb[0].mxu0 %v3344
      %v3745 = vpop.f32.mrb[0].mxu0
      %v3746 = vadd.f32 %v3547, %v3745
      %v3747 = vpop.f32.mrb[0].mxu0
      %3748 = vmatprep.mubr.f32.mxu0 %v3354
      %3749 = vmatmul.mubr.f32.gmra.mrb[0].mxu0 %v3353
      %v3750 = vpop.f32.mrb[0].mxu0
      %v3751 = vadd.f32 %v3547, %v3750
      %v3752 = vpop.f32.mrb[0].mxu0
      %3753 = vmatprep.mubr.f32.mxu0 %v3363
      %3754 = vmatmul.mubr.f32.gmra.mrb[0].mxu0 %v3362
      %v3755 = vpop.f32.mrb[0].mxu0
      %v3756 = vadd.f32 %v3547, %v3755
      %v3757 = vpop.f32.mrb[0].mxu0
      %3758 = vmatprep.mubr.f32.mxu0 %v3372
      %3759 = vmatmul.mubr.f32.gmra.mrb[0].mxu0 %v3371
      %v3760 = vpop.f32.mrb[0].mxu0
      %v3761 = vadd.f32 %v3547, %v3760
      %v3762 = vpop.f32.mrb[0].mxu0
      %3763 = vmatprep.mubr.f32.mxu0 %v3381
      %3764 = vmatmul.mubr.f32.gmra.mrb[0].mxu0 %v3380
      %v3765 = vpop.f32.mrb[0].mxu0
      %v3766 = vadd.f32 %v3547, %v3765
      %v3767 = vpop.f32.mrb[0].mxu0
      %3768 = vmatprep.mubr.f32.mxu0 %v3390
      %3769 = vmatmul.mubr.f32.gmra.mrb[0].mxu0 %v3389
      %v3770 = vpop.f32.mrb[0].mxu0
      %v3771 = vadd.f32 %v3547, %v3770
      %v3772 = vpop.f32.mrb[0].mxu0
      %3773 = vdwg.mxu0
      %3774 = vmatprep.subr.mxu0 0.0
      %3775 = vmatpush1.msra.mxu0 %v3430
      %3776 = vmatprep.subr.mxu0 0.0
      %3777 = vmatpush1.msra.mxu0 %v3431
      %3778 = vmatprep.subr.mxu0 0.0
      %3779 = vmatpush1.msra.mxu0 %v3432
      %3780 = vmatprep.subr.mxu0 0.0
      %3781 = vmatpush1.msra.mxu0 %v3433
      %3782 = vmatprep.subr.mxu0 0.0
      %3783 = vmatpush1.msra.mxu0 %v3434
      %3784 = vmatprep.subr.mxu0 0.0
      %3785 = vmatpush1.msra.mxu0 %v3435
      %3786 = vmatprep.subr.mxu0 0.0
      %3787 = vmatpush1.msra.mxu0 %v3436
      %3788 = vmatprep.subr.mxu0 0.0
      %3789 = vmatpush1.msra.mxu0 %v3437
      %3790 = vmatprep.subr.mxu0 0.0
      %3791 = vmatpush1.msra.mxu0 %v3438
      %3792 = vmatprep.subr.mxu0 0.0
      %3793 = vmatpush1.msra.mxu0 %v3439
      %3794 = vmatprep.subr.mxu0 0.0
      %3795 = vmatpush1.msra.mxu0 %v3440
      %3796 = vmatprep.subr.mxu0 0.0
      %3797 = vmatpush1.msra.mxu0 %v3441
      %3798 = vmatprep.subr.mxu0 0.0
      %3799 = vmatpush1.msra.mxu0 %v3442
      %3800 = vmatprep.subr.mxu0 0.0
      %3801 = vmatpush1.msra.mxu0 %v3443
      %3802 = vmatprep.subr.mxu0 0.0
      %3803 = vmatpush1.msra.mxu0 %v3444
      %3804 = vmatprep.subr.mxu0 0.0
      %3805 = vmatpush1.msra.mxu0 %v3445
      %3806 = vmatprep.subr.mxu0 0.0
      %3807 = vmatpush1.msra.mxu0 %v3446
      %3808 = vmatprep.subr.mxu0 0.0
      %3809 = vmatpush1.msra.mxu0 %v3447
      %3810 = vmatprep.subr.mxu0 0.0
      %3811 = vmatpush1.msra.mxu0 %v3448
      %3812 = vmatprep.subr.mxu0 0.0
      %3813 = vmatpush1.msra.mxu0 %v3449
      %3814 = vmatprep.subr.mxu0 0.0
      %3815 = vmatpush1.msra.mxu0 %v3450
      %3816 = vmatprep.subr.mxu0 0.0
      %3817 = vmatpush1.msra.mxu0 %v3451
      %3818 = vmatprep.subr.mxu0 0.0
      %3819 = vmatpush1.msra.mxu0 %v3452
      %3820 = vmatprep.subr.mxu0 0.0
      %3821 = vmatpush1.msra.mxu0 %v3453
      %3822 = vmatprep.subr.mxu0 0.0
      %3823 = vmatpush1.msra.mxu0 %v3454
      %3824 = vmatprep.subr.mxu0 0.0
      %3825 = vmatpush1.msra.mxu0 %v3455
      %3826 = vmatprep.subr.mxu0 0.0
      %3827 = vmatpush1.msra.mxu0 %v3456
      %3828 = vmatprep.subr.mxu0 0.0
      %3829 = vmatpush1.msra.mxu0 %v3457
      %3830 = vmatprep.subr.mxu0 0.0
      %3831 = vmatpush1.msra.mxu0 %v3458
      %3832 = vmatprep.subr.mxu0 0.0
      %3833 = vmatpush1.msra.mxu0 %v3459
      %3834 = vmatprep.subr.mxu0 0.0
      %3835 = vmatpush1.msra.mxu0 %v3460
      %3836 = vmatprep.subr.mxu0 0.0
      %3837 = vmatpush1.msra.mxu0 %v3461
      %3838 = vmatprep.mubr.f32.mxu0 %v3113
      %3839 = vmatmul.mubr.f32.gmra.mrb[0].mxu0 %v3112
      %v3840 = vpop.f32.mrb[0].mxu0
      %v3841 = vadd.f32 %v3616, %v3840
      %v3842 = vpop.f32.mrb[0].mxu0
      %3843 = vmatprep.mubr.f32.mxu0 %v3122
      %3844 = vmatmul.mubr.f32.gmra.mrb[0].mxu0 %v3121
      %v3845 = vpop.f32.mrb[0].mxu0
      %v3846 = vadd.f32 %v3621, %v3845
      %v3847 = vpop.f32.mrb[0].mxu0
      %3848 = vmatprep.mubr.f32.mxu0 %v3131
      %3849 = vmatmul.mubr.f32.gmra.mrb[0].mxu0 %v3130
      %v3850 = vpop.f32.mrb[0].mxu0
      %v3851 = vadd.f32 %v3626, %v3850
      %v3852 = vpop.f32.mrb[0].mxu0
      %3853 = vmatprep.mubr.f32.mxu0 %v3140
      %3854 = vmatmul.mubr.f32.gmra.mrb[0].mxu0 %v3139
      %v3855 = vpop.f32.mrb[0].mxu0
      %v3856 = vadd.f32 %v3631, %v3855
      %v3857 = vpop.f32.mrb[0].mxu0
      %3858 = vmatprep.mubr.f32.mxu0 %v3149
      %3859 = vmatmul.mubr.f32.gmra.mrb[0].mxu0 %v3148
      %v3860 = vpop.f32.mrb[0].mxu0
      %v3861 = vadd.f32 %v3636, %v3860
      %v3862 = vpop.f32.mrb[0].mxu0
      %3863 = vmatprep.mubr.f32.mxu0 %v3158
      %3864 = vmatmul.mubr.f32.gmra.mrb[0].mxu0 %v3157
      %v3865 = vpop.f32.mrb[0].mxu0
      %v3866 = vadd.f32 %v3641, %v3865
      %v3867 = vpop.f32.mrb[0].mxu0
      %3868 = vmatprep.mubr.f32.mxu0 %v3167
      %3869 = vmatmul.mubr.f32.gmra.mrb[0].mxu0 %v3166
      %v3870 = vpop.f32.mrb[0].mxu0
      %v3871 = vadd.f32 %v3646, %v3870
      %v3872 = vpop.f32.mrb[0].mxu0
      %3873 = vmatprep.mubr.f32.mxu0 %v3176
      %3874 = vmatmul.mubr.f32.gmra.mrb[0].mxu0 %v3175
      %v3875 = vpop.f32.mrb[0].mxu0
      %v3876 = vadd.f32 %v3651, %v3875
      %v3877 = vpop.f32.mrb[0].mxu0
      %3878 = vmatprep.mubr.f32.mxu0 %v3185
      %3879 = vmatmul.mubr.f32.gmra.mrb[0].mxu0 %v3184
      %v3880 = vpop.f32.mrb[0].mxu0
      %v3881 = vadd.f32 %v3656, %v3880
      %v3882 = vpop.f32.mrb[0].mxu0
      %3883 = vmatprep.mubr.f32.mxu0 %v3194
      %3884 = vmatmul.mubr.f32.gmra.mrb[0].mxu0 %v3193
      %v3885 = vpop.f32.mrb[0].mxu0
      %v3886 = vadd.f32 %v3661, %v3885
      %v3887 = vpop.f32.mrb[0].mxu0
      %3888 = vmatprep.mubr.f32.mxu0 %v3203
      %3889 = vmatmul.mubr.f32.gmra.mrb[0].mxu0 %v3202
      %v3890 = vpop.f32.mrb[0].mxu0
      %v3891 = vadd.f32 %v3666, %v3890
      %v3892 = vpop.f32.mrb[0].mxu0
      %3893 = vmatprep.mubr.f32.mxu0 %v3212
      %3894 = vmatmul.mubr.f32.gmra.mrb[0].mxu0 %v3211
      %v3895 = vpop.f32.mrb[0].mxu0
      %v3896 = vadd.f32 %v3671, %v3895
      %v3897 = vpop.f32.mrb[0].mxu0
      %3898 = vmatprep.mubr.f32.mxu0 %v3221
      %3899 = vmatmul.mubr.f32.gmra.mrb[0].mxu0 %v3220
      %v3900 = vpop.f32.mrb[0].mxu0
      %v3901 = vadd.f32 %v3676, %v3900
      %v3902 = vpop.f32.mrb[0].mxu0
      %3903 = vmatprep.mubr.f32.mxu0 %v3230
      %3904 = vmatmul.mubr.f32.gmra.mrb[0].mxu0 %v3229
      %v3905 = vpop.f32.mrb[0].mxu0
      %v3906 = vadd.f32 %v3681, %v3905
      %v3907 = vpop.f32.mrb[0].mxu0
      %3908 = vmatprep.mubr.f32.mxu0 %v3239
      %3909 = vmatmul.mubr.f32.gmra.mrb[0].mxu0 %v3238
      %v3910 = vpop.f32.mrb[0].mxu0
      %v3911 = vadd.f32 %v3686, %v3910
      %v3912 = vpop.f32.mrb[0].mxu0
      %3913 = vmatprep.mubr.f32.mxu0 %v3248
      %3914 = vmatmul.mubr.f32.gmra.mrb[0].mxu0 %v3247
      %v3915 = vpop.f32.mrb[0].mxu0
      %v3916 = vadd.f32 %v3691, %v3915
      %v3917 = vpop.f32.mrb[0].mxu0
      %3918 = vmatprep.mubr.f32.mxu0 %v3257
      %3919 = vmatmul.mubr.f32.gmra.mrb[0].mxu0 %v3256
      %v3920 = vpop.f32.mrb[0].mxu0
      %v3921 = vadd.f32 %v3696, %v3920
      %v3922 = vpop.f32.mrb[0].mxu0
      %3923 = vmatprep.mubr.f32.mxu0 %v3266
      %3924 = vmatmul.mubr.f32.gmra.mrb[0].mxu0 %v3265
      %v3925 = vpop.f32.mrb[0].mxu0
      %v3926 = vadd.f32 %v3701, %v3925
      %v3927 = vpop.f32.mrb[0].mxu0
      %3928 = vmatprep.mubr.f32.mxu0 %v3275
      %3929 = vmatmul.mubr.f32.gmra.mrb[0].mxu0 %v3274
      %v3930 = vpop.f32.mrb[0].mxu0
      %v3931 = vadd.f32 %v3706, %v3930
      %v3932 = vpop.f32.mrb[0].mxu0
      %3933 = vmatprep.mubr.f32.mxu0 %v3284
      %3934 = vmatmul.mubr.f32.gmra.mrb[0].mxu0 %v3283
      %v3935 = vpop.f32.mrb[0].mxu0
      %v3936 = vadd.f32 %v3711, %v3935
      %v3937 = vpop.f32.mrb[0].mxu0
      %3938 = vmatprep.mubr.f32.mxu0 %v3293
      %3939 = vmatmul.mubr.f32.gmra.mrb[0].mxu0 %v3292
      %v3940 = vpop.f32.mrb[0].mxu0
      %v3941 = vadd.f32 %v3716, %v3940
      %v3942 = vpop.f32.mrb[0].mxu0
      %3943 = vmatprep.mubr.f32.mxu0 %v3302
      %3944 = vmatmul.mubr.f32.gmra.mrb[0].mxu0 %v3301
      %v3945 = vpop.f32.mrb[0].mxu0
      %v3946 = vadd.f32 %v3721, %v3945
      %v3947 = vpop.f32.mrb[0].mxu0
      %3948 = vmatprep.mubr.f32.mxu0 %v3311
      %3949 = vmatmul.mubr.f32.gmra.mrb[0].mxu0 %v3310
      %v3950 = vpop.f32.mrb[0].mxu0
      %v3951 = vadd.f32 %v3726, %v3950
      %v3952 = vpop.f32.mrb[0].mxu0
      %3953 = vmatprep.mubr.f32.mxu0 %v3320
      %3954 = vmatmul.mubr.f32.gmra.mrb[0].mxu0 %v3319
      %v3955 = vpop.f32.mrb[0].mxu0
      %v3956 = vadd.f32 %v3731, %v3955
      %v3957 = vpop.f32.mrb[0].mxu0
      %3958 = vmatprep.mubr.f32.mxu0 %v3329
      %3959 = vmatmul.mubr.f32.gmra.mrb[0].mxu0 %v3328
      %v3960 = vpop.f32.mrb[0].mxu0
      %v3961 = vadd.f32 %v3736, %v3960
      %v3962 = vpop.f32.mrb[0].mxu0
      %3963 = vmatprep.mubr.f32.mxu0 %v3338
      %3964 = vmatmul.mubr.f32.gmra.mrb[0].mxu0 %v3337
      %v3965 = vpop.f32.mrb[0].mxu0
      %v3966 = vadd.f32 %v3741, %v3965
      %v3967 = vpop.f32.mrb[0].mxu0
      %3968 = vmatprep.mubr.f32.mxu0 %v3347
      %3969 = vmatmul.mubr.f32.gmra.mrb[0].mxu0 %v3346
      %v3970 = vpop.f32.mrb[0].mxu0
      %v3971 = vadd.f32 %v3746, %v3970
      %v3972 = vpop.f32.mrb[0].mxu0
      %3973 = vmatprep.mubr.f32.mxu0 %v3356
      %3974 = vmatmul.mubr.f32.gmra.mrb[0].mxu0 %v3355
      %v3975 = vpop.f32.mrb[0].mxu0
      %v3976 = vadd.f32 %v3751, %v3975
      %v3977 = vpop.f32.mrb[0].mxu0
      %3978 = vmatprep.mubr.f32.mxu0 %v3365
      %3979 = vmatmul.mubr.f32.gmra.mrb[0].mxu0 %v3364
      %v3980 = vpop.f32.mrb[0].mxu0
      %v3981 = vadd.f32 %v3756, %v3980
      %v3982 = vpop.f32.mrb[0].mxu0
      %3983 = vmatprep.mubr.f32.mxu0 %v3374
      %3984 = vmatmul.mubr.f32.gmra.mrb[0].mxu0 %v3373
      %v3985 = vpop.f32.mrb[0].mxu0
      %v3986 = vadd.f32 %v3761, %v3985
      %v3987 = vpop.f32.mrb[0].mxu0
      %3988 = vmatprep.mubr.f32.mxu0 %v3383
      %3989 = vmatmul.mubr.f32.gmra.mrb[0].mxu0 %v3382
      %v3990 = vpop.f32.mrb[0].mxu0
      %v3991 = vadd.f32 %v3766, %v3990
      %v3992 = vpop.f32.mrb[0].mxu0
      %3993 = vmatprep.mubr.f32.mxu0 %v3392
      %3994 = vmatmul.mubr.f32.gmra.mrb[0].mxu0 %v3391
      %v3995 = vpop.f32.mrb[0].mxu0
      %v3996 = vadd.f32 %v3771, %v3995
      %v3997 = vpop.f32.mrb[0].mxu0
      %3998 = vdwg.mxu0
      %3999 = vmatprep.subr.mxu0 0.0
      %4000 = vmatpush1.msra.mxu0 %v3462
      %4001 = vmatprep.subr.mxu0 0.0
      %4002 = vmatpush1.msra.mxu0 %v3463
      %4003 = vmatprep.subr.mxu0 0.0
      %4004 = vmatpush1.msra.mxu0 %v3464
      %4005 = vmatprep.subr.mxu0 0.0
      %4006 = vmatpush1.msra.mxu0 %v3465
      %4007 = vmatprep.subr.mxu0 0.0
      %4008 = vmatpush1.msra.mxu0 %v3466
      %4009 = vmatprep.subr.mxu0 0.0
      %4010 = vmatpush1.msra.mxu0 %v3467
      %4011 = vmatprep.subr.mxu0 0.0
      %4012 = vmatpush1.msra.mxu0 %v3468
      %4013 = vmatprep.subr.mxu0 0.0
      %4014 = vmatpush1.msra.mxu0 %v3469
      %4015 = vmatprep.subr.mxu0 0.0
      %4016 = vmatpush1.msra.mxu0 %v3470
      %4017 = vmatprep.subr.mxu0 0.0
      %4018 = vmatpush1.msra.mxu0 %v3471
      %4019 = vmatprep.subr.mxu0 0.0
      %4020 = vmatpush1.msra.mxu0 %v3472
      %4021 = vmatprep.subr.mxu0 0.0
      %4022 = vmatpush1.msra.mxu0 %v3473
      %4023 = vmatprep.subr.mxu0 0.0
      %4024 = vmatpush1.msra.mxu0 %v3474
      %4025 = vmatprep.subr.mxu0 0.0
      %4026 = vmatpush1.msra.mxu0 %v3475
      %4027 = vmatprep.subr.mxu0 0.0
      %4028 = vmatpush1.msra.mxu0 %v3476
      %4029 = vmatprep.subr.mxu0 0.0
      %4030 = vmatpush1.msra.mxu0 %v3477
      %4031 = vmatprep.subr.mxu0 0.0
      %4032 = vmatpush1.msra.mxu0 %v3478
      %4033 = vmatprep.subr.mxu0 0.0
      %4034 = vmatpush1.msra.mxu0 %v3479
      %4035 = vmatprep.subr.mxu0 0.0
      %4036 = vmatpush1.msra.mxu0 %v3480
      %4037 = vmatprep.subr.mxu0 0.0
      %4038 = vmatpush1.msra.mxu0 %v3481
      %4039 = vmatprep.subr.mxu0 0.0
      %4040 = vmatpush1.msra.mxu0 %v3482
      %4041 = vmatprep.subr.mxu0 0.0
      %4042 = vmatpush1.msra.mxu0 %v3483
      %4043 = vmatprep.subr.mxu0 0.0
      %4044 = vmatpush1.msra.mxu0 %v3484
      %4045 = vmatprep.subr.mxu0 0.0
      %4046 = vmatpush1.msra.mxu0 %v3485
      %4047 = vmatprep.subr.mxu0 0.0
      %4048 = vmatpush1.msra.mxu0 %v3486
      %4049 = vmatprep.subr.mxu0 0.0
      %4050 = vmatpush1.msra.mxu0 %v3487
      %4051 = vmatprep.subr.mxu0 0.0
      %4052 = vmatpush1.msra.mxu0 %v3488
      %4053 = vmatprep.subr.mxu0 0.0
      %4054 = vmatpush1.msra.mxu0 %v3489
      %4055 = vmatprep.subr.mxu0 0.0
      %4056 = vmatpush1.msra.mxu0 %v3490
      %4057 = vmatprep.subr.mxu0 0.0
      %4058 = vmatpush1.msra.mxu0 %v3491
      %4059 = vmatprep.subr.mxu0 0.0
      %4060 = vmatpush1.msra.mxu0 %v3492
      %4061 = vmatprep.subr.mxu0 0.0
      %4062 = vmatpush1.msra.mxu0 %v3493
      %4063 = vmatprep.mubr.f32.mxu0 %v3115
      %4064 = vmatmul.mubr.f32.gmra.mrb[0].mxu0 %v3114
      %v4065 = vpop.f32.mrb[0].mxu0
      %v4066 = vadd.f32 %v3841, %v4065
      %v4067 = vpop.f32.mrb[0].mxu0
      %4068 = vmatprep.mubr.f32.mxu0 %v3124
      %4069 = vmatmul.mubr.f32.gmra.mrb[0].mxu0 %v3123
      %v4070 = vpop.f32.mrb[0].mxu0
      %v4071 = vadd.f32 %v3846, %v4070
      %v4072 = vpop.f32.mrb[0].mxu0
      %4073 = vmatprep.mubr.f32.mxu0 %v3133
      %4074 = vmatmul.mubr.f32.gmra.mrb[0].mxu0 %v3132
      %v4075 = vpop.f32.mrb[0].mxu0
      %v4076 = vadd.f32 %v3851, %v4075
      %v4077 = vpop.f32.mrb[0].mxu0
      %4078 = vmatprep.mubr.f32.mxu0 %v3142
      %4079 = vmatmul.mubr.f32.gmra.mrb[0].mxu0 %v3141
      %v4080 = vpop.f32.mrb[0].mxu0
      %v4081 = vadd.f32 %v3856, %v4080
      %v4082 = vpop.f32.mrb[0].mxu0
      %4083 = vmatprep.mubr.f32.mxu0 %v3151
      %4084 = vmatmul.mubr.f32.gmra.mrb[0].mxu0 %v3150
      %v4085 = vpop.f32.mrb[0].mxu0
      %v4086 = vadd.f32 %v3861, %v4085
      %v4087 = vpop.f32.mrb[0].mxu0
      %4088 = vmatprep.mubr.f32.mxu0 %v3160
      %4089 = vmatmul.mubr.f32.gmra.mrb[0].mxu0 %v3159
      %v4090 = vpop.f32.mrb[0].mxu0
      %v4091 = vadd.f32 %v3866, %v4090
      %v4092 = vpop.f32.mrb[0].mxu0
      %4093 = vmatprep.mubr.f32.mxu0 %v3169
      %4094 = vmatmul.mubr.f32.gmra.mrb[0].mxu0 %v3168
      %v4095 = vpop.f32.mrb[0].mxu0
      %v4096 = vadd.f32 %v3871, %v4095
      %v4097 = vpop.f32.mrb[0].mxu0
      %4098 = vmatprep.mubr.f32.mxu0 %v3178
      %4099 = vmatmul.mubr.f32.gmra.mrb[0].mxu0 %v3177
      %v4100 = vpop.f32.mrb[0].mxu0
      %v4101 = vadd.f32 %v3876, %v4100
      %v4102 = vpop.f32.mrb[0].mxu0
      %4103 = vmatprep.mubr.f32.mxu0 %v3187
      %4104 = vmatmul.mubr.f32.gmra.mrb[0].mxu0 %v3186
      %v4105 = vpop.f32.mrb[0].mxu0
      %v4106 = vadd.f32 %v3881, %v4105
      %v4107 = vpop.f32.mrb[0].mxu0
      %4108 = vmatprep.mubr.f32.mxu0 %v3196
      %4109 = vmatmul.mubr.f32.gmra.mrb[0].mxu0 %v3195
      %v4110 = vpop.f32.mrb[0].mxu0
      %v4111 = vadd.f32 %v3886, %v4110
      %v4112 = vpop.f32.mrb[0].mxu0
      %4113 = vmatprep.mubr.f32.mxu0 %v3205
      %4114 = vmatmul.mubr.f32.gmra.mrb[0].mxu0 %v3204
      %v4115 = vpop.f32.mrb[0].mxu0
      %v4116 = vadd.f32 %v3891, %v4115
      %v4117 = vpop.f32.mrb[0].mxu0
      %4118 = vmatprep.mubr.f32.mxu0 %v3214
      %4119 = vmatmul.mubr.f32.gmra.mrb[0].mxu0 %v3213
      %v4120 = vpop.f32.mrb[0].mxu0
      %v4121 = vadd.f32 %v3896, %v4120
      %v4122 = vpop.f32.mrb[0].mxu0
      %4123 = vmatprep.mubr.f32.mxu0 %v3223
      %4124 = vmatmul.mubr.f32.gmra.mrb[0].mxu0 %v3222
      %v4125 = vpop.f32.mrb[0].mxu0
      %v4126 = vadd.f32 %v3901, %v4125
      %v4127 = vpop.f32.mrb[0].mxu0
      %4128 = vmatprep.mubr.f32.mxu0 %v3232
      %4129 = vmatmul.mubr.f32.gmra.mrb[0].mxu0 %v3231
      %v4130 = vpop.f32.mrb[0].mxu0
      %v4131 = vadd.f32 %v3906, %v4130
      %v4132 = vpop.f32.mrb[0].mxu0
      %4133 = vmatprep.mubr.f32.mxu0 %v3241
      %4134 = vmatmul.mubr.f32.gmra.mrb[0].mxu0 %v3240
      %v4135 = vpop.f32.mrb[0].mxu0
      %v4136 = vadd.f32 %v3911, %v4135
      %v4137 = vpop.f32.mrb[0].mxu0
      %4138 = vmatprep.mubr.f32.mxu0 %v3250
      %4139 = vmatmul.mubr.f32.gmra.mrb[0].mxu0 %v3249
      %v4140 = vpop.f32.mrb[0].mxu0
      %v4141 = vadd.f32 %v3916, %v4140
      %v4142 = vpop.f32.mrb[0].mxu0
      %4143 = vmatprep.mubr.f32.mxu0 %v3259
      %4144 = vmatmul.mubr.f32.gmra.mrb[0].mxu0 %v3258
      %v4145 = vpop.f32.mrb[0].mxu0
      %v4146 = vadd.f32 %v3921, %v4145
      %v4147 = vpop.f32.mrb[0].mxu0
      %4148 = vmatprep.mubr.f32.mxu0 %v3268
      %4149 = vmatmul.mubr.f32.gmra.mrb[0].mxu0 %v3267
      %v4150 = vpop.f32.mrb[0].mxu0
      %v4151 = vadd.f32 %v3926, %v4150
      %v4152 = vpop.f32.mrb[0].mxu0
      %4153 = vmatprep.mubr.f32.mxu0 %v3277
      %4154 = vmatmul.mubr.f32.gmra.mrb[0].mxu0 %v3276
      %v4155 = vpop.f32.mrb[0].mxu0
      %v4156 = vadd.f32 %v3931, %v4155
      %v4157 = vpop.f32.mrb[0].mxu0
      %4158 = vmatprep.mubr.f32.mxu0 %v3286
      %4159 = vmatmul.mubr.f32.gmra.mrb[0].mxu0 %v3285
      %v4160 = vpop.f32.mrb[0].mxu0
      %v4161 = vadd.f32 %v3936, %v4160
      %v4162 = vpop.f32.mrb[0].mxu0
      %4163 = vmatprep.mubr.f32.mxu0 %v3295
      %4164 = vmatmul.mubr.f32.gmra.mrb[0].mxu0 %v3294
      %v4165 = vpop.f32.mrb[0].mxu0
      %v4166 = vadd.f32 %v3941, %v4165
      %v4167 = vpop.f32.mrb[0].mxu0
      %4168 = vmatprep.mubr.f32.mxu0 %v3304
      %4169 = vmatmul.mubr.f32.gmra.mrb[0].mxu0 %v3303
      %v4170 = vpop.f32.mrb[0].mxu0
      %v4171 = vadd.f32 %v3946, %v4170
      %v4172 = vpop.f32.mrb[0].mxu0
      %4173 = vmatprep.mubr.f32.mxu0 %v3313
      %4174 = vmatmul.mubr.f32.gmra.mrb[0].mxu0 %v3312
      %v4175 = vpop.f32.mrb[0].mxu0
      %v4176 = vadd.f32 %v3951, %v4175
      %v4177 = vpop.f32.mrb[0].mxu0
      %4178 = vmatprep.mubr.f32.mxu0 %v3322
      %4179 = vmatmul.mubr.f32.gmra.mrb[0].mxu0 %v3321
      %v4180 = vpop.f32.mrb[0].mxu0
      %v4181 = vadd.f32 %v3956, %v4180
      %v4182 = vpop.f32.mrb[0].mxu0
      %4183 = vmatprep.mubr.f32.mxu0 %v3331
      %4184 = vmatmul.mubr.f32.gmra.mrb[0].mxu0 %v3330
      %v4185 = vpop.f32.mrb[0].mxu0
      %v4186 = vadd.f32 %v3961, %v4185
      %v4187 = vpop.f32.mrb[0].mxu0
      %4188 = vmatprep.mubr.f32.mxu0 %v3340
      %4189 = vmatmul.mubr.f32.gmra.mrb[0].mxu0 %v3339
      %v4190 = vpop.f32.mrb[0].mxu0
      %v4191 = vadd.f32 %v3966, %v4190
      %v4192 = vpop.f32.mrb[0].mxu0
      %4193 = vmatprep.mubr.f32.mxu0 %v3349
      %4194 = vmatmul.mubr.f32.gmra.mrb[0].mxu0 %v3348
      %v4195 = vpop.f32.mrb[0].mxu0
      %v4196 = vadd.f32 %v3971, %v4195
      %v4197 = vpop.f32.mrb[0].mxu0
      %4198 = vmatprep.mubr.f32.mxu0 %v3358
      %4199 = vmatmul.mubr.f32.gmra.mrb[0].mxu0 %v3357
      %v4200 = vpop.f32.mrb[0].mxu0
      %v4201 = vadd.f32 %v3976, %v4200
      %v4202 = vpop.f32.mrb[0].mxu0
      %4203 = vmatprep.mubr.f32.mxu0 %v3367
      %4204 = vmatmul.mubr.f32.gmra.mrb[0].mxu0 %v3366
      %v4205 = vpop.f32.mrb[0].mxu0
      %v4206 = vadd.f32 %v3981, %v4205
      %v4207 = vpop.f32.mrb[0].mxu0
      %4208 = vmatprep.mubr.f32.mxu0 %v3376
      %4209 = vmatmul.mubr.f32.gmra.mrb[0].mxu0 %v3375
      %v4210 = vpop.f32.mrb[0].mxu0
      %v4211 = vadd.f32 %v3986, %v4210
      %v4212 = vpop.f32.mrb[0].mxu0
      %4213 = vmatprep.mubr.f32.mxu0 %v3385
      %4214 = vmatmul.mubr.f32.gmra.mrb[0].mxu0 %v3384
      %v4215 = vpop.f32.mrb[0].mxu0
      %v4216 = vadd.f32 %v3991, %v4215
      %v4217 = vpop.f32.mrb[0].mxu0
      %4218 = vmatprep.mubr.f32.mxu0 %v3394
      %4219 = vmatmul.mubr.f32.gmra.mrb[0].mxu0 %v3393
      %v4220 = vpop.f32.mrb[0].mxu0
      %v4221 = vadd.f32 %v3996, %v4220
      %v4222 = vpop.f32.mrb[0].mxu0
      %4223 = vdwg.mxu0
      %4224 = vmatprep.subr.mxu0 0.0
      %4225 = vmatpush1.msra.mxu0 %v3494
      %4226 = vmatprep.subr.mxu0 0.0
      %4227 = vmatpush1.msra.mxu0 %v3495
      %4228 = vmatprep.subr.mxu0 0.0
      %4229 = vmatpush1.msra.mxu0 %v3496
      %4230 = vmatprep.subr.mxu0 0.0
      %4231 = vmatpush1.msra.mxu0 %v3497
      %4232 = vmatprep.subr.mxu0 0.0
      %4233 = vmatpush1.msra.mxu0 %v3498
      %4234 = vmatprep.subr.mxu0 0.0
      %4235 = vmatpush1.msra.mxu0 %v3499
      %4236 = vmatprep.subr.mxu0 0.0
      %4237 = vmatpush1.msra.mxu0 %v3500
      %4238 = vmatprep.subr.mxu0 0.0
      %4239 = vmatpush1.msra.mxu0 %v3501
      %4240 = vmatprep.subr.mxu0 0.0
      %4241 = vmatpush1.msra.mxu0 %v3502
      %4242 = vmatprep.subr.mxu0 0.0
      %4243 = vmatpush1.msra.mxu0 %v3503
      %4244 = vmatprep.subr.mxu0 0.0
      %4245 = vmatpush1.msra.mxu0 %v3504
      %4246 = vmatprep.subr.mxu0 0.0
      %4247 = vmatpush1.msra.mxu0 %v3505
      %4248 = vmatprep.subr.mxu0 0.0
      %4249 = vmatpush1.msra.mxu0 %v3506
      %4250 = vmatprep.subr.mxu0 0.0
      %4251 = vmatpush1.msra.mxu0 %v3507
      %4252 = vmatprep.subr.mxu0 0.0
      %4253 = vmatpush1.msra.mxu0 %v3508
      %4254 = vmatprep.subr.mxu0 0.0
      %4255 = vmatpush1.msra.mxu0 %v3509
      %4256 = vmatprep.subr.mxu0 0.0
      %4257 = vmatpush1.msra.mxu0 %v3510
      %4258 = vmatprep.subr.mxu0 0.0
      %4259 = vmatpush1.msra.mxu0 %v3511
      %4260 = vmatprep.subr.mxu0 0.0
      %4261 = vmatpush1.msra.mxu0 %v3512
      %4262 = vmatprep.subr.mxu0 0.0
      %4263 = vmatpush1.msra.mxu0 %v3513
      %4264 = vmatprep.subr.mxu0 0.0
      %4265 = vmatpush1.msra.mxu0 %v3514
      %4266 = vmatprep.subr.mxu0 0.0
      %4267 = vmatpush1.msra.mxu0 %v3515
      %4268 = vmatprep.subr.mxu0 0.0
      %4269 = vmatpush1.msra.mxu0 %v3516
      %4270 = vmatprep.subr.mxu0 0.0
      %4271 = vmatpush1.msra.mxu0 %v3517
      %4272 = vmatprep.subr.mxu0 0.0
      %4273 = vmatpush1.msra.mxu0 %v3518
      %4274 = vmatprep.subr.mxu0 0.0
      %4275 = vmatpush1.msra.mxu0 %v3519
      %4276 = vmatprep.subr.mxu0 0.0
      %4277 = vmatpush1.msra.mxu0 %v3520
      %4278 = vmatprep.subr.mxu0 0.0
      %4279 = vmatpush1.msra.mxu0 %v3521
      %4280 = vmatprep.subr.mxu0 0.0
      %4281 = vmatpush1.msra.mxu0 %v3522
      %4282 = vmatprep.subr.mxu0 0.0
      %4283 = vmatpush1.msra.mxu0 %v3523
      %4284 = vmatprep.subr.mxu0 0.0
      %4285 = vmatpush1.msra.mxu0 %v3524
      %4286 = vmatprep.subr.mxu0 0.0
      %4287 = vmatpush1.msra.mxu0 %v3525
      %4288 = vmatprep.mubr.f32.mxu0 %v3117
      %4289 = vmatmul.mubr.f32.gmra.mrb[0].mxu0 %v3116
      %v4290 = vpop.f32.mrb[0].mxu0
      %v4291 = vadd.f32 %v4066, %v4290
      %v4292 = vpop.f32.mrb[0].mxu0
      %4293 = vmatprep.mubr.f32.mxu0 %v3126
      %4294 = vmatmul.mubr.f32.gmra.mrb[0].mxu0 %v3125
      %v4295 = vpop.f32.mrb[0].mxu0
      %v4296 = vadd.f32 %v4071, %v4295
      %v4297 = vpop.f32.mrb[0].mxu0
      %4298 = vmatprep.mubr.f32.mxu0 %v3135
      %4299 = vmatmul.mubr.f32.gmra.mrb[0].mxu0 %v3134
      %v4300 = vpop.f32.mrb[0].mxu0
      %v4301 = vadd.f32 %v4076, %v4300
      %v4302 = vpop.f32.mrb[0].mxu0
      %4303 = vmatprep.mubr.f32.mxu0 %v3144
      %4304 = vmatmul.mubr.f32.gmra.mrb[0].mxu0 %v3143
      %v4305 = vpop.f32.mrb[0].mxu0
      %v4306 = vadd.f32 %v4081, %v4305
      %v4307 = vpop.f32.mrb[0].mxu0
      %4308 = vmatprep.mubr.f32.mxu0 %v3153
      %4309 = vmatmul.mubr.f32.gmra.mrb[0].mxu0 %v3152
      %v4310 = vpop.f32.mrb[0].mxu0
      %v4311 = vadd.f32 %v4086, %v4310
      %v4312 = vpop.f32.mrb[0].mxu0
      %4313 = vmatprep.mubr.f32.mxu0 %v3162
      %4314 = vmatmul.mubr.f32.gmra.mrb[0].mxu0 %v3161
      %v4315 = vpop.f32.mrb[0].mxu0
      %v4316 = vadd.f32 %v4091, %v4315
      %v4317 = vpop.f32.mrb[0].mxu0
      %4318 = vmatprep.mubr.f32.mxu0 %v3171
      %4319 = vmatmul.mubr.f32.gmra.mrb[0].mxu0 %v3170
      %v4320 = vpop.f32.mrb[0].mxu0
      %v4321 = vadd.f32 %v4096, %v4320
      %v4322 = vpop.f32.mrb[0].mxu0
      %4323 = vmatprep.mubr.f32.mxu0 %v3180
      %4324 = vmatmul.mubr.f32.gmra.mrb[0].mxu0 %v3179
      %v4325 = vpop.f32.mrb[0].mxu0
      %v4326 = vadd.f32 %v4101, %v4325
      %v4327 = vpop.f32.mrb[0].mxu0
      %4328 = vmatprep.mubr.f32.mxu0 %v3189
      %4329 = vmatmul.mubr.f32.gmra.mrb[0].mxu0 %v3188
      %v4330 = vpop.f32.mrb[0].mxu0
      %v4331 = vadd.f32 %v4106, %v4330
      %v4332 = vpop.f32.mrb[0].mxu0
      %4333 = vmatprep.mubr.f32.mxu0 %v3198
      %4334 = vmatmul.mubr.f32.gmra.mrb[0].mxu0 %v3197
      %v4335 = vpop.f32.mrb[0].mxu0
      %v4336 = vadd.f32 %v4111, %v4335
      %v4337 = vpop.f32.mrb[0].mxu0
      %4338 = vmatprep.mubr.f32.mxu0 %v3207
      %4339 = vmatmul.mubr.f32.gmra.mrb[0].mxu0 %v3206
      %v4340 = vpop.f32.mrb[0].mxu0
      %v4341 = vadd.f32 %v4116, %v4340
      %v4342 = vpop.f32.mrb[0].mxu0
      %4343 = vmatprep.mubr.f32.mxu0 %v3216
      %4344 = vmatmul.mubr.f32.gmra.mrb[0].mxu0 %v3215
      %v4345 = vpop.f32.mrb[0].mxu0
      %v4346 = vadd.f32 %v4121, %v4345
      %v4347 = vpop.f32.mrb[0].mxu0
      %4348 = vmatprep.mubr.f32.mxu0 %v3225
      %4349 = vmatmul.mubr.f32.gmra.mrb[0].mxu0 %v3224
      %v4350 = vpop.f32.mrb[0].mxu0
      %v4351 = vadd.f32 %v4126, %v4350
      %v4352 = vpop.f32.mrb[0].mxu0
      %4353 = vmatprep.mubr.f32.mxu0 %v3234
      %4354 = vmatmul.mubr.f32.gmra.mrb[0].mxu0 %v3233
      %v4355 = vpop.f32.mrb[0].mxu0
      %v4356 = vadd.f32 %v4131, %v4355
      %v4357 = vpop.f32.mrb[0].mxu0
      %4358 = vmatprep.mubr.f32.mxu0 %v3243
      %4359 = vmatmul.mubr.f32.gmra.mrb[0].mxu0 %v3242
      %v4360 = vpop.f32.mrb[0].mxu0
      %v4361 = vadd.f32 %v4136, %v4360
      %v4362 = vpop.f32.mrb[0].mxu0
      %4363 = vmatprep.mubr.f32.mxu0 %v3252
      %4364 = vmatmul.mubr.f32.gmra.mrb[0].mxu0 %v3251
      %v4365 = vpop.f32.mrb[0].mxu0
      %v4366 = vadd.f32 %v4141, %v4365
      %v4367 = vpop.f32.mrb[0].mxu0
      %4368 = vmatprep.mubr.f32.mxu0 %v3261
      %4369 = vmatmul.mubr.f32.gmra.mrb[0].mxu0 %v3260
      %v4370 = vpop.f32.mrb[0].mxu0
      %v4371 = vadd.f32 %v4146, %v4370
      %v4372 = vpop.f32.mrb[0].mxu0
      %4373 = vmatprep.mubr.f32.mxu0 %v3270
      %4374 = vmatmul.mubr.f32.gmra.mrb[0].mxu0 %v3269
      %v4375 = vpop.f32.mrb[0].mxu0
      %v4376 = vadd.f32 %v4151, %v4375
      %v4377 = vpop.f32.mrb[0].mxu0
      %4378 = vmatprep.mubr.f32.mxu0 %v3279
      %4379 = vmatmul.mubr.f32.gmra.mrb[0].mxu0 %v3278
      %v4380 = vpop.f32.mrb[0].mxu0
      %v4381 = vadd.f32 %v4156, %v4380
      %v4382 = vpop.f32.mrb[0].mxu0
      %4383 = vmatprep.mubr.f32.mxu0 %v3288
      %4384 = vmatmul.mubr.f32.gmra.mrb[0].mxu0 %v3287
      %v4385 = vpop.f32.mrb[0].mxu0
      %v4386 = vadd.f32 %v4161, %v4385
      %v4387 = vpop.f32.mrb[0].mxu0
      %4388 = vmatprep.mubr.f32.mxu0 %v3297
      %4389 = vmatmul.mubr.f32.gmra.mrb[0].mxu0 %v3296
      %v4390 = vpop.f32.mrb[0].mxu0
      %v4391 = vadd.f32 %v4166, %v4390
      %v4392 = vpop.f32.mrb[0].mxu0
      %4393 = vmatprep.mubr.f32.mxu0 %v3306
      %4394 = vmatmul.mubr.f32.gmra.mrb[0].mxu0 %v3305
      %v4395 = vpop.f32.mrb[0].mxu0
      %v4396 = vadd.f32 %v4171, %v4395
      %v4397 = vpop.f32.mrb[0].mxu0
      %4398 = vmatprep.mubr.f32.mxu0 %v3315
      %4399 = vmatmul.mubr.f32.gmra.mrb[0].mxu0 %v3314
      %v4400 = vpop.f32.mrb[0].mxu0
      %v4401 = vadd.f32 %v4176, %v4400
      %v4402 = vpop.f32.mrb[0].mxu0
      %4403 = vmatprep.mubr.f32.mxu0 %v3324
      %4404 = vmatmul.mubr.f32.gmra.mrb[0].mxu0 %v3323
      %v4405 = vpop.f32.mrb[0].mxu0
      %v4406 = vadd.f32 %v4181, %v4405
      %v4407 = vpop.f32.mrb[0].mxu0
      %4408 = vmatprep.mubr.f32.mxu0 %v3333
      %4409 = vmatmul.mubr.f32.gmra.mrb[0].mxu0 %v3332
      %v4410 = vpop.f32.mrb[0].mxu0
      %v4411 = vadd.f32 %v4186, %v4410
      %v4412 = vpop.f32.mrb[0].mxu0
      %4413 = vmatprep.mubr.f32.mxu0 %v3342
      %4414 = vmatmul.mubr.f32.gmra.mrb[0].mxu0 %v3341
      %v4415 = vpop.f32.mrb[0].mxu0
      %v4416 = vadd.f32 %v4191, %v4415
      %v4417 = vpop.f32.mrb[0].mxu0
      %4418 = vmatprep.mubr.f32.mxu0 %v3351
      %4419 = vmatmul.mubr.f32.gmra.mrb[0].mxu0 %v3350
      %v4420 = vpop.f32.mrb[0].mxu0
      %v4421 = vadd.f32 %v4196, %v4420
      %v4422 = vpop.f32.mrb[0].mxu0
      %4423 = vmatprep.mubr.f32.mxu0 %v3360
      %4424 = vmatmul.mubr.f32.gmra.mrb[0].mxu0 %v3359
      %v4425 = vpop.f32.mrb[0].mxu0
      %v4426 = vadd.f32 %v4201, %v4425
      %v4427 = vpop.f32.mrb[0].mxu0
      %4428 = vmatprep.mubr.f32.mxu0 %v3369
      %4429 = vmatmul.mubr.f32.gmra.mrb[0].mxu0 %v3368
      %v4430 = vpop.f32.mrb[0].mxu0
      %v4431 = vadd.f32 %v4206, %v4430
      %v4432 = vpop.f32.mrb[0].mxu0
      %4433 = vmatprep.mubr.f32.mxu0 %v3378
      %4434 = vmatmul.mubr.f32.gmra.mrb[0].mxu0 %v3377
      %v4435 = vpop.f32.mrb[0].mxu0
      %v4436 = vadd.f32 %v4211, %v4435
      %v4437 = vpop.f32.mrb[0].mxu0
      %4438 = vmatprep.mubr.f32.mxu0 %v3387
      %4439 = vmatmul.mubr.f32.gmra.mrb[0].mxu0 %v3386
      %v4440 = vpop.f32.mrb[0].mxu0
      %v4441 = vadd.f32 %v4216, %v4440
      %v4442 = vpop.f32.mrb[0].mxu0
      %4443 = vmatprep.mubr.f32.mxu0 %v3396
      %4444 = vmatmul.mubr.f32.gmra.mrb[0].mxu0 %v3395
      %v4445 = vpop.f32.mrb[0].mxu0
      %v4446 = vadd.f32 %v4221, %v4445
      %v4447 = vpop.f32.mrb[0].mxu0
      %4448 = vdwg.mxu0
      %4449 = vmatprep.subr.mxu0 0.0
      %4450 = vmatpush1.msra.mxu0 %v3526
      %4451 = vmatprep.subr.mxu0 0.0
      %4452 = vmatpush1.msra.mxu0 %v3527
      %4453 = vmatprep.subr.mxu0 0.0
      %4454 = vmatpush1.msra.mxu0 %v3528
      %4455 = vmatprep.subr.mxu0 0.0
      %4456 = vmatpush1.msra.mxu0 %v3529
      %4457 = vmatprep.subr.mxu0 0.0
      %4458 = vmatpush1.msra.mxu0 %v3530
      %4459 = vmatprep.subr.mxu0 0.0
      %4460 = vmatpush1.msra.mxu0 %v3531
      %4461 = vmatprep.subr.mxu0 0.0
      %4462 = vmatpush1.msra.mxu0 %v3532
      %4463 = vmatprep.subr.mxu0 0.0
      %4464 = vmatpush1.msra.mxu0 %v3533
      %4465 = vmatprep.subr.mxu0 0.0
      %4466 = vmatpush1.msra.mxu0 %v3534
      %4467 = vmatprep.subr.mxu0 0.0
      %4468 = vmatpush1.msra.mxu0 %v3535
      %4469 = vmatprep.subr.mxu0 0.0
      %4470 = vmatpush1.msra.mxu0 %v3536
      %4471 = vmatprep.subr.mxu0 0.0
      %4472 = vmatpush1.msra.mxu0 %v3537
      %4473 = vmatprep.subr.mxu0 0.0
      %4474 = vmatpush1.msra.mxu0 %v3538
      %4475 = vmatprep.subr.mxu0 0.0
      %4476 = vmatpush1.msra.mxu0 %v3539
      %4477 = vmatprep.subr.mxu0 0.0
      %4478 = vmatpush1.msra.mxu0 %v3540
      %4479 = vmatprep.subr.mxu0 0.0
      %4480 = vmatpush1.msra.mxu0 %v3541
      %4481 = vmatprep.subr.mxu0 0.0
      %4482 = vmatpush1.msra.mxu0 0.0
      %4483 = vmatprep.subr.mxu0 0.0
      %4484 = vmatpush1.msra.mxu0 0.0
      %4485 = vmatprep.subr.mxu0 0.0
      %4486 = vmatpush1.msra.mxu0 0.0
      %4487 = vmatprep.subr.mxu0 0.0
      %4488 = vmatpush1.msra.mxu0 0.0
      %4489 = vmatprep.subr.mxu0 0.0
      %4490 = vmatpush1.msra.mxu0 0.0
      %4491 = vmatprep.subr.mxu0 0.0
      %4492 = vmatpush1.msra.mxu0 0.0
      %4493 = vmatprep.subr.mxu0 0.0
      %4494 = vmatpush1.msra.mxu0 0.0
      %4495 = vmatprep.subr.mxu0 0.0
      %4496 = vmatpush1.msra.mxu0 0.0
      %4497 = vmatprep.subr.mxu0 0.0
      %4498 = vmatpush1.msra.mxu0 0.0
      %4499 = vmatprep.subr.mxu0 0.0
      %4500 = vmatpush1.msra.mxu0 0.0
      %4501 = vmatprep.subr.mxu0 0.0
      %4502 = vmatpush1.msra.mxu0 0.0
      %4503 = vmatprep.subr.mxu0 0.0
      %4504 = vmatpush1.msra.mxu0 0.0
      %4505 = vmatprep.subr.mxu0 0.0
      %4506 = vmatpush1.msra.mxu0 0.0
      %4507 = vmatprep.subr.mxu0 0.0
      %4508 = vmatpush1.msra.mxu0 0.0
      %4509 = vmatprep.subr.mxu0 0.0
      %4510 = vmatpush1.msra.mxu0 0.0
      %4511 = vmatprep.subr.mxu0 0.0
      %4512 = vmatpush1.msra.mxu0 0.0
      %4513 = vmatprep.mubr.f32.mxu0 0.0
      %4514 = vmatmul.mubr.f32.gmra.mrb[0].mxu0 %v3118
      %v4515 = vpop.f32.mrb[0].mxu0
      %v4516 = vadd.f32 %v4291, %v4515
      %v4517 = vpop.f32.mrb[0].mxu0
      %4518 = vmatprep.mubr.f32.mxu0 0.0
      %4519 = vmatmul.mubr.f32.gmra.mrb[0].mxu0 %v3127
      %v4520 = vpop.f32.mrb[0].mxu0
      %v4521 = vadd.f32 %v4296, %v4520
      %v4522 = vpop.f32.mrb[0].mxu0
      %4523 = vmatprep.mubr.f32.mxu0 0.0
      %4524 = vmatmul.mubr.f32.gmra.mrb[0].mxu0 %v3136
      %v4525 = vpop.f32.mrb[0].mxu0
      %v4526 = vadd.f32 %v4301, %v4525
      %v4527 = vpop.f32.mrb[0].mxu0
      %4528 = vmatprep.mubr.f32.mxu0 0.0
      %4529 = vmatmul.mubr.f32.gmra.mrb[0].mxu0 %v3145
      %v4530 = vpop.f32.mrb[0].mxu0
      %v4531 = vadd.f32 %v4306, %v4530
      %v4532 = vpop.f32.mrb[0].mxu0
      %4533 = vmatprep.mubr.f32.mxu0 0.0
      %4534 = vmatmul.mubr.f32.gmra.mrb[0].mxu0 %v3154
      %v4535 = vpop.f32.mrb[0].mxu0
      %v4536 = vadd.f32 %v4311, %v4535
      %v4537 = vpop.f32.mrb[0].mxu0
      %4538 = vmatprep.mubr.f32.mxu0 0.0
      %4539 = vmatmul.mubr.f32.gmra.mrb[0].mxu0 %v3163
      %v4540 = vpop.f32.mrb[0].mxu0
      %v4541 = vadd.f32 %v4316, %v4540
      %v4542 = vpop.f32.mrb[0].mxu0
      %4543 = vmatprep.mubr.f32.mxu0 0.0
      %4544 = vmatmul.mubr.f32.gmra.mrb[0].mxu0 %v3172
      %v4545 = vpop.f32.mrb[0].mxu0
      %v4546 = vadd.f32 %v4321, %v4545
      %v4547 = vpop.f32.mrb[0].mxu0
      %4548 = vmatprep.mubr.f32.mxu0 0.0
      %4549 = vmatmul.mubr.f32.gmra.mrb[0].mxu0 %v3181
      %v4550 = vpop.f32.mrb[0].mxu0
      %v4551 = vadd.f32 %v4326, %v4550
      %v4552 = vpop.f32.mrb[0].mxu0
      %4553 = vmatprep.mubr.f32.mxu0 0.0
      %4554 = vmatmul.mubr.f32.gmra.mrb[0].mxu0 %v3190
      %v4555 = vpop.f32.mrb[0].mxu0
      %v4556 = vadd.f32 %v4331, %v4555
      %v4557 = vpop.f32.mrb[0].mxu0
      %4558 = vmatprep.mubr.f32.mxu0 0.0
      %4559 = vmatmul.mubr.f32.gmra.mrb[0].mxu0 %v3199
      %v4560 = vpop.f32.mrb[0].mxu0
      %v4561 = vadd.f32 %v4336, %v4560
      %v4562 = vpop.f32.mrb[0].mxu0
      %4563 = vmatprep.mubr.f32.mxu0 0.0
      %4564 = vmatmul.mubr.f32.gmra.mrb[0].mxu0 %v3208
      %v4565 = vpop.f32.mrb[0].mxu0
      %v4566 = vadd.f32 %v4341, %v4565
      %v4567 = vpop.f32.mrb[0].mxu0
      %4568 = vmatprep.mubr.f32.mxu0 0.0
      %4569 = vmatmul.mubr.f32.gmra.mrb[0].mxu0 %v3217
      %v4570 = vpop.f32.mrb[0].mxu0
      %v4571 = vadd.f32 %v4346, %v4570
      %v4572 = vpop.f32.mrb[0].mxu0
      %4573 = vmatprep.mubr.f32.mxu0 0.0
      %4574 = vmatmul.mubr.f32.gmra.mrb[0].mxu0 %v3226
      %v4575 = vpop.f32.mrb[0].mxu0
      %v4576 = vadd.f32 %v4351, %v4575
      %v4577 = vpop.f32.mrb[0].mxu0
      %4578 = vmatprep.mubr.f32.mxu0 0.0
      %4579 = vmatmul.mubr.f32.gmra.mrb[0].mxu0 %v3235
      %v4580 = vpop.f32.mrb[0].mxu0
      %v4581 = vadd.f32 %v4356, %v4580
      %v4582 = vpop.f32.mrb[0].mxu0
      %4583 = vmatprep.mubr.f32.mxu0 0.0
      %4584 = vmatmul.mubr.f32.gmra.mrb[0].mxu0 %v3244
      %v4585 = vpop.f32.mrb[0].mxu0
      %v4586 = vadd.f32 %v4361, %v4585
      %v4587 = vpop.f32.mrb[0].mxu0
      %4588 = vmatprep.mubr.f32.mxu0 0.0
      %4589 = vmatmul.mubr.f32.gmra.mrb[0].mxu0 %v3253
      %v4590 = vpop.f32.mrb[0].mxu0
      %v4591 = vadd.f32 %v4366, %v4590
      %v4592 = vpop.f32.mrb[0].mxu0
      %4593 = vmatprep.mubr.f32.mxu0 0.0
      %4594 = vmatmul.mubr.f32.gmra.mrb[0].mxu0 %v3262
      %v4595 = vpop.f32.mrb[0].mxu0
      %v4596 = vadd.f32 %v4371, %v4595
      %v4597 = vpop.f32.mrb[0].mxu0
      %4598 = vmatprep.mubr.f32.mxu0 0.0
      %4599 = vmatmul.mubr.f32.gmra.mrb[0].mxu0 %v3271
      %v4600 = vpop.f32.mrb[0].mxu0
      %v4601 = vadd.f32 %v4376, %v4600
      %v4602 = vpop.f32.mrb[0].mxu0
      %4603 = vmatprep.mubr.f32.mxu0 0.0
      %4604 = vmatmul.mubr.f32.gmra.mrb[0].mxu0 %v3280
      %v4605 = vpop.f32.mrb[0].mxu0
      %v4606 = vadd.f32 %v4381, %v4605
      %v4607 = vpop.f32.mrb[0].mxu0
      %4608 = vmatprep.mubr.f32.mxu0 0.0
      %4609 = vmatmul.mubr.f32.gmra.mrb[0].mxu0 %v3289
      %v4610 = vpop.f32.mrb[0].mxu0
      %v4611 = vadd.f32 %v4386, %v4610
      %v4612 = vpop.f32.mrb[0].mxu0
      %4613 = vmatprep.mubr.f32.mxu0 0.0
      %4614 = vmatmul.mubr.f32.gmra.mrb[0].mxu0 %v3298
      %v4615 = vpop.f32.mrb[0].mxu0
      %v4616 = vadd.f32 %v4391, %v4615
      %v4617 = vpop.f32.mrb[0].mxu0
      %4618 = vmatprep.mubr.f32.mxu0 0.0
      %4619 = vmatmul.mubr.f32.gmra.mrb[0].mxu0 %v3307
      %v4620 = vpop.f32.mrb[0].mxu0
      %v4621 = vadd.f32 %v4396, %v4620
      %v4622 = vpop.f32.mrb[0].mxu0
      %4623 = vmatprep.mubr.f32.mxu0 0.0
      %4624 = vmatmul.mubr.f32.gmra.mrb[0].mxu0 %v3316
      %v4625 = vpop.f32.mrb[0].mxu0
      %v4626 = vadd.f32 %v4401, %v4625
      %v4627 = vpop.f32.mrb[0].mxu0
      %4628 = vmatprep.mubr.f32.mxu0 0.0
      %4629 = vmatmul.mubr.f32.gmra.mrb[0].mxu0 %v3325
      %v4630 = vpop.f32.mrb[0].mxu0
      %v4631 = vadd.f32 %v4406, %v4630
      %v4632 = vpop.f32.mrb[0].mxu0
      %4633 = vmatprep.mubr.f32.mxu0 0.0
      %4634 = vmatmul.mubr.f32.gmra.mrb[0].mxu0 %v3334
      %v4635 = vpop.f32.mrb[0].mxu0
      %v4636 = vadd.f32 %v4411, %v4635
      %v4637 = vpop.f32.mrb[0].mxu0
      %4638 = vmatprep.mubr.f32.mxu0 0.0
      %4639 = vmatmul.mubr.f32.gmra.mrb[0].mxu0 %v3343
      %v4640 = vpop.f32.mrb[0].mxu0
      %v4641 = vadd.f32 %v4416, %v4640
      %v4642 = vpop.f32.mrb[0].mxu0
      %4643 = vmatprep.mubr.f32.mxu0 0.0
      %4644 = vmatmul.mubr.f32.gmra.mrb[0].mxu0 %v3352
      %v4645 = vpop.f32.mrb[0].mxu0
      %v4646 = vadd.f32 %v4421, %v4645
      %v4647 = vpop.f32.mrb[0].mxu0
      %4648 = vmatprep.mubr.f32.mxu0 0.0
      %4649 = vmatmul.mubr.f32.gmra.mrb[0].mxu0 %v3361
      %v4650 = vpop.f32.mrb[0].mxu0
      %v4651 = vadd.f32 %v4426, %v4650
      %v4652 = vpop.f32.mrb[0].mxu0
      %4653 = vmatprep.mubr.f32.mxu0 0.0
      %4654 = vmatmul.mubr.f32.gmra.mrb[0].mxu0 %v3370
      %v4655 = vpop.f32.mrb[0].mxu0
      %v4656 = vadd.f32 %v4431, %v4655
      %v4657 = vpop.f32.mrb[0].mxu0
      %4658 = vmatprep.mubr.f32.mxu0 0.0
      %4659 = vmatmul.mubr.f32.gmra.mrb[0].mxu0 %v3379
      %v4660 = vpop.f32.mrb[0].mxu0
      %v4661 = vadd.f32 %v4436, %v4660
      %v4662 = vpop.f32.mrb[0].mxu0
      %4663 = vmatprep.mubr.f32.mxu0 0.0
      %4664 = vmatmul.mubr.f32.gmra.mrb[0].mxu0 %v3388
      %v4665 = vpop.f32.mrb[0].mxu0
      %v4666 = vadd.f32 %v4441, %v4665
      %v4667 = vpop.f32.mrb[0].mxu0
      %4668 = vmatprep.mubr.f32.mxu0 0.0
      %4669 = vmatmul.mubr.f32.gmra.mrb[0].mxu0 %v3397
      %v4670 = vpop.f32.mrb[0].mxu0
      %v4671 = vadd.f32 %v4446, %v4670
      %v4672 = vpop.f32.mrb[0].mxu0
      %4673 = vdwg.mxu0
      %v4674 = vmax.f32 %v4516, 0.0
      %v4675 = vmax.f32 %v4521, 0.0
      %v4676 = vmax.f32 %v4526, 0.0
      %v4677 = vmax.f32 %v4531, 0.0
      %v4678 = vmax.f32 %v4536, 0.0
      %v4679 = vmax.f32 %v4541, 0.0
      %v4680 = vmax.f32 %v4546, 0.0
      %v4681 = vmax.f32 %v4551, 0.0
      %v4682 = vmax.f32 %v4556, 0.0
      %v4683 = vmax.f32 %v4561, 0.0
      %v4684 = vmax.f32 %v4566, 0.0
      %v4685 = vmax.f32 %v4571, 0.0
      %v4686 = vmax.f32 %v4576, 0.0
      %v4687 = vmax.f32 %v4581, 0.0
      %v4688 = vmax.f32 %v4586, 0.0
      %v4689 = vmax.f32 %v4591, 0.0
      %v4690 = vmax.f32 %v4596, 0.0
      %v4691 = vmax.f32 %v4601, 0.0
      %v4692 = vmax.f32 %v4606, 0.0
      %v4693 = vmax.f32 %v4611, 0.0
      %v4694 = vmax.f32 %v4616, 0.0
      %v4695 = vmax.f32 %v4621, 0.0
      %v4696 = vmax.f32 %v4626, 0.0
      %v4697 = vmax.f32 %v4631, 0.0
      %v4698 = vmax.f32 %v4636, 0.0
      %v4699 = vmax.f32 %v4641, 0.0
      %v4700 = vmax.f32 %v4646, 0.0
      %v4701 = vmax.f32 %v4651, 0.0
      %v4702 = vmax.f32 %v4656, 0.0
      %v4703 = vmax.f32 %v4661, 0.0
      %v4704 = vmax.f32 %v4666, 0.0
      %v4705 = vmax.f32 %v4671, 0.0
      %v4706 = vadd.f32 %v4674, %v265
      %v4707 = vadd.f32 %v4675, %v266
      %v4708 = vadd.f32 %v4676, %v267
      %v4709 = vadd.f32 %v4677, %v268
      %v4710 = vadd.f32 %v4678, %v269
      %v4711 = vadd.f32 %v4679, %v270
      %v4712 = vadd.f32 %v4680, %v271
      %v4713 = vadd.f32 %v4681, %v272
      %v4714 = vadd.f32 %v4682, %v273
      %v4715 = vadd.f32 %v4683, %v274
      %v4716 = vadd.f32 %v4684, %v275
      %v4717 = vadd.f32 %v4685, %v276
      %v4718 = vadd.f32 %v4686, %v277
      %v4719 = vadd.f32 %v4687, %v278
      %v4720 = vadd.f32 %v4688, %v279
      %v4721 = vadd.f32 %v4689, %v280
      %v4722 = vadd.f32 %v4690, %v281
      %v4723 = vadd.f32 %v4691, %v282
      %v4724 = vadd.f32 %v4692, %v283
      %v4725 = vadd.f32 %v4693, %v284
      %v4726 = vadd.f32 %v4694, %v285
      %v4727 = vadd.f32 %v4695, %v286
      %v4728 = vadd.f32 %v4696, %v287
      %v4729 = vadd.f32 %v4697, %v288
      %v4730 = vadd.f32 %v4698, %v289
      %v4731 = vadd.f32 %v4699, %v290
      %v4732 = vadd.f32 %v4700, %v291
      %v4733 = vadd.f32 %v4701, %v292
      %v4734 = vadd.f32 %v4702, %v293
      %v4735 = vadd.f32 %v4703, %v294
      %v4736 = vadd.f32 %v4704, %v295
      %v4737 = vadd.f32 %v4705, %v296
      %4738 = vst [vmem:[%s224] sm:$0xff] %v4706
      %4739 = vst [vmem:[%s224 + $0x8] sm:$0xff] %v4707
      %4740 = vst [vmem:[%s224 + $0x10] sm:$0xff] %v4708
      %4741 = vst [vmem:[%s224 + $0x18] sm:$0xff] %v4709
      %4742 = vst [vmem:[%s224 + $0x20] sm:$0xff] %v4710
      %4743 = vst [vmem:[%s224 + $0x28] sm:$0xff] %v4711
      %4744 = vst [vmem:[%s224 + $0x30] sm:$0xff] %v4712
      %4745 = vst [vmem:[%s224 + $0x38] sm:$0xff] %v4713
      %4746 = vst [vmem:[%s224 + $0x40] sm:$0xff] %v4714
      %4747 = vst [vmem:[%s224 + $0x48] sm:$0xff] %v4715
      %4748 = vst [vmem:[%s224 + $0x50] sm:$0xff] %v4716
      %4749 = vst [vmem:[%s224 + $0x58] sm:$0xff] %v4717
      %4750 = vst [vmem:[%s224 + $0x60] sm:$0xff] %v4718
      %4751 = vst [vmem:[%s224 + $0x68] sm:$0xff] %v4719
      %4752 = vst [vmem:[%s224 + $0x70] sm:$0xff] %v4720
      %4753 = vst [vmem:[%s224 + $0x78] sm:$0xff] %v4721
      %4754 = vst [vmem:[%s224 + $0x80] sm:$0xff] %v4722
      %4755 = vst [vmem:[%s224 + $0x88] sm:$0xff] %v4723
      %4756 = vst [vmem:[%s224 + $0x90] sm:$0xff] %v4724
      %4757 = vst [vmem:[%s224 + $0x98] sm:$0xff] %v4725
      %4758 = vst [vmem:[%s224 + $0xa0] sm:$0xff] %v4726
      %4759 = vst [vmem:[%s224 + $0xa8] sm:$0xff] %v4727
      %4760 = vst [vmem:[%s224 + $0xb0] sm:$0xff] %v4728
      %4761 = vst [vmem:[%s224 + $0xb8] sm:$0xff] %v4729
      %4762 = vst [vmem:[%s224 + $0xc0] sm:$0xff] %v4730
      %4763 = vst [vmem:[%s224 + $0xc8] sm:$0xff] %v4731
      %4764 = vst [vmem:[%s224 + $0xd0] sm:$0xff] %v4732
      %4765 = vst [vmem:[%s224 + $0xd8] sm:$0xff] %v4733
      %4766 = vst [vmem:[%s224 + $0xe0] sm:$0xff] %v4734
      %4767 = vst [vmem:[%s224 + $0xe8] sm:$0xff] %v4735
      %4768 = vst [vmem:[%s224 + $0xf0] sm:$0xff] %v4736
      %4769 = vst [vmem:[%s224 + $0xf8] sm:$0xff] %v4737
      %p4770 = scmp.lt.s32.totalorder %s16, 1
      %s4771 = scalar_select %p4770, %s16, 1
      %s4772 = smul.addr %s4771, 32
      %s4773 = smul.addr %s4772, 8
      %s4774 = scalar_lea.vmem %s5, %s4773
      // Predicated region
      $region41: #{residual_block.1} parent=39 // pred_check
        %p4775 = pneg %p144
      $region42: #{residual_block.1} parent=39 // pred_check_branch
        %4777 = sbr.rel (%p4775) target = $region44
      $region43: #{residual_block.1} parent=39 // pred_region
        _
      $region44: #{residual_block.1} parent=39 // pred_fallthru
        _
    $region40: #{residual_block.1} parent=5 // pred_fallthru
      _
    %p4778 = scmp.le.s32.totalorder 2, %s11
    // Predicated region
    $region45: #{residual_block.1} parent=5 // pred_check
      %p4779 = pneg %p4778
    $region46: #{residual_block.1} parent=5 // pred_check_branch
      %4781 = sbr.rel (%p4779) target = $region48
    $region47: #{residual_block.1} parent=5 // pred_region
      %s4782 = ssub.s32 %s11, 2
      // Predicated region
      $region49: #{residual_block.1} parent=47 // pred_check
        %p4783 = pneg %p150
      $region50: #{residual_block.1} parent=47 // pred_check_branch
        %4785 = sbr.rel (%p4783) target = $region52
      $region51: #{residual_block.1} parent=47 // pred_region
        %p4786 = scmp.lt.s32.totalorder %s17, 1
        %s4787 = scalar_select %p4786, %s17, 1
        %s4788 = smul.addr %s4787, 32
        %s4789 = smul.addr %s4788, 8
        %s4790 = scalar_lea.vmem %s5, %s4789
      $region52: #{residual_block.1} parent=47 // pred_fallthru
        _
    $region48: #{residual_block.1} parent=5 // pred_fallthru
      _
  $region6: #{residual_block.1} parent=0 // loop_footer
    %s15 = sadd.s32 1, %s11
  $region7: #{residual_block.1} parent=0 // loop_footer_branch
    %10 = sbr.rel target = $region3
  $region8: #{residual_block.1} parent=0 // loop_exit
    _

</llo_original>
